<compile_context>
chip_gen: v7x
topology: tpu7x:2x2x1
jax: 0.10.0
libtpu: 0.0.40
codegen_flags: <defaults>
</compile_context>

<pallas_src>
import jax
import jax.numpy as jnp
from jax.experimental import pallas as pl
from jax.experimental.pallas import tpu as pltpu


_VMEM_SPEC = pl.BlockSpec(memory_space=pltpu.MemorySpace.VMEM)


# ----------------------------------------------------------------------------
# Pallas kernels
# ----------------------------------------------------------------------------
def _conv_relu_pool_kernel(p_ref, w_ref, b_ref, o_ref):
    """Fused conv (im2col GEMM) + bias + ReLU + 2x2/stride-2 max pool.

    p_ref : (4, Q, K)  patches; leading dim = pool tap (ohp*2+owp),
                       rows ordered (n, oh2, ow2), features (kh, kw, cin).
    w_ref : (K, Cout)  conv weight as a GEMM matrix.
    b_ref : (1, Cout)  bias.
    o_ref : (Q, Cout)  pooled NHWC activation, rows ordered (n, oh2, ow2).
    """
    w = w_ref[...]
    acc = jnp.dot(p_ref[0], w, preferred_element_type=jnp.float32)
    for t in range(1, 4):
        acc = jnp.maximum(
            acc, jnp.dot(p_ref[t], w, preferred_element_type=jnp.float32))
    o_ref[...] = jnp.maximum(acc + b_ref[...], 0.0).astype(o_ref.dtype)


def _fc_block_kernel(x_ref, w1_ref, b1_ref, w2_ref, b2_ref, w3_ref, b3_ref,
                     o_ref):
    """fc1+ReLU -> fc2+ReLU -> fc3 in one kernel; intermediates stay on-chip."""
    h = jnp.dot(x_ref[...], w1_ref[...], preferred_element_type=jnp.float32)
    h = jnp.maximum(h + b1_ref[...], 0.0)
    h = jnp.dot(h, w2_ref[...], preferred_element_type=jnp.float32)
    h = jnp.maximum(h + b2_ref[...], 0.0)
    h = jnp.dot(h, w3_ref[...], preferred_element_type=jnp.float32)
    o_ref[...] = (h + b3_ref[...]).astype(o_ref.dtype)


# ----------------------------------------------------------------------------
# XLA-side glue (static slicing only) + Pallas wrappers
# ----------------------------------------------------------------------------
def _im2col_pooled(x_nhwc, kh, kw):
    """(N,H,W,C) -> (4, Q, kh*kw*C) im2col patches grouped by 2x2 pool tap."""
    N, H, W, C = x_nhwc.shape
    oh, ow = H - kh + 1, W - kw + 1
    oh2, ow2 = oh // 2, ow // 2
    cols = []
    for i in range(kh):
        for j in range(kw):
            cols.append(x_nhwc[:, i:i + oh, j:j + ow, :])
    patches = jnp.concatenate(cols, axis=-1)              # (N, oh, ow, kh*kw*C)
    taps = []
    for ohp in range(2):
        for owp in range(2):
            t = patches[:, ohp:2 * oh2:2, owp:2 * ow2:2, :]  # (N, oh2, ow2, K)
            taps.append(t.reshape(N * oh2 * ow2, kh * kw * C))
    return jnp.stack(taps, axis=0), oh2, ow2


def conv_relu_pool(x_nhwc, w_mat, bias_row, kh, kw):
    """x_nhwc:(N,H,W,Cin) -> pooled NHWC activation (N, OH//2, OW//2, Cout)."""
    N = x_nhwc.shape[0]
    cout = w_mat.shape[1]
    p, oh2, ow2 = _im2col_pooled(x_nhwc, kh, kw)
    y = pl.pallas_call(
        _conv_relu_pool_kernel,
        out_shape=jax.ShapeDtypeStruct((N * oh2 * ow2, cout), jnp.float32),
        in_specs=[_VMEM_SPEC, _VMEM_SPEC, _VMEM_SPEC],
        out_specs=_VMEM_SPEC,
    )(p, w_mat, bias_row)
    return y.reshape(N, oh2, ow2, cout)


def fc_block(x, kp):
    M = x.shape[0]
    n_out = kp["fc3_w"].shape[1]
    return pl.pallas_call(
        _fc_block_kernel,
        out_shape=jax.ShapeDtypeStruct((M, n_out), jnp.float32),
        in_specs=[_VMEM_SPEC] * 7,
        out_specs=_VMEM_SPEC,
    )(x, kp["fc1_w"], kp["fc1_b"], kp["fc2_w"], kp["fc2_b"],
      kp["fc3_w"], kp["fc3_b"])


# ----------------------------------------------------------------------------
# Parameters (PyTorch layout) + one-time kernel-layout preparation
# ----------------------------------------------------------------------------
def init_lenet_params(key):
    """PyTorch-layout LeNet params (Conv2d OIHW weights, Linear (out,in))."""
    ks = jax.random.split(key, 10)
    return {
        "conv1_w": 0.1 * jax.random.normal(ks[0], (6, 3, 5, 5), jnp.float32),
        "conv1_b": 0.1 * jax.random.normal(ks[1], (6,), jnp.float32),
        "conv2_w": 0.1 * jax.random.normal(ks[2], (16, 6, 5, 5), jnp.float32),
        "conv2_b": 0.1 * jax.random.normal(ks[3], (16,), jnp.float32),
        "fc1_w": 0.1 * jax.random.normal(ks[4], (120, 16 * 5 * 5), jnp.float32),
        "fc1_b": 0.1 * jax.random.normal(ks[5], (120,), jnp.float32),
        "fc2_w": 0.1 * jax.random.normal(ks[6], (84, 120), jnp.float32),
        "fc2_b": 0.1 * jax.random.normal(ks[7], (84,), jnp.float32),
        "fc3_w": 0.1 * jax.random.normal(ks[8], (10, 84), jnp.float32),
        "fc3_b": 0.1 * jax.random.normal(ks[9], (10,), jnp.float32),
    }


def _conv_weight_to_mat(w_ochw):
    """(Cout,Cin,KH,KW) -> (KH*KW*Cin, Cout) matching the im2col feature order."""
    cout, cin, kh, kw = w_ochw.shape
    return jnp.transpose(w_ochw, (2, 3, 1, 0)).reshape(kh * kw * cin, cout)


def prepare_lenet_params(params):
    """One-time layout work so the jitted forward has no runtime transposes."""
    c2_out = params["conv2_w"].shape[0]                 # 16
    fc1_w = params["fc1_w"]                             # (120, 400) torch (c,h,w)
    n_hidden = fc1_w.shape[0]
    # torch.flatten order is (c,h,w); our conv output flattens as (h,w,c).
    fc1_w_nhwc = (fc1_w.reshape(n_hidden, c2_out, 5, 5)
                  .transpose(0, 2, 3, 1)
                  .reshape(n_hidden, 5 * 5 * c2_out))
    return {
        "conv1_w": _conv_weight_to_mat(params["conv1_w"]),
        "conv1_b": params["conv1_b"].reshape(1, -1),
        "conv2_w": _conv_weight_to_mat(params["conv2_w"]),
        "conv2_b": params["conv2_b"].reshape(1, -1),
        "fc1_w": fc1_w_nhwc.T,                          # (400, 120)
        "fc1_b": params["fc1_b"].reshape(1, -1),
        "fc2_w": params["fc2_w"].T,                     # (120, 84)
        "fc2_b": params["fc2_b"].reshape(1, -1),
        "fc3_w": params["fc3_w"].T,                     # (84, 10)
        "fc3_b": params["fc3_b"].reshape(1, -1),
    }


@jax.jit
def lenet_forward(kp, x_nchw):
    """x_nchw: (N, 3, 32, 32) float32 -> logits (N, 10)."""
    x = jnp.transpose(x_nchw, (0, 2, 3, 1))                    # NCHW -> NHWC once
    x = conv_relu_pool(x, kp["conv1_w"], kp["conv1_b"], 5, 5)  # (N,14,14,6)
    x = conv_relu_pool(x, kp["conv2_w"], kp["conv2_b"], 5, 5)  # (N,5,5,16)
    x = x.reshape(x.shape[0], -1)                              # NHWC flatten (N,400)
    return fc_block(x, kp)                                     # (N,10)


# ----------------------------------------------------------------------------
# Pure-XLA reference (PyTorch semantics) for correctness checking
# ----------------------------------------------------------------------------
def lenet_reference(params, x_nchw):
    def conv(x, w, b):
        y = jax.lax.conv_general_dilated(
            x, w, window_strides=(1, 1), padding="VALID",
            dimension_numbers=("NCHW", "OIHW", "NCHW"))
        return y + b.reshape(1, -1, 1, 1)

    def pool(x):
        return jax.lax.reduce_window(
            x, -jnp.inf, jax.lax.max, (1, 1, 2, 2), (1, 1, 2, 2), "VALID")

    x = pool(jax.nn.relu(conv(x_nchw, params["conv1_w"], params["conv1_b"])))
    x = pool(jax.nn.relu(conv(x, params["conv2_w"], params["conv2_b"])))
    x = x.reshape(x.shape[0], -1)                    # torch.flatten(x,1): (c,h,w)
    x = jax.nn.relu(x @ params["fc1_w"].T + params["fc1_b"])
    x = jax.nn.relu(x @ params["fc2_w"].T + params["fc2_b"])
    return x @ params["fc3_w"].T + params["fc3_b"]


if __name__ == "__main__":
    key = jax.random.PRNGKey(0)
    pkey, xkey = jax.random.split(key)
    params = init_lenet_params(pkey)
    kparams = prepare_lenet_params(params)

    # LeNet's fc1 (16*5*5) pins the input to 32x32x3; batch kept small (2).
    x = jax.random.normal(xkey, (2, 3, 32, 32), jnp.float32)

    logits = lenet_forward(kparams, x)
    jax.block_until_ready(logits)
    assert logits.shape == (2, 10) and logits.dtype == jnp.float32

    # Loose tolerance: differences come only from matmul precision, a layout /
    # ordering bug would produce O(1) errors.
    ref = lenet_reference(params, x)
    max_err = float(jnp.max(jnp.abs(logits - ref)))
    assert max_err < 5e-2, f"mismatch vs reference: {max_err}"

    print("KERNEL_OK")
</pallas_src>

<mosaic_0001>
module attributes {stable_mosaic.version = 11 : i64} {
  func.func @_conv_relu_pool_kernel(%arg0: memref<4x392x75xf32, #tpu.memory_space<vmem>>, %arg1: memref<75x6xf32, #tpu.memory_space<vmem>>, %arg2: memref<1x6xf32, #tpu.memory_space<vmem>>, %arg3: memref<392x6xf32, #tpu.memory_space<vmem>>) attributes {dimension_semantics = [], scalar_prefetch = 0 : i64, scratch_operands = 0 : i64, tpu.core_type = #tpu.core_type<tc>} {
    %c0 = arith.constant 0 : index
    %c0_0 = arith.constant 0 : index
    %0 = vector.load %arg1[%c0, %c0_0] : memref<75x6xf32, #tpu.memory_space<vmem>>, vector<75x6xf32>
    %c0_1 = arith.constant 0 : index
    %c0_2 = arith.constant 0 : index
    %c0_3 = arith.constant 0 : index
    %1 = vector.load %arg0[%c0_1, %c0_2, %c0_3] : memref<4x392x75xf32, #tpu.memory_space<vmem>>, vector<1x392x75xf32>
    %2 = vector.shape_cast %1 : vector<1x392x75xf32> to vector<392x75xf32>
    %cst = arith.constant dense<0.000000e+00> : vector<392x6xf32>
    %3 = tpu.matmul %2, %0, %cst {dimension_numbers = #tpu.dot_dimension_numbers<[1], [0], [0], [1], [0, 0, 1, 1], [], []>} : vector<392x75xf32>, vector<75x6xf32>, vector<392x6xf32> -> vector<392x6xf32>
    %c1 = arith.constant 1 : index
    %c0_4 = arith.constant 0 : index
    %c0_5 = arith.constant 0 : index
    %4 = vector.load %arg0[%c1, %c0_4, %c0_5] : memref<4x392x75xf32, #tpu.memory_space<vmem>>, vector<1x392x75xf32>
    %5 = vector.shape_cast %4 : vector<1x392x75xf32> to vector<392x75xf32>
    %cst_6 = arith.constant dense<0.000000e+00> : vector<392x6xf32>
    %6 = tpu.matmul %5, %0, %cst_6 {dimension_numbers = #tpu.dot_dimension_numbers<[1], [0], [0], [1], [0, 0, 1, 1], [], []>} : vector<392x75xf32>, vector<75x6xf32>, vector<392x6xf32> -> vector<392x6xf32>
    %7 = arith.maximumf %3, %6 : vector<392x6xf32>
    %c2 = arith.constant 2 : index
    %c0_7 = arith.constant 0 : index
    %c0_8 = arith.constant 0 : index
    %8 = vector.load %arg0[%c2, %c0_7, %c0_8] : memref<4x392x75xf32, #tpu.memory_space<vmem>>, vector<1x392x75xf32>
    %9 = vector.shape_cast %8 : vector<1x392x75xf32> to vector<392x75xf32>
    %cst_9 = arith.constant dense<0.000000e+00> : vector<392x6xf32>
    %10 = tpu.matmul %9, %0, %cst_9 {dimension_numbers = #tpu.dot_dimension_numbers<[1], [0], [0], [1], [0, 0, 1, 1], [], []>} : vector<392x75xf32>, vector<75x6xf32>, vector<392x6xf32> -> vector<392x6xf32>
    %11 = arith.maximumf %7, %10 : vector<392x6xf32>
    %c3 = arith.constant 3 : index
    %c0_10 = arith.constant 0 : index
    %c0_11 = arith.constant 0 : index
    %12 = vector.load %arg0[%c3, %c0_10, %c0_11] : memref<4x392x75xf32, #tpu.memory_space<vmem>>, vector<1x392x75xf32>
    %13 = vector.shape_cast %12 : vector<1x392x75xf32> to vector<392x75xf32>
    %cst_12 = arith.constant dense<0.000000e+00> : vector<392x6xf32>
    %14 = tpu.matmul %13, %0, %cst_12 {dimension_numbers = #tpu.dot_dimension_numbers<[1], [0], [0], [1], [0, 0, 1, 1], [], []>} : vector<392x75xf32>, vector<75x6xf32>, vector<392x6xf32> -> vector<392x6xf32>
    %15 = arith.maximumf %11, %14 : vector<392x6xf32>
    %c0_13 = arith.constant 0 : index
    %c0_14 = arith.constant 0 : index
    %16 = vector.load %arg2[%c0_13, %c0_14] : memref<1x6xf32, #tpu.memory_space<vmem>>, vector<1x6xf32>
    %17 = vector.broadcast %16 : vector<1x6xf32> to vector<392x6xf32>
    %18 = arith.addf %15, %17 : vector<392x6xf32>
    %cst_15 = arith.constant 0.000000e+00 : f32
    %19 = vector.broadcast %cst_15 : f32 to vector<392x6xf32>
    %20 = arith.maximumf %18, %19 : vector<392x6xf32>
    %c0_16 = arith.constant 0 : index
    %c0_17 = arith.constant 0 : index
    %21 = vector.load %arg3[%c0_16, %c0_17] : memref<392x6xf32, #tpu.memory_space<vmem>>, vector<392x6xf32>
    tpu.vector_store %arg3[%c0_16, %c0_17], %20 {strides = array<i32>} : memref<392x6xf32, #tpu.memory_space<vmem>>, vector<392x6xf32>,
    return
  }
}

module attributes {stable_mosaic.version = 11 : i64} {
  func.func @_conv_relu_pool_kernel(%arg0: memref<4x50x150xf32, #tpu.memory_space<vmem>>, %arg1: memref<150x16xf32, #tpu.memory_space<vmem>>, %arg2: memref<1x16xf32, #tpu.memory_space<vmem>>, %arg3: memref<50x16xf32, #tpu.memory_space<vmem>>) attributes {dimension_semantics = [], scalar_prefetch = 0 : i64, scratch_operands = 0 : i64, tpu.core_type = #tpu.core_type<tc>} {
    %c0 = arith.constant 0 : index
    %c0_0 = arith.constant 0 : index
    %0 = vector.load %arg1[%c0, %c0_0] : memref<150x16xf32, #tpu.memory_space<vmem>>, vector<150x16xf32>
    %c0_1 = arith.constant 0 : index
    %c0_2 = arith.constant 0 : index
    %c0_3 = arith.constant 0 : index
    %1 = vector.load %arg0[%c0_1, %c0_2, %c0_3] : memref<4x50x150xf32, #tpu.memory_space<vmem>>, vector<1x50x150xf32>
    %2 = vector.shape_cast %1 : vector<1x50x150xf32> to vector<50x150xf32>
    %cst = arith.constant dense<0.000000e+00> : vector<50x16xf32>
    %3 = tpu.matmul %2, %0, %cst {dimension_numbers = #tpu.dot_dimension_numbers<[1], [0], [0], [1], [0, 0, 1, 1], [], []>} : vector<50x150xf32>, vector<150x16xf32>, vector<50x16xf32> -> vector<50x16xf32>
    %c1 = arith.constant 1 : index
    %c0_4 = arith.constant 0 : index
    %c0_5 = arith.constant 0 : index
    %4 = vector.load %arg0[%c1, %c0_4, %c0_5] : memref<4x50x150xf32, #tpu.memory_space<vmem>>, vector<1x50x150xf32>
    %5 = vector.shape_cast %4 : vector<1x50x150xf32> to vector<50x150xf32>
    %cst_6 = arith.constant dense<0.000000e+00> : vector<50x16xf32>
    %6 = tpu.matmul %5, %0, %cst_6 {dimension_numbers = #tpu.dot_dimension_numbers<[1], [0], [0], [1], [0, 0, 1, 1], [], []>} : vector<50x150xf32>, vector<150x16xf32>, vector<50x16xf32> -> vector<50x16xf32>
    %7 = arith.maximumf %3, %6 : vector<50x16xf32>
    %c2 = arith.constant 2 : index
    %c0_7 = arith.constant 0 : index
    %c0_8 = arith.constant 0 : index
    %8 = vector.load %arg0[%c2, %c0_7, %c0_8] : memref<4x50x150xf32, #tpu.memory_space<vmem>>, vector<1x50x150xf32>
    %9 = vector.shape_cast %8 : vector<1x50x150xf32> to vector<50x150xf32>
    %cst_9 = arith.constant dense<0.000000e+00> : vector<50x16xf32>
    %10 = tpu.matmul %9, %0, %cst_9 {dimension_numbers = #tpu.dot_dimension_numbers<[1], [0], [0], [1], [0, 0, 1, 1], [], []>} : vector<50x150xf32>, vector<150x16xf32>, vector<50x16xf32> -> vector<50x16xf32>
    %11 = arith.maximumf %7, %10 : vector<50x16xf32>
    %c3 = arith.constant 3 : index
    %c0_10 = arith.constant 0 : index
    %c0_11 = arith.constant 0 : index
    %12 = vector.load %arg0[%c3, %c0_10, %c0_11] : memref<4x50x150xf32, #tpu.memory_space<vmem>>, vector<1x50x150xf32>
    %13 = vector.shape_cast %12 : vector<1x50x150xf32> to vector<50x150xf32>
    %cst_12 = arith.constant dense<0.000000e+00> : vector<50x16xf32>
    %14 = tpu.matmul %13, %0, %cst_12 {dimension_numbers = #tpu.dot_dimension_numbers<[1], [0], [0], [1], [0, 0, 1, 1], [], []>} : vector<50x150xf32>, vector<150x16xf32>, vector<50x16xf32> -> vector<50x16xf32>
    %15 = arith.maximumf %11, %14 : vector<50x16xf32>
    %c0_13 = arith.constant 0 : index
    %c0_14 = arith.constant 0 : index
    %16 = vector.load %arg2[%c0_13, %c0_14] : memref<1x16xf32, #tpu.memory_space<vmem>>, vector<1x16xf32>
    %17 = vector.broadcast %16 : vector<1x16xf32> to vector<50x16xf32>
    %18 = arith.addf %15, %17 : vector<50x16xf32>
    %cst_15 = arith.constant 0.000000e+00 : f32
    %19 = vector.broadcast %cst_15 : f32 to vector<50x16xf32>
    %20 = arith.maximumf %18, %19 : vector<50x16xf32>
    %c0_16 = arith.constant 0 : index
    %c0_17 = arith.constant 0 : index
    %21 = vector.load %arg3[%c0_16, %c0_17] : memref<50x16xf32, #tpu.memory_space<vmem>>, vector<50x16xf32>
    tpu.vector_store %arg3[%c0_16, %c0_17], %20 {strides = array<i32>} : memref<50x16xf32, #tpu.memory_space<vmem>>, vector<50x16xf32>,
    return
  }
}

module attributes {stable_mosaic.version = 11 : i64} {
  func.func @_fc_block_kernel(%arg0: memref<2x400xf32, #tpu.memory_space<vmem>>, %arg1: memref<400x120xf32, #tpu.memory_space<vmem>>, %arg2: memref<1x120xf32, #tpu.memory_space<vmem>>, %arg3: memref<120x84xf32, #tpu.memory_space<vmem>>, %arg4: memref<1x84xf32, #tpu.memory_space<vmem>>, %arg5: memref<84x10xf32, #tpu.memory_space<vmem>>, %arg6: memref<1x10xf32, #tpu.memory_space<vmem>>, %arg7: memref<2x10xf32, #tpu.memory_space<vmem>>) attributes {dimension_semantics = [], scalar_prefetch = 0 : i64, scratch_operands = 0 : i64, tpu.core_type = #tpu.core_type<tc>} {
    %c0 = arith.constant 0 : index
    %c0_0 = arith.constant 0 : index
    %0 = vector.load %arg0[%c0, %c0_0] : memref<2x400xf32, #tpu.memory_space<vmem>>, vector<2x400xf32>
    %c0_1 = arith.constant 0 : index
    %c0_2 = arith.constant 0 : index
    %1 = vector.load %arg1[%c0_1, %c0_2] : memref<400x120xf32, #tpu.memory_space<vmem>>, vector<400x120xf32>
    %cst = arith.constant dense<0.000000e+00> : vector<2x120xf32>
    %2 = tpu.matmul %0, %1, %cst {dimension_numbers = #tpu.dot_dimension_numbers<[1], [0], [0], [1], [0, 0, 1, 1], [], []>} : vector<2x400xf32>, vector<400x120xf32>, vector<2x120xf32> -> vector<2x120xf32>
    %c0_3 = arith.constant 0 : index
    %c0_4 = arith.constant 0 : index
    %3 = vector.load %arg2[%c0_3, %c0_4] : memref<1x120xf32, #tpu.memory_space<vmem>>, vector<1x120xf32>
    %4 = vector.broadcast %3 : vector<1x120xf32> to vector<2x120xf32>
    %5 = arith.addf %2, %4 : vector<2x120xf32>
    %cst_5 = arith.constant 0.000000e+00 : f32
    %6 = vector.broadcast %cst_5 : f32 to vector<2x120xf32>
    %7 = arith.maximumf %5, %6 : vector<2x120xf32>
    %c0_6 = arith.constant 0 : index
    %c0_7 = arith.constant 0 : index
    %8 = vector.load %arg3[%c0_6, %c0_7] : memref<120x84xf32, #tpu.memory_space<vmem>>, vector<120x84xf32>
    %cst_8 = arith.constant dense<0.000000e+00> : vector<2x84xf32>
    %9 = tpu.matmul %7, %8, %cst_8 {dimension_numbers = #tpu.dot_dimension_numbers<[1], [0], [0], [1], [0, 0, 1, 1], [], []>} : vector<2x120xf32>, vector<120x84xf32>, vector<2x84xf32> -> vector<2x84xf32>
    %c0_9 = arith.constant 0 : index
    %c0_10 = arith.constant 0 : index
    %10 = vector.load %arg4[%c0_9, %c0_10] : memref<1x84xf32, #tpu.memory_space<vmem>>, vector<1x84xf32>
    %11 = vector.broadcast %10 : vector<1x84xf32> to vector<2x84xf32>
    %12 = arith.addf %9, %11 : vector<2x84xf32>
    %cst_11 = arith.constant 0.000000e+00 : f32
    %13 = vector.broadcast %cst_11 : f32 to vector<2x84xf32>
    %14 = arith.maximumf %12, %13 : vector<2x84xf32>
    %c0_12 = arith.constant 0 : index
    %c0_13 = arith.constant 0 : index
    %15 = vector.load %arg5[%c0_12, %c0_13] : memref<84x10xf32, #tpu.memory_space<vmem>>, vector<84x10xf32>
    %cst_14 = arith.constant dense<0.000000e+00> : vector<2x10xf32>
    %16 = tpu.matmul %14, %15, %cst_14 {dimension_numbers = #tpu.dot_dimension_numbers<[1], [0], [0], [1], [0, 0, 1, 1], [], []>} : vector<2x84xf32>, vector<84x10xf32>, vector<2x10xf32> -> vector<2x10xf32>
    %c0_15 = arith.constant 0 : index
    %c0_16 = arith.constant 0 : index
    %17 = vector.load %arg6[%c0_15, %c0_16] : memref<1x10xf32, #tpu.memory_space<vmem>>, vector<1x10xf32>
    %18 = vector.broadcast %17 : vector<1x10xf32> to vector<2x10xf32>
    %19 = arith.addf %16, %18 : vector<2x10xf32>
    %c0_17 = arith.constant 0 : index
    %c0_18 = arith.constant 0 : index
    %20 = vector.load %arg7[%c0_17, %c0_18] : memref<2x10xf32, #tpu.memory_space<vmem>>, vector<2x10xf32>
    tpu.vector_store %arg7[%c0_17, %c0_18], %19 {strides = array<i32>} : memref<2x10xf32, #tpu.memory_space<vmem>>, vector<2x10xf32>,
    return
  }
}

</mosaic_0001>

<llo_original>
// kernel: lenet_forward.3
$region0: #{lenet_forward.3}
  #allocation0 [shape = 'u32[]', space=smem, size = 0x4, offset = 0x4, fixed_abs, tag = 'smem constant byte address 0x4 - core index']
  #allocation1 [shape = 'u32[144,128]{1,0:T(1,128)}', space=vmem, size = 0x12000, scoped, tag = 'internal scratch']
  %s0 = inlined_call_operand.vmem [shape: f32[4,392,75], index: 0, kind: input, shape index: {}]
  %s1 = inlined_call_operand.vmem [shape: f32[75,6], index: 1, kind: input, shape index: {}]
  %s2 = inlined_call_operand.vmem [shape: f32[1,6], index: 2, kind: input, shape index: {}]
  %s3 = inlined_call_operand.vmem [shape: f32[392,6], index: 3, kind: output, shape index: {}]
  %s4 = sld [smem:[#allocation0]]
  $region22: #{lenet_forward.3} parent=0
    _
  %s6 = ssub.s32 1, %s4
  %s7 = scalar_select 0, %s6, %s4
  // Predicated region
  $region2: #{lenet_forward.3} parent=0 // pred_check
    _
  $region3: #{lenet_forward.3} parent=0 // pred_check_branch
    %9 = sbr.rel (0) target = $region5
  $region4: #{lenet_forward.3} parent=0 // pred_region
    _
  $region5: #{lenet_forward.3} parent=0 // pred_fallthru
    _
  // Predicated region
  $region6: #{lenet_forward.3} parent=0 // pred_check
    _
  $region7: #{lenet_forward.3} parent=0 // pred_check_branch
    %11 = sbr.rel (0) target = $region9
  $region8: #{lenet_forward.3} parent=0 // pred_region
    _
  $region9: #{lenet_forward.3} parent=0 // pred_fallthru
    _
  // Predicated region
  $region10: #{lenet_forward.3} parent=0 // pred_check
    _
  $region11: #{lenet_forward.3} parent=0 // pred_check_branch
    %13 = sbr.rel (0) target = $region13
  $region12: #{lenet_forward.3} parent=0 // pred_region
    _
  $region13: #{lenet_forward.3} parent=0 // pred_fallthru
    _
  %v14 = vld [vmem:[%s1] sm:$0xff]
  %v15 = vld [vmem:[%s1 + $0x8] sm:$0xff]
  %v16 = vld [vmem:[%s1 + $0x10] sm:$0xff]
  %v17 = vld [vmem:[%s1 + $0x18] sm:$0xff]
  %v18 = vld [vmem:[%s1 + $0x20] sm:$0xff]
  %v19 = vld [vmem:[%s1 + $0x28] sm:$0xff]
  %v20 = vld [vmem:[%s1 + $0x30] sm:$0xff]
  %v21 = vld [vmem:[%s1 + $0x38] sm:$0xff]
  %v22 = vld [vmem:[%s1 + $0x40] sm:$0xff]
  %v23 = vld [vmem:[%s1 + $0x48] sm:$0x7]
  %v24 = vld [vmem:[%s0] sm:$0xff]
  %v25 = vld [vmem:[%s0 + $0x8] sm:$0xff]
  %v26 = vld [vmem:[%s0 + $0x10] sm:$0xff]
  %v27 = vld [vmem:[%s0 + $0x18] sm:$0xff]
  %v28 = vld [vmem:[%s0 + $0x20] sm:$0xff]
  %v29 = vld [vmem:[%s0 + $0x28] sm:$0xff]
  %v30 = vld [vmem:[%s0 + $0x30] sm:$0xff]
  %v31 = vld [vmem:[%s0 + $0x38] sm:$0xff]
  %v32 = vld [vmem:[%s0 + $0x40] sm:$0xff]
  %v33 = vld [vmem:[%s0 + $0x48] sm:$0xff]
  %v34 = vld [vmem:[%s0 + $0x50] sm:$0xff]
  %v35 = vld [vmem:[%s0 + $0x58] sm:$0xff]
  %v36 = vld [vmem:[%s0 + $0x60] sm:$0xff]
  %v37 = vld [vmem:[%s0 + $0x68] sm:$0xff]
  %v38 = vld [vmem:[%s0 + $0x70] sm:$0xff]
  %v39 = vld [vmem:[%s0 + $0x78] sm:$0xff]
  %v40 = vld [vmem:[%s0 + $0x80] sm:$0xff]
  %v41 = vld [vmem:[%s0 + $0x88] sm:$0xff]
  %v42 = vld [vmem:[%s0 + $0x90] sm:$0xff]
  %v43 = vld [vmem:[%s0 + $0x98] sm:$0xff]
  %v44 = vld [vmem:[%s0 + $0xa0] sm:$0xff]
  %v45 = vld [vmem:[%s0 + $0xa8] sm:$0xff]
  %v46 = vld [vmem:[%s0 + $0xb0] sm:$0xff]
  %v47 = vld [vmem:[%s0 + $0xb8] sm:$0xff]
  %v48 = vld [vmem:[%s0 + $0xc0] sm:$0xff]
  %v49 = vld [vmem:[%s0 + $0xc8] sm:$0xff]
  %v50 = vld [vmem:[%s0 + $0xd0] sm:$0xff]
  %v51 = vld [vmem:[%s0 + $0xd8] sm:$0xff]
  %v52 = vld [vmem:[%s0 + $0xe0] sm:$0xff]
  %v53 = vld [vmem:[%s0 + $0xe8] sm:$0xff]
  %v54 = vld [vmem:[%s0 + $0xf0] sm:$0xff]
  %v55 = vld [vmem:[%s0 + $0xf8] sm:$0xff]
  %v56 = vld [vmem:[%s0 + $0x100] sm:$0xff]
  %v57 = vld [vmem:[%s0 + $0x108] sm:$0xff]
  %v58 = vld [vmem:[%s0 + $0x110] sm:$0xff]
  %v59 = vld [vmem:[%s0 + $0x118] sm:$0xff]
  %v60 = vld [vmem:[%s0 + $0x120] sm:$0xff]
  %v61 = vld [vmem:[%s0 + $0x128] sm:$0xff]
  %v62 = vld [vmem:[%s0 + $0x130] sm:$0xff]
  %v63 = vld [vmem:[%s0 + $0x138] sm:$0xff]
  %v64 = vld [vmem:[%s0 + $0x140] sm:$0xff]
  %v65 = vld [vmem:[%s0 + $0x148] sm:$0xff]
  %v66 = vld [vmem:[%s0 + $0x150] sm:$0xff]
  %v67 = vld [vmem:[%s0 + $0x158] sm:$0xff]
  %v68 = vld [vmem:[%s0 + $0x160] sm:$0xff]
  %v69 = vld [vmem:[%s0 + $0x168] sm:$0xff]
  %v70 = vld [vmem:[%s0 + $0x170] sm:$0xff]
  %v71 = vld [vmem:[%s0 + $0x178] sm:$0xff]
  %v72 = vld [vmem:[%s0 + $0x180] sm:$0xff]
  %vm73 = vcmask 613376
  %v75 = vsel %vm73, %v24, 0
  %v78 = vsel %vm73, %v25, 0
  %v81 = vsel %vm73, %v26, 0
  %v84 = vsel %vm73, %v27, 0
  %v87 = vsel %vm73, %v28, 0
  %v90 = vsel %vm73, %v29, 0
  %v93 = vsel %vm73, %v30, 0
  %v96 = vsel %vm73, %v31, 0
  %v99 = vsel %vm73, %v32, 0
  %v102 = vsel %vm73, %v33, 0
  %v105 = vsel %vm73, %v34, 0
  %v108 = vsel %vm73, %v35, 0
  %v111 = vsel %vm73, %v36, 0
  %v114 = vsel %vm73, %v37, 0
  %v117 = vsel %vm73, %v38, 0
  %v120 = vsel %vm73, %v39, 0
  %v123 = vsel %vm73, %v40, 0
  %v126 = vsel %vm73, %v41, 0
  %v129 = vsel %vm73, %v42, 0
  %v132 = vsel %vm73, %v43, 0
  %v135 = vsel %vm73, %v44, 0
  %v138 = vsel %vm73, %v45, 0
  %v141 = vsel %vm73, %v46, 0
  %v144 = vsel %vm73, %v47, 0
  %v147 = vsel %vm73, %v48, 0
  %v150 = vsel %vm73, %v49, 0
  %v153 = vsel %vm73, %v50, 0
  %v156 = vsel %vm73, %v51, 0
  %v159 = vsel %vm73, %v52, 0
  %v162 = vsel %vm73, %v53, 0
  %v165 = vsel %vm73, %v54, 0
  %v168 = vsel %vm73, %v55, 0
  %v171 = vsel %vm73, %v56, 0
  %v174 = vsel %vm73, %v57, 0
  %v177 = vsel %vm73, %v58, 0
  %v180 = vsel %vm73, %v59, 0
  %v183 = vsel %vm73, %v60, 0
  %v186 = vsel %vm73, %v61, 0
  %v189 = vsel %vm73, %v62, 0
  %v192 = vsel %vm73, %v63, 0
  %v195 = vsel %vm73, %v64, 0
  %v198 = vsel %vm73, %v65, 0
  %v201 = vsel %vm73, %v66, 0
  %v204 = vsel %vm73, %v67, 0
  %v207 = vsel %vm73, %v68, 0
  %v210 = vsel %vm73, %v69, 0
  %v213 = vsel %vm73, %v70, 0
  %v216 = vsel %vm73, %v71, 0
  %v219 = vsel %vm73, %v72, 0
  %vm221 = vcmask 1042432
  %v223 = vsel %vm221, %v23, 0
  %225 = vmatprep.subr.mxu0 0.0
  %226 = vmatpush1.msra.mxu0 %v14
  %227 = vmatprep.subr.mxu0 0.0
  %228 = vmatpush1.msra.mxu0 %v15
  %229 = vmatprep.subr.mxu0 0.0
  %230 = vmatpush1.msra.mxu0 %v16
  %231 = vmatprep.subr.mxu0 0.0
  %232 = vmatpush1.msra.mxu0 %v17
  %233 = vmatprep.subr.mxu0 0.0
  %234 = vmatpush1.msra.mxu0 %v18
  %235 = vmatprep.subr.mxu0 0.0
  %236 = vmatpush1.msra.mxu0 %v19
  %237 = vmatprep.subr.mxu0 0.0
  %238 = vmatpush1.msra.mxu0 %v20
  %239 = vmatprep.subr.mxu0 0.0
  %240 = vmatpush1.msra.mxu0 %v21
  %241 = vmatprep.subr.mxu0 0.0
  %242 = vmatpush1.msra.mxu0 %v22
  %243 = vmatprep.subr.mxu0 0.0
  %244 = vmatpush1.msra.mxu0 %v223
  %245 = vmatprep.subr.mxu0 0.0
  %246 = vmatpush1.msra.mxu0 0.0
  %247 = vmatprep.subr.mxu0 0.0
  %248 = vmatpush1.msra.mxu0 0.0
  %249 = vmatprep.subr.mxu0 0.0
  %250 = vmatpush1.msra.mxu0 0.0
  %251 = vmatprep.subr.mxu0 0.0
  %252 = vmatpush1.msra.mxu0 0.0
  %253 = vmatprep.subr.mxu0 0.0
  %254 = vmatpush1.msra.mxu0 0.0
  %255 = vmatprep.subr.mxu0 0.0
  %256 = vmatpush1.msra.mxu0 0.0
  %257 = vmatprep.subr.mxu0 0.0
  %258 = vmatpush1.msra.mxu0 0.0
  %259 = vmatprep.subr.mxu0 0.0
  %260 = vmatpush1.msra.mxu0 0.0
  %261 = vmatprep.subr.mxu0 0.0
  %262 = vmatpush1.msra.mxu0 0.0
  %263 = vmatprep.subr.mxu0 0.0
  %264 = vmatpush1.msra.mxu0 0.0
  %265 = vmatprep.subr.mxu0 0.0
  %266 = vmatpush1.msra.mxu0 0.0
  %267 = vmatprep.subr.mxu0 0.0
  %268 = vmatpush1.msra.mxu0 0.0
  %269 = vmatprep.subr.mxu0 0.0
  %270 = vmatpush1.msra.mxu0 0.0
  %271 = vmatprep.subr.mxu0 0.0
  %272 = vmatpush1.msra.mxu0 0.0
  %273 = vmatprep.subr.mxu0 0.0
  %274 = vmatpush1.msra.mxu0 0.0
  %275 = vmatprep.subr.mxu0 0.0
  %276 = vmatpush1.msra.mxu0 0.0
  %277 = vmatprep.subr.mxu0 0.0
  %278 = vmatpush1.msra.mxu0 0.0
  %279 = vmatprep.subr.mxu0 0.0
  %280 = vmatpush1.msra.mxu0 0.0
  %281 = vmatprep.subr.mxu0 0.0
  %282 = vmatpush1.msra.mxu0 0.0
  %283 = vmatprep.subr.mxu0 0.0
  %284 = vmatpush1.msra.mxu0 0.0
  %285 = vmatprep.subr.mxu0 0.0
  %286 = vmatpush1.msra.mxu0 0.0
  %287 = vmatprep.subr.mxu0 0.0
  %288 = vmatpush1.msra.mxu0 0.0
  %289 = vmatprep.mubr.f32.mxu0 0.0
  %290 = vmatmul.mubr.f32.gmra.mrb[0].mxu0 %v75
  %v291 = vpop.f32.mrb[0].mxu0
  %v292 = vadd.f32 0.0, %v291
  %v293 = vpop.f32.mrb[0].mxu0
  %294 = vmatprep.mubr.f32.mxu0 0.0
  %295 = vmatmul.mubr.f32.gmra.mrb[0].mxu0 %v78
  %v296 = vpop.f32.mrb[0].mxu0
  %v297 = vadd.f32 0.0, %v296
  %v298 = vpop.f32.mrb[0].mxu0
  %299 = vmatprep.mubr.f32.mxu0 0.0
  %300 = vmatmul.mubr.f32.gmra.mrb[0].mxu0 %v81
  %v301 = vpop.f32.mrb[0].mxu0
  %v302 = vadd.f32 0.0, %v301
  %v303 = vpop.f32.mrb[0].mxu0
  %304 = vmatprep.mubr.f32.mxu0 0.0
  %305 = vmatmul.mubr.f32.gmra.mrb[0].mxu0 %v84
  %v306 = vpop.f32.mrb[0].mxu0
  %v307 = vadd.f32 0.0, %v306
  %v308 = vpop.f32.mrb[0].mxu0
  %309 = vmatprep.mubr.f32.mxu0 0.0
  %310 = vmatmul.mubr.f32.gmra.mrb[0].mxu0 %v87
  %v311 = vpop.f32.mrb[0].mxu0
  %v312 = vadd.f32 0.0, %v311
  %v313 = vpop.f32.mrb[0].mxu0
  %314 = vmatprep.mubr.f32.mxu0 0.0
  %315 = vmatmul.mubr.f32.gmra.mrb[0].mxu0 %v90
  %v316 = vpop.f32.mrb[0].mxu0
  %v317 = vadd.f32 0.0, %v316
  %v318 = vpop.f32.mrb[0].mxu0
  %319 = vmatprep.mubr.f32.mxu0 0.0
  %320 = vmatmul.mubr.f32.gmra.mrb[0].mxu0 %v93
  %v321 = vpop.f32.mrb[0].mxu0
  %v322 = vadd.f32 0.0, %v321
  %v323 = vpop.f32.mrb[0].mxu0
  %324 = vmatprep.mubr.f32.mxu0 0.0
  %325 = vmatmul.mubr.f32.gmra.mrb[0].mxu0 %v96
  %v326 = vpop.f32.mrb[0].mxu0
  %v327 = vadd.f32 0.0, %v326
  %v328 = vpop.f32.mrb[0].mxu0
  %329 = vmatprep.mubr.f32.mxu0 0.0
  %330 = vmatmul.mubr.f32.gmra.mrb[0].mxu0 %v99
  %v331 = vpop.f32.mrb[0].mxu0
  %v332 = vadd.f32 0.0, %v331
  %v333 = vpop.f32.mrb[0].mxu0
  %334 = vmatprep.mubr.f32.mxu0 0.0
  %335 = vmatmul.mubr.f32.gmra.mrb[0].mxu0 %v102
  %v336 = vpop.f32.mrb[0].mxu0
  %v337 = vadd.f32 0.0, %v336
  %v338 = vpop.f32.mrb[0].mxu0
  %339 = vmatprep.mubr.f32.mxu0 0.0
  %340 = vmatmul.mubr.f32.gmra.mrb[0].mxu0 %v105
  %v341 = vpop.f32.mrb[0].mxu0
  %v342 = vadd.f32 0.0, %v341
  %v343 = vpop.f32.mrb[0].mxu0
  %344 = vmatprep.mubr.f32.mxu0 0.0
  %345 = vmatmul.mubr.f32.gmra.mrb[0].mxu0 %v108
  %v346 = vpop.f32.mrb[0].mxu0
  %v347 = vadd.f32 0.0, %v346
  %v348 = vpop.f32.mrb[0].mxu0
  %349 = vmatprep.mubr.f32.mxu0 0.0
  %350 = vmatmul.mubr.f32.gmra.mrb[0].mxu0 %v111
  %v351 = vpop.f32.mrb[0].mxu0
  %v352 = vadd.f32 0.0, %v351
  %v353 = vpop.f32.mrb[0].mxu0
  %354 = vmatprep.mubr.f32.mxu0 0.0
  %355 = vmatmul.mubr.f32.gmra.mrb[0].mxu0 %v114
  %v356 = vpop.f32.mrb[0].mxu0
  %v357 = vadd.f32 0.0, %v356
  %v358 = vpop.f32.mrb[0].mxu0
  %359 = vmatprep.mubr.f32.mxu0 0.0
  %360 = vmatmul.mubr.f32.gmra.mrb[0].mxu0 %v117
  %v361 = vpop.f32.mrb[0].mxu0
  %v362 = vadd.f32 0.0, %v361
  %v363 = vpop.f32.mrb[0].mxu0
  %364 = vmatprep.mubr.f32.mxu0 0.0
  %365 = vmatmul.mubr.f32.gmra.mrb[0].mxu0 %v120
  %v366 = vpop.f32.mrb[0].mxu0
  %v367 = vadd.f32 0.0, %v366
  %v368 = vpop.f32.mrb[0].mxu0
  %369 = vmatprep.mubr.f32.mxu0 0.0
  %370 = vmatmul.mubr.f32.gmra.mrb[0].mxu0 %v123
  %v371 = vpop.f32.mrb[0].mxu0
  %v372 = vadd.f32 0.0, %v371
  %v373 = vpop.f32.mrb[0].mxu0
  %374 = vmatprep.mubr.f32.mxu0 0.0
  %375 = vmatmul.mubr.f32.gmra.mrb[0].mxu0 %v126
  %v376 = vpop.f32.mrb[0].mxu0
  %v377 = vadd.f32 0.0, %v376
  %v378 = vpop.f32.mrb[0].mxu0
  %379 = vmatprep.mubr.f32.mxu0 0.0
  %380 = vmatmul.mubr.f32.gmra.mrb[0].mxu0 %v129
  %v381 = vpop.f32.mrb[0].mxu0
  %v382 = vadd.f32 0.0, %v381
  %v383 = vpop.f32.mrb[0].mxu0
  %384 = vmatprep.mubr.f32.mxu0 0.0
  %385 = vmatmul.mubr.f32.gmra.mrb[0].mxu0 %v132
  %v386 = vpop.f32.mrb[0].mxu0
  %v387 = vadd.f32 0.0, %v386
  %v388 = vpop.f32.mrb[0].mxu0
  %389 = vmatprep.mubr.f32.mxu0 0.0
  %390 = vmatmul.mubr.f32.gmra.mrb[0].mxu0 %v135
  %v391 = vpop.f32.mrb[0].mxu0
  %v392 = vadd.f32 0.0, %v391
  %v393 = vpop.f32.mrb[0].mxu0
  %394 = vmatprep.mubr.f32.mxu0 0.0
  %395 = vmatmul.mubr.f32.gmra.mrb[0].mxu0 %v138
  %v396 = vpop.f32.mrb[0].mxu0
  %v397 = vadd.f32 0.0, %v396
  %v398 = vpop.f32.mrb[0].mxu0
  %399 = vmatprep.mubr.f32.mxu0 0.0
  %400 = vmatmul.mubr.f32.gmra.mrb[0].mxu0 %v141
  %v401 = vpop.f32.mrb[0].mxu0
  %v402 = vadd.f32 0.0, %v401
  %v403 = vpop.f32.mrb[0].mxu0
  %404 = vmatprep.mubr.f32.mxu0 0.0
  %405 = vmatmul.mubr.f32.gmra.mrb[0].mxu0 %v144
  %v406 = vpop.f32.mrb[0].mxu0
  %v407 = vadd.f32 0.0, %v406
  %v408 = vpop.f32.mrb[0].mxu0
  %409 = vmatprep.mubr.f32.mxu0 0.0
  %410 = vmatmul.mubr.f32.gmra.mrb[0].mxu0 %v147
  %v411 = vpop.f32.mrb[0].mxu0
  %v412 = vadd.f32 0.0, %v411
  %v413 = vpop.f32.mrb[0].mxu0
  %414 = vmatprep.mubr.f32.mxu0 0.0
  %415 = vmatmul.mubr.f32.gmra.mrb[0].mxu0 %v150
  %v416 = vpop.f32.mrb[0].mxu0
  %v417 = vadd.f32 0.0, %v416
  %v418 = vpop.f32.mrb[0].mxu0
  %419 = vmatprep.mubr.f32.mxu0 0.0
  %420 = vmatmul.mubr.f32.gmra.mrb[0].mxu0 %v153
  %v421 = vpop.f32.mrb[0].mxu0
  %v422 = vadd.f32 0.0, %v421
  %v423 = vpop.f32.mrb[0].mxu0
  %424 = vmatprep.mubr.f32.mxu0 0.0
  %425 = vmatmul.mubr.f32.gmra.mrb[0].mxu0 %v156
  %v426 = vpop.f32.mrb[0].mxu0
  %v427 = vadd.f32 0.0, %v426
  %v428 = vpop.f32.mrb[0].mxu0
  %429 = vmatprep.mubr.f32.mxu0 0.0
  %430 = vmatmul.mubr.f32.gmra.mrb[0].mxu0 %v159
  %v431 = vpop.f32.mrb[0].mxu0
  %v432 = vadd.f32 0.0, %v431
  %v433 = vpop.f32.mrb[0].mxu0
  %434 = vmatprep.mubr.f32.mxu0 0.0
  %435 = vmatmul.mubr.f32.gmra.mrb[0].mxu0 %v162
  %v436 = vpop.f32.mrb[0].mxu0
  %v437 = vadd.f32 0.0, %v436
  %v438 = vpop.f32.mrb[0].mxu0
  %439 = vmatprep.mubr.f32.mxu0 0.0
  %440 = vmatmul.mubr.f32.gmra.mrb[0].mxu0 %v165
  %v441 = vpop.f32.mrb[0].mxu0
  %v442 = vadd.f32 0.0, %v441
  %v443 = vpop.f32.mrb[0].mxu0
  %444 = vmatprep.mubr.f32.mxu0 0.0
  %445 = vmatmul.mubr.f32.gmra.mrb[0].mxu0 %v168
  %v446 = vpop.f32.mrb[0].mxu0
  %v447 = vadd.f32 0.0, %v446
  %v448 = vpop.f32.mrb[0].mxu0
  %449 = vmatprep.mubr.f32.mxu0 0.0
  %450 = vmatmul.mubr.f32.gmra.mrb[0].mxu0 %v171
  %v451 = vpop.f32.mrb[0].mxu0
  %v452 = vadd.f32 0.0, %v451
  %v453 = vpop.f32.mrb[0].mxu0
  %454 = vmatprep.mubr.f32.mxu0 0.0
  %455 = vmatmul.mubr.f32.gmra.mrb[0].mxu0 %v174
  %v456 = vpop.f32.mrb[0].mxu0
  %v457 = vadd.f32 0.0, %v456
  %v458 = vpop.f32.mrb[0].mxu0
  %459 = vmatprep.mubr.f32.mxu0 0.0
  %460 = vmatmul.mubr.f32.gmra.mrb[0].mxu0 %v177
  %v461 = vpop.f32.mrb[0].mxu0
  %v462 = vadd.f32 0.0, %v461
  %v463 = vpop.f32.mrb[0].mxu0
  %464 = vmatprep.mubr.f32.mxu0 0.0
  %465 = vmatmul.mubr.f32.gmra.mrb[0].mxu0 %v180
  %v466 = vpop.f32.mrb[0].mxu0
  %v467 = vadd.f32 0.0, %v466
  %v468 = vpop.f32.mrb[0].mxu0
  %469 = vmatprep.mubr.f32.mxu0 0.0
  %470 = vmatmul.mubr.f32.gmra.mrb[0].mxu0 %v183
  %v471 = vpop.f32.mrb[0].mxu0
  %v472 = vadd.f32 0.0, %v471
  %v473 = vpop.f32.mrb[0].mxu0
  %474 = vmatprep.mubr.f32.mxu0 0.0
  %475 = vmatmul.mubr.f32.gmra.mrb[0].mxu0 %v186
  %v476 = vpop.f32.mrb[0].mxu0
  %v477 = vadd.f32 0.0, %v476
  %v478 = vpop.f32.mrb[0].mxu0
  %479 = vmatprep.mubr.f32.mxu0 0.0
  %480 = vmatmul.mubr.f32.gmra.mrb[0].mxu0 %v189
  %v481 = vpop.f32.mrb[0].mxu0
  %v482 = vadd.f32 0.0, %v481
  %v483 = vpop.f32.mrb[0].mxu0
  %484 = vmatprep.mubr.f32.mxu0 0.0
  %485 = vmatmul.mubr.f32.gmra.mrb[0].mxu0 %v192
  %v486 = vpop.f32.mrb[0].mxu0
  %v487 = vadd.f32 0.0, %v486
  %v488 = vpop.f32.mrb[0].mxu0
  %489 = vmatprep.mubr.f32.mxu0 0.0
  %490 = vmatmul.mubr.f32.gmra.mrb[0].mxu0 %v195
  %v491 = vpop.f32.mrb[0].mxu0
  %v492 = vadd.f32 0.0, %v491
  %v493 = vpop.f32.mrb[0].mxu0
  %494 = vmatprep.mubr.f32.mxu0 0.0
  %495 = vmatmul.mubr.f32.gmra.mrb[0].mxu0 %v198
  %v496 = vpop.f32.mrb[0].mxu0
  %v497 = vadd.f32 0.0, %v496
  %v498 = vpop.f32.mrb[0].mxu0
  %499 = vmatprep.mubr.f32.mxu0 0.0
  %500 = vmatmul.mubr.f32.gmra.mrb[0].mxu0 %v201
  %v501 = vpop.f32.mrb[0].mxu0
  %v502 = vadd.f32 0.0, %v501
  %v503 = vpop.f32.mrb[0].mxu0
  %504 = vmatprep.mubr.f32.mxu0 0.0
  %505 = vmatmul.mubr.f32.gmra.mrb[0].mxu0 %v204
  %v506 = vpop.f32.mrb[0].mxu0
  %v507 = vadd.f32 0.0, %v506
  %v508 = vpop.f32.mrb[0].mxu0
  %509 = vmatprep.mubr.f32.mxu0 0.0
  %510 = vmatmul.mubr.f32.gmra.mrb[0].mxu0 %v207
  %v511 = vpop.f32.mrb[0].mxu0
  %v512 = vadd.f32 0.0, %v511
  %v513 = vpop.f32.mrb[0].mxu0
  %514 = vmatprep.mubr.f32.mxu0 0.0
  %515 = vmatmul.mubr.f32.gmra.mrb[0].mxu0 %v210
  %v516 = vpop.f32.mrb[0].mxu0
  %v517 = vadd.f32 0.0, %v516
  %v518 = vpop.f32.mrb[0].mxu0
  %519 = vmatprep.mubr.f32.mxu0 0.0
  %520 = vmatmul.mubr.f32.gmra.mrb[0].mxu0 %v213
  %v521 = vpop.f32.mrb[0].mxu0
  %v522 = vadd.f32 0.0, %v521
  %v523 = vpop.f32.mrb[0].mxu0
  %524 = vmatprep.mubr.f32.mxu0 0.0
  %525 = vmatmul.mubr.f32.gmra.mrb[0].mxu0 %v216
  %v526 = vpop.f32.mrb[0].mxu0
  %v527 = vadd.f32 0.0, %v526
  %v528 = vpop.f32.mrb[0].mxu0
  %529 = vmatprep.mubr.f32.mxu0 0.0
  %530 = vmatmul.mubr.f32.gmra.mrb[0].mxu0 %v219
  %v531 = vpop.f32.mrb[0].mxu0
  %v532 = vadd.f32 0.0, %v531
  %v533 = vpop.f32.mrb[0].mxu0
  %534 = vdwg.mxu0
  %s535 = scalar_lea.vmem %s0, 392
  %v536 = vld [vmem:[%s535] sm:$0xff]
  %v537 = vld [vmem:[%s535 + $0x8] sm:$0xff]
  %v538 = vld [vmem:[%s535 + $0x10] sm:$0xff]
  %v539 = vld [vmem:[%s535 + $0x18] sm:$0xff]
  %v540 = vld [vmem:[%s535 + $0x20] sm:$0xff]
  %v541 = vld [vmem:[%s535 + $0x28] sm:$0xff]
  %v542 = vld [vmem:[%s535 + $0x30] sm:$0xff]
  %v543 = vld [vmem:[%s535 + $0x38] sm:$0xff]
  %v544 = vld [vmem:[%s535 + $0x40] sm:$0xff]
  %v545 = vld [vmem:[%s535 + $0x48] sm:$0xff]
  %v546 = vld [vmem:[%s535 + $0x50] sm:$0xff]
  %v547 = vld [vmem:[%s535 + $0x58] sm:$0xff]
  %v548 = vld [vmem:[%s535 + $0x60] sm:$0xff]
  %v549 = vld [vmem:[%s535 + $0x68] sm:$0xff]
  %v550 = vld [vmem:[%s535 + $0x70] sm:$0xff]
  %v551 = vld [vmem:[%s535 + $0x78] sm:$0xff]
  %v552 = vld [vmem:[%s535 + $0x80] sm:$0xff]
  %v553 = vld [vmem:[%s535 + $0x88] sm:$0xff]
  %v554 = vld [vmem:[%s535 + $0x90] sm:$0xff]
  %v555 = vld [vmem:[%s535 + $0x98] sm:$0xff]
  %v556 = vld [vmem:[%s535 + $0xa0] sm:$0xff]
  %v557 = vld [vmem:[%s535 + $0xa8] sm:$0xff]
  %v558 = vld [vmem:[%s535 + $0xb0] sm:$0xff]
  %v559 = vld [vmem:[%s535 + $0xb8] sm:$0xff]
  %v560 = vld [vmem:[%s535 + $0xc0] sm:$0xff]
  %v561 = vld [vmem:[%s535 + $0xc8] sm:$0xff]
  %v562 = vld [vmem:[%s535 + $0xd0] sm:$0xff]
  %v563 = vld [vmem:[%s535 + $0xd8] sm:$0xff]
  %v564 = vld [vmem:[%s535 + $0xe0] sm:$0xff]
  %v565 = vld [vmem:[%s535 + $0xe8] sm:$0xff]
  %v566 = vld [vmem:[%s535 + $0xf0] sm:$0xff]
  %v567 = vld [vmem:[%s535 + $0xf8] sm:$0xff]
  %v568 = vld [vmem:[%s535 + $0x100] sm:$0xff]
  %v569 = vld [vmem:[%s535 + $0x108] sm:$0xff]
  %v570 = vld [vmem:[%s535 + $0x110] sm:$0xff]
  %v571 = vld [vmem:[%s535 + $0x118] sm:$0xff]
  %v572 = vld [vmem:[%s535 + $0x120] sm:$0xff]
  %v573 = vld [vmem:[%s535 + $0x128] sm:$0xff]
  %v574 = vld [vmem:[%s535 + $0x130] sm:$0xff]
  %v575 = vld [vmem:[%s535 + $0x138] sm:$0xff]
  %v576 = vld [vmem:[%s535 + $0x140] sm:$0xff]
  %v577 = vld [vmem:[%s535 + $0x148] sm:$0xff]
  %v578 = vld [vmem:[%s535 + $0x150] sm:$0xff]
  %v579 = vld [vmem:[%s535 + $0x158] sm:$0xff]
  %v580 = vld [vmem:[%s535 + $0x160] sm:$0xff]
  %v581 = vld [vmem:[%s535 + $0x168] sm:$0xff]
  %v582 = vld [vmem:[%s535 + $0x170] sm:$0xff]
  %v583 = vld [vmem:[%s535 + $0x178] sm:$0xff]
  %v584 = vld [vmem:[%s535 + $0x180] sm:$0xff]
  %v586 = vsel %vm73, %v536, 0
  %v589 = vsel %vm73, %v537, 0
  %v592 = vsel %vm73, %v538, 0
  %v595 = vsel %vm73, %v539, 0
  %v598 = vsel %vm73, %v540, 0
  %v601 = vsel %vm73, %v541, 0
  %v604 = vsel %vm73, %v542, 0
  %v607 = vsel %vm73, %v543, 0
  %v610 = vsel %vm73, %v544, 0
  %v613 = vsel %vm73, %v545, 0
  %v616 = vsel %vm73, %v546, 0
  %v619 = vsel %vm73, %v547, 0
  %v622 = vsel %vm73, %v548, 0
  %v625 = vsel %vm73, %v549, 0
  %v628 = vsel %vm73, %v550, 0
  %v631 = vsel %vm73, %v551, 0
  %v634 = vsel %vm73, %v552, 0
  %v637 = vsel %vm73, %v553, 0
  %v640 = vsel %vm73, %v554, 0
  %v643 = vsel %vm73, %v555, 0
  %v646 = vsel %vm73, %v556, 0
  %v649 = vsel %vm73, %v557, 0
  %v652 = vsel %vm73, %v558, 0
  %v655 = vsel %vm73, %v559, 0
  %v658 = vsel %vm73, %v560, 0
  %v661 = vsel %vm73, %v561, 0
  %v664 = vsel %vm73, %v562, 0
  %v667 = vsel %vm73, %v563, 0
  %v670 = vsel %vm73, %v564, 0
  %v673 = vsel %vm73, %v565, 0
  %v676 = vsel %vm73, %v566, 0
  %v679 = vsel %vm73, %v567, 0
  %v682 = vsel %vm73, %v568, 0
  %v685 = vsel %vm73, %v569, 0
  %v688 = vsel %vm73, %v570, 0
  %v691 = vsel %vm73, %v571, 0
  %v694 = vsel %vm73, %v572, 0
  %v697 = vsel %vm73, %v573, 0
  %v700 = vsel %vm73, %v574, 0
  %v703 = vsel %vm73, %v575, 0
  %v706 = vsel %vm73, %v576, 0
  %v709 = vsel %vm73, %v577, 0
  %v712 = vsel %vm73, %v578, 0
  %v715 = vsel %vm73, %v579, 0
  %v718 = vsel %vm73, %v580, 0
  %v721 = vsel %vm73, %v581, 0
  %v724 = vsel %vm73, %v582, 0
  %v727 = vsel %vm73, %v583, 0
  %v730 = vsel %vm73, %v584, 0
  %732 = vmatprep.subr.mxu0 0.0
  %733 = vmatpush1.msra.mxu0 %v14
  %734 = vmatprep.subr.mxu0 0.0
  %735 = vmatpush1.msra.mxu0 %v15
  %736 = vmatprep.subr.mxu0 0.0
  %737 = vmatpush1.msra.mxu0 %v16
  %738 = vmatprep.subr.mxu0 0.0
  %739 = vmatpush1.msra.mxu0 %v17
  %740 = vmatprep.subr.mxu0 0.0
  %741 = vmatpush1.msra.mxu0 %v18
  %742 = vmatprep.subr.mxu0 0.0
  %743 = vmatpush1.msra.mxu0 %v19
  %744 = vmatprep.subr.mxu0 0.0
  %745 = vmatpush1.msra.mxu0 %v20
  %746 = vmatprep.subr.mxu0 0.0
  %747 = vmatpush1.msra.mxu0 %v21
  %748 = vmatprep.subr.mxu0 0.0
  %749 = vmatpush1.msra.mxu0 %v22
  %750 = vmatprep.subr.mxu0 0.0
  %751 = vmatpush1.msra.mxu0 %v223
  %752 = vmatprep.subr.mxu0 0.0
  %753 = vmatpush1.msra.mxu0 0.0
  %754 = vmatprep.subr.mxu0 0.0
  %755 = vmatpush1.msra.mxu0 0.0
  %756 = vmatprep.subr.mxu0 0.0
  %757 = vmatpush1.msra.mxu0 0.0
  %758 = vmatprep.subr.mxu0 0.0
  %759 = vmatpush1.msra.mxu0 0.0
  %760 = vmatprep.subr.mxu0 0.0
  %761 = vmatpush1.msra.mxu0 0.0
  %762 = vmatprep.subr.mxu0 0.0
  %763 = vmatpush1.msra.mxu0 0.0
  %764 = vmatprep.subr.mxu0 0.0
  %765 = vmatpush1.msra.mxu0 0.0
  %766 = vmatprep.subr.mxu0 0.0
  %767 = vmatpush1.msra.mxu0 0.0
  %768 = vmatprep.subr.mxu0 0.0
  %769 = vmatpush1.msra.mxu0 0.0
  %770 = vmatprep.subr.mxu0 0.0
  %771 = vmatpush1.msra.mxu0 0.0
  %772 = vmatprep.subr.mxu0 0.0
  %773 = vmatpush1.msra.mxu0 0.0
  %774 = vmatprep.subr.mxu0 0.0
  %775 = vmatpush1.msra.mxu0 0.0
  %776 = vmatprep.subr.mxu0 0.0
  %777 = vmatpush1.msra.mxu0 0.0
  %778 = vmatprep.subr.mxu0 0.0
  %779 = vmatpush1.msra.mxu0 0.0
  %780 = vmatprep.subr.mxu0 0.0
  %781 = vmatpush1.msra.mxu0 0.0
  %782 = vmatprep.subr.mxu0 0.0
  %783 = vmatpush1.msra.mxu0 0.0
  %784 = vmatprep.subr.mxu0 0.0
  %785 = vmatpush1.msra.mxu0 0.0
  %786 = vmatprep.subr.mxu0 0.0
  %787 = vmatpush1.msra.mxu0 0.0
  %788 = vmatprep.subr.mxu0 0.0
  %789 = vmatpush1.msra.mxu0 0.0
  %790 = vmatprep.subr.mxu0 0.0
  %791 = vmatpush1.msra.mxu0 0.0
  %792 = vmatprep.subr.mxu0 0.0
  %793 = vmatpush1.msra.mxu0 0.0
  %794 = vmatprep.subr.mxu0 0.0
  %795 = vmatpush1.msra.mxu0 0.0
  %796 = vmatprep.mubr.f32.mxu0 0.0
  %797 = vmatmul.mubr.f32.gmra.mrb[0].mxu0 %v586
  %v798 = vpop.f32.mrb[0].mxu0
  %v799 = vadd.f32 0.0, %v798
  %v800 = vpop.f32.mrb[0].mxu0
  %801 = vmatprep.mubr.f32.mxu0 0.0
  %802 = vmatmul.mubr.f32.gmra.mrb[0].mxu0 %v589
  %v803 = vpop.f32.mrb[0].mxu0
  %v804 = vadd.f32 0.0, %v803
  %v805 = vpop.f32.mrb[0].mxu0
  %806 = vmatprep.mubr.f32.mxu0 0.0
  %807 = vmatmul.mubr.f32.gmra.mrb[0].mxu0 %v592
  %v808 = vpop.f32.mrb[0].mxu0
  %v809 = vadd.f32 0.0, %v808
  %v810 = vpop.f32.mrb[0].mxu0
  %811 = vmatprep.mubr.f32.mxu0 0.0
  %812 = vmatmul.mubr.f32.gmra.mrb[0].mxu0 %v595
  %v813 = vpop.f32.mrb[0].mxu0
  %v814 = vadd.f32 0.0, %v813
  %v815 = vpop.f32.mrb[0].mxu0
  %816 = vmatprep.mubr.f32.mxu0 0.0
  %817 = vmatmul.mubr.f32.gmra.mrb[0].mxu0 %v598
  %v818 = vpop.f32.mrb[0].mxu0
  %v819 = vadd.f32 0.0, %v818
  %v820 = vpop.f32.mrb[0].mxu0
  %821 = vmatprep.mubr.f32.mxu0 0.0
  %822 = vmatmul.mubr.f32.gmra.mrb[0].mxu0 %v601
  %v823 = vpop.f32.mrb[0].mxu0
  %v824 = vadd.f32 0.0, %v823
  %v825 = vpop.f32.mrb[0].mxu0
  %826 = vmatprep.mubr.f32.mxu0 0.0
  %827 = vmatmul.mubr.f32.gmra.mrb[0].mxu0 %v604
  %v828 = vpop.f32.mrb[0].mxu0
  %v829 = vadd.f32 0.0, %v828
  %v830 = vpop.f32.mrb[0].mxu0
  %831 = vmatprep.mubr.f32.mxu0 0.0
  %832 = vmatmul.mubr.f32.gmra.mrb[0].mxu0 %v607
  %v833 = vpop.f32.mrb[0].mxu0
  %v834 = vadd.f32 0.0, %v833
  %v835 = vpop.f32.mrb[0].mxu0
  %836 = vmatprep.mubr.f32.mxu0 0.0
  %837 = vmatmul.mubr.f32.gmra.mrb[0].mxu0 %v610
  %v838 = vpop.f32.mrb[0].mxu0
  %v839 = vadd.f32 0.0, %v838
  %v840 = vpop.f32.mrb[0].mxu0
  %841 = vmatprep.mubr.f32.mxu0 0.0
  %842 = vmatmul.mubr.f32.gmra.mrb[0].mxu0 %v613
  %v843 = vpop.f32.mrb[0].mxu0
  %v844 = vadd.f32 0.0, %v843
  %v845 = vpop.f32.mrb[0].mxu0
  %846 = vmatprep.mubr.f32.mxu0 0.0
  %847 = vmatmul.mubr.f32.gmra.mrb[0].mxu0 %v616
  %v848 = vpop.f32.mrb[0].mxu0
  %v849 = vadd.f32 0.0, %v848
  %v850 = vpop.f32.mrb[0].mxu0
  %851 = vmatprep.mubr.f32.mxu0 0.0
  %852 = vmatmul.mubr.f32.gmra.mrb[0].mxu0 %v619
  %v853 = vpop.f32.mrb[0].mxu0
  %v854 = vadd.f32 0.0, %v853
  %v855 = vpop.f32.mrb[0].mxu0
  %856 = vmatprep.mubr.f32.mxu0 0.0
  %857 = vmatmul.mubr.f32.gmra.mrb[0].mxu0 %v622
  %v858 = vpop.f32.mrb[0].mxu0
  %v859 = vadd.f32 0.0, %v858
  %v860 = vpop.f32.mrb[0].mxu0
  %861 = vmatprep.mubr.f32.mxu0 0.0
  %862 = vmatmul.mubr.f32.gmra.mrb[0].mxu0 %v625
  %v863 = vpop.f32.mrb[0].mxu0
  %v864 = vadd.f32 0.0, %v863
  %v865 = vpop.f32.mrb[0].mxu0
  %866 = vmatprep.mubr.f32.mxu0 0.0
  %867 = vmatmul.mubr.f32.gmra.mrb[0].mxu0 %v628
  %v868 = vpop.f32.mrb[0].mxu0
  %v869 = vadd.f32 0.0, %v868
  %v870 = vpop.f32.mrb[0].mxu0
  %871 = vmatprep.mubr.f32.mxu0 0.0
  %872 = vmatmul.mubr.f32.gmra.mrb[0].mxu0 %v631
  %v873 = vpop.f32.mrb[0].mxu0
  %v874 = vadd.f32 0.0, %v873
  %v875 = vpop.f32.mrb[0].mxu0
  %876 = vmatprep.mubr.f32.mxu0 0.0
  %877 = vmatmul.mubr.f32.gmra.mrb[0].mxu0 %v634
  %v878 = vpop.f32.mrb[0].mxu0
  %v879 = vadd.f32 0.0, %v878
  %v880 = vpop.f32.mrb[0].mxu0
  %881 = vmatprep.mubr.f32.mxu0 0.0
  %882 = vmatmul.mubr.f32.gmra.mrb[0].mxu0 %v637
  %v883 = vpop.f32.mrb[0].mxu0
  %v884 = vadd.f32 0.0, %v883
  %v885 = vpop.f32.mrb[0].mxu0
  %886 = vmatprep.mubr.f32.mxu0 0.0
  %887 = vmatmul.mubr.f32.gmra.mrb[0].mxu0 %v640
  %v888 = vpop.f32.mrb[0].mxu0
  %v889 = vadd.f32 0.0, %v888
  %v890 = vpop.f32.mrb[0].mxu0
  %891 = vmatprep.mubr.f32.mxu0 0.0
  %892 = vmatmul.mubr.f32.gmra.mrb[0].mxu0 %v643
  %v893 = vpop.f32.mrb[0].mxu0
  %v894 = vadd.f32 0.0, %v893
  %v895 = vpop.f32.mrb[0].mxu0
  %896 = vmatprep.mubr.f32.mxu0 0.0
  %897 = vmatmul.mubr.f32.gmra.mrb[0].mxu0 %v646
  %v898 = vpop.f32.mrb[0].mxu0
  %v899 = vadd.f32 0.0, %v898
  %v900 = vpop.f32.mrb[0].mxu0
  %901 = vmatprep.mubr.f32.mxu0 0.0
  %902 = vmatmul.mubr.f32.gmra.mrb[0].mxu0 %v649
  %v903 = vpop.f32.mrb[0].mxu0
  %v904 = vadd.f32 0.0, %v903
  %v905 = vpop.f32.mrb[0].mxu0
  %906 = vmatprep.mubr.f32.mxu0 0.0
  %907 = vmatmul.mubr.f32.gmra.mrb[0].mxu0 %v652
  %v908 = vpop.f32.mrb[0].mxu0
  %v909 = vadd.f32 0.0, %v908
  %v910 = vpop.f32.mrb[0].mxu0
  %911 = vmatprep.mubr.f32.mxu0 0.0
  %912 = vmatmul.mubr.f32.gmra.mrb[0].mxu0 %v655
  %v913 = vpop.f32.mrb[0].mxu0
  %v914 = vadd.f32 0.0, %v913
  %v915 = vpop.f32.mrb[0].mxu0
  %916 = vmatprep.mubr.f32.mxu0 0.0
  %917 = vmatmul.mubr.f32.gmra.mrb[0].mxu0 %v658
  %v918 = vpop.f32.mrb[0].mxu0
  %v919 = vadd.f32 0.0, %v918
  %v920 = vpop.f32.mrb[0].mxu0
  %921 = vmatprep.mubr.f32.mxu0 0.0
  %922 = vmatmul.mubr.f32.gmra.mrb[0].mxu0 %v661
  %v923 = vpop.f32.mrb[0].mxu0
  %v924 = vadd.f32 0.0, %v923
  %v925 = vpop.f32.mrb[0].mxu0
  %926 = vmatprep.mubr.f32.mxu0 0.0
  %927 = vmatmul.mubr.f32.gmra.mrb[0].mxu0 %v664
  %v928 = vpop.f32.mrb[0].mxu0
  %v929 = vadd.f32 0.0, %v928
  %v930 = vpop.f32.mrb[0].mxu0
  %931 = vmatprep.mubr.f32.mxu0 0.0
  %932 = vmatmul.mubr.f32.gmra.mrb[0].mxu0 %v667
  %v933 = vpop.f32.mrb[0].mxu0
  %v934 = vadd.f32 0.0, %v933
  %v935 = vpop.f32.mrb[0].mxu0
  %936 = vmatprep.mubr.f32.mxu0 0.0
  %937 = vmatmul.mubr.f32.gmra.mrb[0].mxu0 %v670
  %v938 = vpop.f32.mrb[0].mxu0
  %v939 = vadd.f32 0.0, %v938
  %v940 = vpop.f32.mrb[0].mxu0
  %941 = vmatprep.mubr.f32.mxu0 0.0
  %942 = vmatmul.mubr.f32.gmra.mrb[0].mxu0 %v673
  %v943 = vpop.f32.mrb[0].mxu0
  %v944 = vadd.f32 0.0, %v943
  %v945 = vpop.f32.mrb[0].mxu0
  %946 = vmatprep.mubr.f32.mxu0 0.0
  %947 = vmatmul.mubr.f32.gmra.mrb[0].mxu0 %v676
  %v948 = vpop.f32.mrb[0].mxu0
  %v949 = vadd.f32 0.0, %v948
  %v950 = vpop.f32.mrb[0].mxu0
  %951 = vmatprep.mubr.f32.mxu0 0.0
  %952 = vmatmul.mubr.f32.gmra.mrb[0].mxu0 %v679
  %v953 = vpop.f32.mrb[0].mxu0
  %v954 = vadd.f32 0.0, %v953
  %v955 = vpop.f32.mrb[0].mxu0
  %956 = vmatprep.mubr.f32.mxu0 0.0
  %957 = vmatmul.mubr.f32.gmra.mrb[0].mxu0 %v682
  %v958 = vpop.f32.mrb[0].mxu0
  %v959 = vadd.f32 0.0, %v958
  %v960 = vpop.f32.mrb[0].mxu0
  %961 = vmatprep.mubr.f32.mxu0 0.0
  %962 = vmatmul.mubr.f32.gmra.mrb[0].mxu0 %v685
  %v963 = vpop.f32.mrb[0].mxu0
  %v964 = vadd.f32 0.0, %v963
  %v965 = vpop.f32.mrb[0].mxu0
  %966 = vmatprep.mubr.f32.mxu0 0.0
  %967 = vmatmul.mubr.f32.gmra.mrb[0].mxu0 %v688
  %v968 = vpop.f32.mrb[0].mxu0
  %v969 = vadd.f32 0.0, %v968
  %v970 = vpop.f32.mrb[0].mxu0
  %971 = vmatprep.mubr.f32.mxu0 0.0
  %972 = vmatmul.mubr.f32.gmra.mrb[0].mxu0 %v691
  %v973 = vpop.f32.mrb[0].mxu0
  %v974 = vadd.f32 0.0, %v973
  %v975 = vpop.f32.mrb[0].mxu0
  %976 = vmatprep.mubr.f32.mxu0 0.0
  %977 = vmatmul.mubr.f32.gmra.mrb[0].mxu0 %v694
  %v978 = vpop.f32.mrb[0].mxu0
  %v979 = vadd.f32 0.0, %v978
  %v980 = vpop.f32.mrb[0].mxu0
  %981 = vmatprep.mubr.f32.mxu0 0.0
  %982 = vmatmul.mubr.f32.gmra.mrb[0].mxu0 %v697
  %v983 = vpop.f32.mrb[0].mxu0
  %v984 = vadd.f32 0.0, %v983
  %v985 = vpop.f32.mrb[0].mxu0
  %986 = vmatprep.mubr.f32.mxu0 0.0
  %987 = vmatmul.mubr.f32.gmra.mrb[0].mxu0 %v700
  %v988 = vpop.f32.mrb[0].mxu0
  %v989 = vadd.f32 0.0, %v988
  %v990 = vpop.f32.mrb[0].mxu0
  %991 = vmatprep.mubr.f32.mxu0 0.0
  %992 = vmatmul.mubr.f32.gmra.mrb[0].mxu0 %v703
  %v993 = vpop.f32.mrb[0].mxu0
  %v994 = vadd.f32 0.0, %v993
  %v995 = vpop.f32.mrb[0].mxu0
  %996 = vmatprep.mubr.f32.mxu0 0.0
  %997 = vmatmul.mubr.f32.gmra.mrb[0].mxu0 %v706
  %v998 = vpop.f32.mrb[0].mxu0
  %v999 = vadd.f32 0.0, %v998
  %v1000 = vpop.f32.mrb[0].mxu0
  %1001 = vmatprep.mubr.f32.mxu0 0.0
  %1002 = vmatmul.mubr.f32.gmra.mrb[0].mxu0 %v709
  %v1003 = vpop.f32.mrb[0].mxu0
  %v1004 = vadd.f32 0.0, %v1003
  %v1005 = vpop.f32.mrb[0].mxu0
  %1006 = vmatprep.mubr.f32.mxu0 0.0
  %1007 = vmatmul.mubr.f32.gmra.mrb[0].mxu0 %v712
  %v1008 = vpop.f32.mrb[0].mxu0
  %v1009 = vadd.f32 0.0, %v1008
  %v1010 = vpop.f32.mrb[0].mxu0
  %1011 = vmatprep.mubr.f32.mxu0 0.0
  %1012 = vmatmul.mubr.f32.gmra.mrb[0].mxu0 %v715
  %v1013 = vpop.f32.mrb[0].mxu0
  %v1014 = vadd.f32 0.0, %v1013
  %v1015 = vpop.f32.mrb[0].mxu0
  %1016 = vmatprep.mubr.f32.mxu0 0.0
  %1017 = vmatmul.mubr.f32.gmra.mrb[0].mxu0 %v718
  %v1018 = vpop.f32.mrb[0].mxu0
  %v1019 = vadd.f32 0.0, %v1018
  %v1020 = vpop.f32.mrb[0].mxu0
  %1021 = vmatprep.mubr.f32.mxu0 0.0
  %1022 = vmatmul.mubr.f32.gmra.mrb[0].mxu0 %v721
  %v1023 = vpop.f32.mrb[0].mxu0
  %v1024 = vadd.f32 0.0, %v1023
  %v1025 = vpop.f32.mrb[0].mxu0
  %1026 = vmatprep.mubr.f32.mxu0 0.0
  %1027 = vmatmul.mubr.f32.gmra.mrb[0].mxu0 %v724
  %v1028 = vpop.f32.mrb[0].mxu0
  %v1029 = vadd.f32 0.0, %v1028
  %v1030 = vpop.f32.mrb[0].mxu0
  %1031 = vmatprep.mubr.f32.mxu0 0.0
  %1032 = vmatmul.mubr.f32.gmra.mrb[0].mxu0 %v727
  %v1033 = vpop.f32.mrb[0].mxu0
  %v1034 = vadd.f32 0.0, %v1033
  %v1035 = vpop.f32.mrb[0].mxu0
  %1036 = vmatprep.mubr.f32.mxu0 0.0
  %1037 = vmatmul.mubr.f32.gmra.mrb[0].mxu0 %v730
  %v1038 = vpop.f32.mrb[0].mxu0
  %v1039 = vadd.f32 0.0, %v1038
  %v1040 = vpop.f32.mrb[0].mxu0
  %1041 = vdwg.mxu0
  %v1042 = vmax.f32 %v292, %v799
  %v1043 = vmax.f32 %v297, %v804
  %v1044 = vmax.f32 %v302, %v809
  %v1045 = vmax.f32 %v307, %v814
  %v1046 = vmax.f32 %v312, %v819
  %v1047 = vmax.f32 %v317, %v824
  %v1048 = vmax.f32 %v322, %v829
  %v1049 = vmax.f32 %v327, %v834
  %v1050 = vmax.f32 %v332, %v839
  %v1051 = vmax.f32 %v337, %v844
  %v1052 = vmax.f32 %v342, %v849
  %v1053 = vmax.f32 %v347, %v854
  %v1054 = vmax.f32 %v352, %v859
  %v1055 = vmax.f32 %v357, %v864
  %v1056 = vmax.f32 %v362, %v869
  %v1057 = vmax.f32 %v367, %v874
  %v1058 = vmax.f32 %v372, %v879
  %v1059 = vmax.f32 %v377, %v884
  %v1060 = vmax.f32 %v382, %v889
  %v1061 = vmax.f32 %v387, %v894
  %v1062 = vmax.f32 %v392, %v899
  %v1063 = vmax.f32 %v397, %v904
  %v1064 = vmax.f32 %v402, %v909
  %v1065 = vmax.f32 %v407, %v914
  %v1066 = vmax.f32 %v412, %v919
  %v1067 = vmax.f32 %v417, %v924
  %v1068 = vmax.f32 %v422, %v929
  %v1069 = vmax.f32 %v427, %v934
  %v1070 = vmax.f32 %v432, %v939
  %v1071 = vmax.f32 %v437, %v944
  %v1072 = vmax.f32 %v442, %v949
  %v1073 = vmax.f32 %v447, %v954
  %v1074 = vmax.f32 %v452, %v959
  %v1075 = vmax.f32 %v457, %v964
  %v1076 = vmax.f32 %v462, %v969
  %v1077 = vmax.f32 %v467, %v974
  %v1078 = vmax.f32 %v472, %v979
  %v1079 = vmax.f32 %v477, %v984
  %v1080 = vmax.f32 %v482, %v989
  %v1081 = vmax.f32 %v487, %v994
  %v1082 = vmax.f32 %v492, %v999
  %v1083 = vmax.f32 %v497, %v1004
  %v1084 = vmax.f32 %v502, %v1009
  %v1085 = vmax.f32 %v507, %v1014
  %v1086 = vmax.f32 %v512, %v1019
  %v1087 = vmax.f32 %v517, %v1024
  %v1088 = vmax.f32 %v522, %v1029
  %v1089 = vmax.f32 %v527, %v1034
  %v1090 = vmax.f32 %v532, %v1039
  %s1091 = scalar_lea.vmem %s0, 784
  %v1092 = vld [vmem:[%s1091] sm:$0xff]
  %v1093 = vld [vmem:[%s1091 + $0x8] sm:$0xff]
  %v1094 = vld [vmem:[%s1091 + $0x10] sm:$0xff]
  %v1095 = vld [vmem:[%s1091 + $0x18] sm:$0xff]
  %v1096 = vld [vmem:[%s1091 + $0x20] sm:$0xff]
  %v1097 = vld [vmem:[%s1091 + $0x28] sm:$0xff]
  %v1098 = vld [vmem:[%s1091 + $0x30] sm:$0xff]
  %v1099 = vld [vmem:[%s1091 + $0x38] sm:$0xff]
  %v1100 = vld [vmem:[%s1091 + $0x40] sm:$0xff]
  %v1101 = vld [vmem:[%s1091 + $0x48] sm:$0xff]
  %v1102 = vld [vmem:[%s1091 + $0x50] sm:$0xff]
  %v1103 = vld [vmem:[%s1091 + $0x58] sm:$0xff]
  %v1104 = vld [vmem:[%s1091 + $0x60] sm:$0xff]
  %v1105 = vld [vmem:[%s1091 + $0x68] sm:$0xff]
  %v1106 = vld [vmem:[%s1091 + $0x70] sm:$0xff]
  %v1107 = vld [vmem:[%s1091 + $0x78] sm:$0xff]
  %v1108 = vld [vmem:[%s1091 + $0x80] sm:$0xff]
  %v1109 = vld [vmem:[%s1091 + $0x88] sm:$0xff]
  %v1110 = vld [vmem:[%s1091 + $0x90] sm:$0xff]
  %v1111 = vld [vmem:[%s1091 + $0x98] sm:$0xff]
  %v1112 = vld [vmem:[%s1091 + $0xa0] sm:$0xff]
  %v1113 = vld [vmem:[%s1091 + $0xa8] sm:$0xff]
  %v1114 = vld [vmem:[%s1091 + $0xb0] sm:$0xff]
  %v1115 = vld [vmem:[%s1091 + $0xb8] sm:$0xff]
  %v1116 = vld [vmem:[%s1091 + $0xc0] sm:$0xff]
  %v1117 = vld [vmem:[%s1091 + $0xc8] sm:$0xff]
  %v1118 = vld [vmem:[%s1091 + $0xd0] sm:$0xff]
  %v1119 = vld [vmem:[%s1091 + $0xd8] sm:$0xff]
  %v1120 = vld [vmem:[%s1091 + $0xe0] sm:$0xff]
  %v1121 = vld [vmem:[%s1091 + $0xe8] sm:$0xff]
  %v1122 = vld [vmem:[%s1091 + $0xf0] sm:$0xff]
  %v1123 = vld [vmem:[%s1091 + $0xf8] sm:$0xff]
  %v1124 = vld [vmem:[%s1091 + $0x100] sm:$0xff]
  %v1125 = vld [vmem:[%s1091 + $0x108] sm:$0xff]
  %v1126 = vld [vmem:[%s1091 + $0x110] sm:$0xff]
  %v1127 = vld [vmem:[%s1091 + $0x118] sm:$0xff]
  %v1128 = vld [vmem:[%s1091 + $0x120] sm:$0xff]
  %v1129 = vld [vmem:[%s1091 + $0x128] sm:$0xff]
  %v1130 = vld [vmem:[%s1091 + $0x130] sm:$0xff]
  %v1131 = vld [vmem:[%s1091 + $0x138] sm:$0xff]
  %v1132 = vld [vmem:[%s1091 + $0x140] sm:$0xff]
  %v1133 = vld [vmem:[%s1091 + $0x148] sm:$0xff]
  %v1134 = vld [vmem:[%s1091 + $0x150] sm:$0xff]
  %v1135 = vld [vmem:[%s1091 + $0x158] sm:$0xff]
  %v1136 = vld [vmem:[%s1091 + $0x160] sm:$0xff]
  %v1137 = vld [vmem:[%s1091 + $0x168] sm:$0xff]
  %v1138 = vld [vmem:[%s1091 + $0x170] sm:$0xff]
  %v1139 = vld [vmem:[%s1091 + $0x178] sm:$0xff]
  %v1140 = vld [vmem:[%s1091 + $0x180] sm:$0xff]
  %v1142 = vsel %vm73, %v1092, 0
  %v1145 = vsel %vm73, %v1093, 0
  %v1148 = vsel %vm73, %v1094, 0
  %v1151 = vsel %vm73, %v1095, 0
  %v1154 = vsel %vm73, %v1096, 0
  %v1157 = vsel %vm73, %v1097, 0
  %v1160 = vsel %vm73, %v1098, 0
  %v1163 = vsel %vm73, %v1099, 0
  %v1166 = vsel %vm73, %v1100, 0
  %v1169 = vsel %vm73, %v1101, 0
  %v1172 = vsel %vm73, %v1102, 0
  %v1175 = vsel %vm73, %v1103, 0
  %v1178 = vsel %vm73, %v1104, 0
  %v1181 = vsel %vm73, %v1105, 0
  %v1184 = vsel %vm73, %v1106, 0
  %v1187 = vsel %vm73, %v1107, 0
  %v1190 = vsel %vm73, %v1108, 0
  %v1193 = vsel %vm73, %v1109, 0
  %v1196 = vsel %vm73, %v1110, 0
  %v1199 = vsel %vm73, %v1111, 0
  %v1202 = vsel %vm73, %v1112, 0
  %v1205 = vsel %vm73, %v1113, 0
  %v1208 = vsel %vm73, %v1114, 0
  %v1211 = vsel %vm73, %v1115, 0
  %v1214 = vsel %vm73, %v1116, 0
  %v1217 = vsel %vm73, %v1117, 0
  %v1220 = vsel %vm73, %v1118, 0
  %v1223 = vsel %vm73, %v1119, 0
  %v1226 = vsel %vm73, %v1120, 0
  %v1229 = vsel %vm73, %v1121, 0
  %v1232 = vsel %vm73, %v1122, 0
  %v1235 = vsel %vm73, %v1123, 0
  %v1238 = vsel %vm73, %v1124, 0
  %v1241 = vsel %vm73, %v1125, 0
  %v1244 = vsel %vm73, %v1126, 0
  %v1247 = vsel %vm73, %v1127, 0
  %v1250 = vsel %vm73, %v1128, 0
  %v1253 = vsel %vm73, %v1129, 0
  %v1256 = vsel %vm73, %v1130, 0
  %v1259 = vsel %vm73, %v1131, 0
  %v1262 = vsel %vm73, %v1132, 0
  %v1265 = vsel %vm73, %v1133, 0
  %v1268 = vsel %vm73, %v1134, 0
  %v1271 = vsel %vm73, %v1135, 0
  %v1274 = vsel %vm73, %v1136, 0
  %v1277 = vsel %vm73, %v1137, 0
  %v1280 = vsel %vm73, %v1138, 0
  %v1283 = vsel %vm73, %v1139, 0
  %v1286 = vsel %vm73, %v1140, 0
  %1288 = vmatprep.subr.mxu0 0.0
  %1289 = vmatpush1.msra.mxu0 %v14
  %1290 = vmatprep.subr.mxu0 0.0
  %1291 = vmatpush1.msra.mxu0 %v15
  %1292 = vmatprep.subr.mxu0 0.0
  %1293 = vmatpush1.msra.mxu0 %v16
  %1294 = vmatprep.subr.mxu0 0.0
  %1295 = vmatpush1.msra.mxu0 %v17
  %1296 = vmatprep.subr.mxu0 0.0
  %1297 = vmatpush1.msra.mxu0 %v18
  %1298 = vmatprep.subr.mxu0 0.0
  %1299 = vmatpush1.msra.mxu0 %v19
  %1300 = vmatprep.subr.mxu0 0.0
  %1301 = vmatpush1.msra.mxu0 %v20
  %1302 = vmatprep.subr.mxu0 0.0
  %1303 = vmatpush1.msra.mxu0 %v21
  %1304 = vmatprep.subr.mxu0 0.0
  %1305 = vmatpush1.msra.mxu0 %v22
  %1306 = vmatprep.subr.mxu0 0.0
  %1307 = vmatpush1.msra.mxu0 %v223
  %1308 = vmatprep.subr.mxu0 0.0
  %1309 = vmatpush1.msra.mxu0 0.0
  %1310 = vmatprep.subr.mxu0 0.0
  %1311 = vmatpush1.msra.mxu0 0.0
  %1312 = vmatprep.subr.mxu0 0.0
  %1313 = vmatpush1.msra.mxu0 0.0
  %1314 = vmatprep.subr.mxu0 0.0
  %1315 = vmatpush1.msra.mxu0 0.0
  %1316 = vmatprep.subr.mxu0 0.0
  %1317 = vmatpush1.msra.mxu0 0.0
  %1318 = vmatprep.subr.mxu0 0.0
  %1319 = vmatpush1.msra.mxu0 0.0
  %1320 = vmatprep.subr.mxu0 0.0
  %1321 = vmatpush1.msra.mxu0 0.0
  %1322 = vmatprep.subr.mxu0 0.0
  %1323 = vmatpush1.msra.mxu0 0.0
  %1324 = vmatprep.subr.mxu0 0.0
  %1325 = vmatpush1.msra.mxu0 0.0
  %1326 = vmatprep.subr.mxu0 0.0
  %1327 = vmatpush1.msra.mxu0 0.0
  %1328 = vmatprep.subr.mxu0 0.0
  %1329 = vmatpush1.msra.mxu0 0.0
  %1330 = vmatprep.subr.mxu0 0.0
  %1331 = vmatpush1.msra.mxu0 0.0
  %1332 = vmatprep.subr.mxu0 0.0
  %1333 = vmatpush1.msra.mxu0 0.0
  %1334 = vmatprep.subr.mxu0 0.0
  %1335 = vmatpush1.msra.mxu0 0.0
  %1336 = vmatprep.subr.mxu0 0.0
  %1337 = vmatpush1.msra.mxu0 0.0
  %1338 = vmatprep.subr.mxu0 0.0
  %1339 = vmatpush1.msra.mxu0 0.0
  %1340 = vmatprep.subr.mxu0 0.0
  %1341 = vmatpush1.msra.mxu0 0.0
  %1342 = vmatprep.subr.mxu0 0.0
  %1343 = vmatpush1.msra.mxu0 0.0
  %1344 = vmatprep.subr.mxu0 0.0
  %1345 = vmatpush1.msra.mxu0 0.0
  %1346 = vmatprep.subr.mxu0 0.0
  %1347 = vmatpush1.msra.mxu0 0.0
  %1348 = vmatprep.subr.mxu0 0.0
  %1349 = vmatpush1.msra.mxu0 0.0
  %1350 = vmatprep.subr.mxu0 0.0
  %1351 = vmatpush1.msra.mxu0 0.0
  %1352 = vmatprep.mubr.f32.mxu0 0.0
  %1353 = vmatmul.mubr.f32.gmra.mrb[0].mxu0 %v1142
  %v1354 = vpop.f32.mrb[0].mxu0
  %v1355 = vadd.f32 0.0, %v1354
  %v1356 = vpop.f32.mrb[0].mxu0
  %1357 = vmatprep.mubr.f32.mxu0 0.0
  %1358 = vmatmul.mubr.f32.gmra.mrb[0].mxu0 %v1145
  %v1359 = vpop.f32.mrb[0].mxu0
  %v1360 = vadd.f32 0.0, %v1359
  %v1361 = vpop.f32.mrb[0].mxu0
  %1362 = vmatprep.mubr.f32.mxu0 0.0
  %1363 = vmatmul.mubr.f32.gmra.mrb[0].mxu0 %v1148
  %v1364 = vpop.f32.mrb[0].mxu0
  %v1365 = vadd.f32 0.0, %v1364
  %v1366 = vpop.f32.mrb[0].mxu0
  %1367 = vmatprep.mubr.f32.mxu0 0.0
  %1368 = vmatmul.mubr.f32.gmra.mrb[0].mxu0 %v1151
  %v1369 = vpop.f32.mrb[0].mxu0
  %v1370 = vadd.f32 0.0, %v1369
  %v1371 = vpop.f32.mrb[0].mxu0
  %1372 = vmatprep.mubr.f32.mxu0 0.0
  %1373 = vmatmul.mubr.f32.gmra.mrb[0].mxu0 %v1154
  %v1374 = vpop.f32.mrb[0].mxu0
  %v1375 = vadd.f32 0.0, %v1374
  %v1376 = vpop.f32.mrb[0].mxu0
  %1377 = vmatprep.mubr.f32.mxu0 0.0
  %1378 = vmatmul.mubr.f32.gmra.mrb[0].mxu0 %v1157
  %v1379 = vpop.f32.mrb[0].mxu0
  %v1380 = vadd.f32 0.0, %v1379
  %v1381 = vpop.f32.mrb[0].mxu0
  %1382 = vmatprep.mubr.f32.mxu0 0.0
  %1383 = vmatmul.mubr.f32.gmra.mrb[0].mxu0 %v1160
  %v1384 = vpop.f32.mrb[0].mxu0
  %v1385 = vadd.f32 0.0, %v1384
  %v1386 = vpop.f32.mrb[0].mxu0
  %1387 = vmatprep.mubr.f32.mxu0 0.0
  %1388 = vmatmul.mubr.f32.gmra.mrb[0].mxu0 %v1163
  %v1389 = vpop.f32.mrb[0].mxu0
  %v1390 = vadd.f32 0.0, %v1389
  %v1391 = vpop.f32.mrb[0].mxu0
  %1392 = vmatprep.mubr.f32.mxu0 0.0
  %1393 = vmatmul.mubr.f32.gmra.mrb[0].mxu0 %v1166
  %v1394 = vpop.f32.mrb[0].mxu0
  %v1395 = vadd.f32 0.0, %v1394
  %v1396 = vpop.f32.mrb[0].mxu0
  %1397 = vmatprep.mubr.f32.mxu0 0.0
  %1398 = vmatmul.mubr.f32.gmra.mrb[0].mxu0 %v1169
  %v1399 = vpop.f32.mrb[0].mxu0
  %v1400 = vadd.f32 0.0, %v1399
  %v1401 = vpop.f32.mrb[0].mxu0
  %1402 = vmatprep.mubr.f32.mxu0 0.0
  %1403 = vmatmul.mubr.f32.gmra.mrb[0].mxu0 %v1172
  %v1404 = vpop.f32.mrb[0].mxu0
  %v1405 = vadd.f32 0.0, %v1404
  %v1406 = vpop.f32.mrb[0].mxu0
  %1407 = vmatprep.mubr.f32.mxu0 0.0
  %1408 = vmatmul.mubr.f32.gmra.mrb[0].mxu0 %v1175
  %v1409 = vpop.f32.mrb[0].mxu0
  %v1410 = vadd.f32 0.0, %v1409
  %v1411 = vpop.f32.mrb[0].mxu0
  %1412 = vmatprep.mubr.f32.mxu0 0.0
  %1413 = vmatmul.mubr.f32.gmra.mrb[0].mxu0 %v1178
  %v1414 = vpop.f32.mrb[0].mxu0
  %v1415 = vadd.f32 0.0, %v1414
  %v1416 = vpop.f32.mrb[0].mxu0
  %1417 = vmatprep.mubr.f32.mxu0 0.0
  %1418 = vmatmul.mubr.f32.gmra.mrb[0].mxu0 %v1181
  %v1419 = vpop.f32.mrb[0].mxu0
  %v1420 = vadd.f32 0.0, %v1419
  %v1421 = vpop.f32.mrb[0].mxu0
  %1422 = vmatprep.mubr.f32.mxu0 0.0
  %1423 = vmatmul.mubr.f32.gmra.mrb[0].mxu0 %v1184
  %v1424 = vpop.f32.mrb[0].mxu0
  %v1425 = vadd.f32 0.0, %v1424
  %v1426 = vpop.f32.mrb[0].mxu0
  %1427 = vmatprep.mubr.f32.mxu0 0.0
  %1428 = vmatmul.mubr.f32.gmra.mrb[0].mxu0 %v1187
  %v1429 = vpop.f32.mrb[0].mxu0
  %v1430 = vadd.f32 0.0, %v1429
  %v1431 = vpop.f32.mrb[0].mxu0
  %1432 = vmatprep.mubr.f32.mxu0 0.0
  %1433 = vmatmul.mubr.f32.gmra.mrb[0].mxu0 %v1190
  %v1434 = vpop.f32.mrb[0].mxu0
  %v1435 = vadd.f32 0.0, %v1434
  %v1436 = vpop.f32.mrb[0].mxu0
  %1437 = vmatprep.mubr.f32.mxu0 0.0
  %1438 = vmatmul.mubr.f32.gmra.mrb[0].mxu0 %v1193
  %v1439 = vpop.f32.mrb[0].mxu0
  %v1440 = vadd.f32 0.0, %v1439
  %v1441 = vpop.f32.mrb[0].mxu0
  %1442 = vmatprep.mubr.f32.mxu0 0.0
  %1443 = vmatmul.mubr.f32.gmra.mrb[0].mxu0 %v1196
  %v1444 = vpop.f32.mrb[0].mxu0
  %v1445 = vadd.f32 0.0, %v1444
  %v1446 = vpop.f32.mrb[0].mxu0
  %1447 = vmatprep.mubr.f32.mxu0 0.0
  %1448 = vmatmul.mubr.f32.gmra.mrb[0].mxu0 %v1199
  %v1449 = vpop.f32.mrb[0].mxu0
  %v1450 = vadd.f32 0.0, %v1449
  %v1451 = vpop.f32.mrb[0].mxu0
  %1452 = vmatprep.mubr.f32.mxu0 0.0
  %1453 = vmatmul.mubr.f32.gmra.mrb[0].mxu0 %v1202
  %v1454 = vpop.f32.mrb[0].mxu0
  %v1455 = vadd.f32 0.0, %v1454
  %v1456 = vpop.f32.mrb[0].mxu0
  %1457 = vmatprep.mubr.f32.mxu0 0.0
  %1458 = vmatmul.mubr.f32.gmra.mrb[0].mxu0 %v1205
  %v1459 = vpop.f32.mrb[0].mxu0
  %v1460 = vadd.f32 0.0, %v1459
  %v1461 = vpop.f32.mrb[0].mxu0
  %1462 = vmatprep.mubr.f32.mxu0 0.0
  %1463 = vmatmul.mubr.f32.gmra.mrb[0].mxu0 %v1208
  %v1464 = vpop.f32.mrb[0].mxu0
  %v1465 = vadd.f32 0.0, %v1464
  %v1466 = vpop.f32.mrb[0].mxu0
  %1467 = vmatprep.mubr.f32.mxu0 0.0
  %1468 = vmatmul.mubr.f32.gmra.mrb[0].mxu0 %v1211
  %v1469 = vpop.f32.mrb[0].mxu0
  %v1470 = vadd.f32 0.0, %v1469
  %v1471 = vpop.f32.mrb[0].mxu0
  %1472 = vmatprep.mubr.f32.mxu0 0.0
  %1473 = vmatmul.mubr.f32.gmra.mrb[0].mxu0 %v1214
  %v1474 = vpop.f32.mrb[0].mxu0
  %v1475 = vadd.f32 0.0, %v1474
  %v1476 = vpop.f32.mrb[0].mxu0
  %1477 = vmatprep.mubr.f32.mxu0 0.0
  %1478 = vmatmul.mubr.f32.gmra.mrb[0].mxu0 %v1217
  %v1479 = vpop.f32.mrb[0].mxu0
  %v1480 = vadd.f32 0.0, %v1479
  %v1481 = vpop.f32.mrb[0].mxu0
  %1482 = vmatprep.mubr.f32.mxu0 0.0
  %1483 = vmatmul.mubr.f32.gmra.mrb[0].mxu0 %v1220
  %v1484 = vpop.f32.mrb[0].mxu0
  %v1485 = vadd.f32 0.0, %v1484
  %v1486 = vpop.f32.mrb[0].mxu0
  %1487 = vmatprep.mubr.f32.mxu0 0.0
  %1488 = vmatmul.mubr.f32.gmra.mrb[0].mxu0 %v1223
  %v1489 = vpop.f32.mrb[0].mxu0
  %v1490 = vadd.f32 0.0, %v1489
  %v1491 = vpop.f32.mrb[0].mxu0
  %1492 = vmatprep.mubr.f32.mxu0 0.0
  %1493 = vmatmul.mubr.f32.gmra.mrb[0].mxu0 %v1226
  %v1494 = vpop.f32.mrb[0].mxu0
  %v1495 = vadd.f32 0.0, %v1494
  %v1496 = vpop.f32.mrb[0].mxu0
  %1497 = vmatprep.mubr.f32.mxu0 0.0
  %1498 = vmatmul.mubr.f32.gmra.mrb[0].mxu0 %v1229
  %v1499 = vpop.f32.mrb[0].mxu0
  %v1500 = vadd.f32 0.0, %v1499
  %v1501 = vpop.f32.mrb[0].mxu0
  %1502 = vmatprep.mubr.f32.mxu0 0.0
  %1503 = vmatmul.mubr.f32.gmra.mrb[0].mxu0 %v1232
  %v1504 = vpop.f32.mrb[0].mxu0
  %v1505 = vadd.f32 0.0, %v1504
  %v1506 = vpop.f32.mrb[0].mxu0
  %1507 = vmatprep.mubr.f32.mxu0 0.0
  %1508 = vmatmul.mubr.f32.gmra.mrb[0].mxu0 %v1235
  %v1509 = vpop.f32.mrb[0].mxu0
  %v1510 = vadd.f32 0.0, %v1509
  %v1511 = vpop.f32.mrb[0].mxu0
  %1512 = vmatprep.mubr.f32.mxu0 0.0
  %1513 = vmatmul.mubr.f32.gmra.mrb[0].mxu0 %v1238
  %v1514 = vpop.f32.mrb[0].mxu0
  %v1515 = vadd.f32 0.0, %v1514
  %v1516 = vpop.f32.mrb[0].mxu0
  %1517 = vmatprep.mubr.f32.mxu0 0.0
  %1518 = vmatmul.mubr.f32.gmra.mrb[0].mxu0 %v1241
  %v1519 = vpop.f32.mrb[0].mxu0
  %v1520 = vadd.f32 0.0, %v1519
  %v1521 = vpop.f32.mrb[0].mxu0
  %1522 = vmatprep.mubr.f32.mxu0 0.0
  %1523 = vmatmul.mubr.f32.gmra.mrb[0].mxu0 %v1244
  %v1524 = vpop.f32.mrb[0].mxu0
  %v1525 = vadd.f32 0.0, %v1524
  %v1526 = vpop.f32.mrb[0].mxu0
  %1527 = vmatprep.mubr.f32.mxu0 0.0
  %1528 = vmatmul.mubr.f32.gmra.mrb[0].mxu0 %v1247
  %v1529 = vpop.f32.mrb[0].mxu0
  %v1530 = vadd.f32 0.0, %v1529
  %v1531 = vpop.f32.mrb[0].mxu0
  %1532 = vmatprep.mubr.f32.mxu0 0.0
  %1533 = vmatmul.mubr.f32.gmra.mrb[0].mxu0 %v1250
  %v1534 = vpop.f32.mrb[0].mxu0
  %v1535 = vadd.f32 0.0, %v1534
  %v1536 = vpop.f32.mrb[0].mxu0
  %1537 = vmatprep.mubr.f32.mxu0 0.0
  %1538 = vmatmul.mubr.f32.gmra.mrb[0].mxu0 %v1253
  %v1539 = vpop.f32.mrb[0].mxu0
  %v1540 = vadd.f32 0.0, %v1539
  %v1541 = vpop.f32.mrb[0].mxu0
  %1542 = vmatprep.mubr.f32.mxu0 0.0
  %1543 = vmatmul.mubr.f32.gmra.mrb[0].mxu0 %v1256
  %v1544 = vpop.f32.mrb[0].mxu0
  %v1545 = vadd.f32 0.0, %v1544
  %v1546 = vpop.f32.mrb[0].mxu0
  %1547 = vmatprep.mubr.f32.mxu0 0.0
  %1548 = vmatmul.mubr.f32.gmra.mrb[0].mxu0 %v1259
  %v1549 = vpop.f32.mrb[0].mxu0
  %v1550 = vadd.f32 0.0, %v1549
  %v1551 = vpop.f32.mrb[0].mxu0
  %1552 = vmatprep.mubr.f32.mxu0 0.0
  %1553 = vmatmul.mubr.f32.gmra.mrb[0].mxu0 %v1262
  %v1554 = vpop.f32.mrb[0].mxu0
  %v1555 = vadd.f32 0.0, %v1554
  %v1556 = vpop.f32.mrb[0].mxu0
  %1557 = vmatprep.mubr.f32.mxu0 0.0
  %1558 = vmatmul.mubr.f32.gmra.mrb[0].mxu0 %v1265
  %v1559 = vpop.f32.mrb[0].mxu0
  %v1560 = vadd.f32 0.0, %v1559
  %v1561 = vpop.f32.mrb[0].mxu0
  %1562 = vmatprep.mubr.f32.mxu0 0.0
  %1563 = vmatmul.mubr.f32.gmra.mrb[0].mxu0 %v1268
  %v1564 = vpop.f32.mrb[0].mxu0
  %v1565 = vadd.f32 0.0, %v1564
  %v1566 = vpop.f32.mrb[0].mxu0
  %1567 = vmatprep.mubr.f32.mxu0 0.0
  %1568 = vmatmul.mubr.f32.gmra.mrb[0].mxu0 %v1271
  %v1569 = vpop.f32.mrb[0].mxu0
  %v1570 = vadd.f32 0.0, %v1569
  %v1571 = vpop.f32.mrb[0].mxu0
  %1572 = vmatprep.mubr.f32.mxu0 0.0
  %1573 = vmatmul.mubr.f32.gmra.mrb[0].mxu0 %v1274
  %v1574 = vpop.f32.mrb[0].mxu0
  %v1575 = vadd.f32 0.0, %v1574
  %v1576 = vpop.f32.mrb[0].mxu0
  %1577 = vmatprep.mubr.f32.mxu0 0.0
  %1578 = vmatmul.mubr.f32.gmra.mrb[0].mxu0 %v1277
  %v1579 = vpop.f32.mrb[0].mxu0
  %v1580 = vadd.f32 0.0, %v1579
  %v1581 = vpop.f32.mrb[0].mxu0
  %1582 = vmatprep.mubr.f32.mxu0 0.0
  %1583 = vmatmul.mubr.f32.gmra.mrb[0].mxu0 %v1280
  %v1584 = vpop.f32.mrb[0].mxu0
  %v1585 = vadd.f32 0.0, %v1584
  %v1586 = vpop.f32.mrb[0].mxu0
  %1587 = vmatprep.mubr.f32.mxu0 0.0
  %1588 = vmatmul.mubr.f32.gmra.mrb[0].mxu0 %v1283
  %v1589 = vpop.f32.mrb[0].mxu0
  %v1590 = vadd.f32 0.0, %v1589
  %v1591 = vpop.f32.mrb[0].mxu0
  %1592 = vmatprep.mubr.f32.mxu0 0.0
  %1593 = vmatmul.mubr.f32.gmra.mrb[0].mxu0 %v1286
  %v1594 = vpop.f32.mrb[0].mxu0
  %v1595 = vadd.f32 0.0, %v1594
  %v1596 = vpop.f32.mrb[0].mxu0
  %1597 = vdwg.mxu0
  %v1598 = vmax.f32 %v1042, %v1355
  %v1599 = vmax.f32 %v1043, %v1360
  %v1600 = vmax.f32 %v1044, %v1365
  %v1601 = vmax.f32 %v1045, %v1370
  %v1602 = vmax.f32 %v1046, %v1375
  %v1603 = vmax.f32 %v1047, %v1380
  %v1604 = vmax.f32 %v1048, %v1385
  %v1605 = vmax.f32 %v1049, %v1390
  %v1606 = vmax.f32 %v1050, %v1395
  %v1607 = vmax.f32 %v1051, %v1400
  %v1608 = vmax.f32 %v1052, %v1405
  %v1609 = vmax.f32 %v1053, %v1410
  %v1610 = vmax.f32 %v1054, %v1415
  %v1611 = vmax.f32 %v1055, %v1420
  %v1612 = vmax.f32 %v1056, %v1425
  %v1613 = vmax.f32 %v1057, %v1430
  %v1614 = vmax.f32 %v1058, %v1435
  %v1615 = vmax.f32 %v1059, %v1440
  %v1616 = vmax.f32 %v1060, %v1445
  %v1617 = vmax.f32 %v1061, %v1450
  %v1618 = vmax.f32 %v1062, %v1455
  %v1619 = vmax.f32 %v1063, %v1460
  %v1620 = vmax.f32 %v1064, %v1465
  %v1621 = vmax.f32 %v1065, %v1470
  %v1622 = vmax.f32 %v1066, %v1475
  %v1623 = vmax.f32 %v1067, %v1480
  %v1624 = vmax.f32 %v1068, %v1485
  %v1625 = vmax.f32 %v1069, %v1490
  %v1626 = vmax.f32 %v1070, %v1495
  %v1627 = vmax.f32 %v1071, %v1500
  %v1628 = vmax.f32 %v1072, %v1505
  %v1629 = vmax.f32 %v1073, %v1510
  %v1630 = vmax.f32 %v1074, %v1515
  %v1631 = vmax.f32 %v1075, %v1520
  %v1632 = vmax.f32 %v1076, %v1525
  %v1633 = vmax.f32 %v1077, %v1530
  %v1634 = vmax.f32 %v1078, %v1535
  %v1635 = vmax.f32 %v1079, %v1540
  %v1636 = vmax.f32 %v1080, %v1545
  %v1637 = vmax.f32 %v1081, %v1550
  %v1638 = vmax.f32 %v1082, %v1555
  %v1639 = vmax.f32 %v1083, %v1560
  %v1640 = vmax.f32 %v1084, %v1565
  %v1641 = vmax.f32 %v1085, %v1570
  %v1642 = vmax.f32 %v1086, %v1575
  %v1643 = vmax.f32 %v1087, %v1580
  %v1644 = vmax.f32 %v1088, %v1585
  %v1645 = vmax.f32 %v1089, %v1590
  %v1646 = vmax.f32 %v1090, %v1595
  %s1647 = scalar_lea.vmem %s0, 1176
  %v1648 = vld [vmem:[%s1647] sm:$0xff]
  %v1649 = vld [vmem:[%s1647 + $0x8] sm:$0xff]
  %v1650 = vld [vmem:[%s1647 + $0x10] sm:$0xff]
  %v1651 = vld [vmem:[%s1647 + $0x18] sm:$0xff]
  %v1652 = vld [vmem:[%s1647 + $0x20] sm:$0xff]
  %v1653 = vld [vmem:[%s1647 + $0x28] sm:$0xff]
  %v1654 = vld [vmem:[%s1647 + $0x30] sm:$0xff]
  %v1655 = vld [vmem:[%s1647 + $0x38] sm:$0xff]
  %v1656 = vld [vmem:[%s1647 + $0x40] sm:$0xff]
  %v1657 = vld [vmem:[%s1647 + $0x48] sm:$0xff]
  %v1658 = vld [vmem:[%s1647 + $0x50] sm:$0xff]
  %v1659 = vld [vmem:[%s1647 + $0x58] sm:$0xff]
  %v1660 = vld [vmem:[%s1647 + $0x60] sm:$0xff]
  %v1661 = vld [vmem:[%s1647 + $0x68] sm:$0xff]
  %v1662 = vld [vmem:[%s1647 + $0x70] sm:$0xff]
  %v1663 = vld [vmem:[%s1647 + $0x78] sm:$0xff]
  %v1664 = vld [vmem:[%s1647 + $0x80] sm:$0xff]
  %v1665 = vld [vmem:[%s1647 + $0x88] sm:$0xff]
  %v1666 = vld [vmem:[%s1647 + $0x90] sm:$0xff]
  %v1667 = vld [vmem:[%s1647 + $0x98] sm:$0xff]
  %v1668 = vld [vmem:[%s1647 + $0xa0] sm:$0xff]
  %v1669 = vld [vmem:[%s1647 + $0xa8] sm:$0xff]
  %v1670 = vld [vmem:[%s1647 + $0xb0] sm:$0xff]
  %v1671 = vld [vmem:[%s1647 + $0xb8] sm:$0xff]
  %v1672 = vld [vmem:[%s1647 + $0xc0] sm:$0xff]
  %v1673 = vld [vmem:[%s1647 + $0xc8] sm:$0xff]
  %v1674 = vld [vmem:[%s1647 + $0xd0] sm:$0xff]
  %v1675 = vld [vmem:[%s1647 + $0xd8] sm:$0xff]
  %v1676 = vld [vmem:[%s1647 + $0xe0] sm:$0xff]
  %v1677 = vld [vmem:[%s1647 + $0xe8] sm:$0xff]
  %v1678 = vld [vmem:[%s1647 + $0xf0] sm:$0xff]
  %v1679 = vld [vmem:[%s1647 + $0xf8] sm:$0xff]
  %v1680 = vld [vmem:[%s1647 + $0x100] sm:$0xff]
  %v1681 = vld [vmem:[%s1647 + $0x108] sm:$0xff]
  %v1682 = vld [vmem:[%s1647 + $0x110] sm:$0xff]
  %v1683 = vld [vmem:[%s1647 + $0x118] sm:$0xff]
  %v1684 = vld [vmem:[%s1647 + $0x120] sm:$0xff]
  %v1685 = vld [vmem:[%s1647 + $0x128] sm:$0xff]
  %v1686 = vld [vmem:[%s1647 + $0x130] sm:$0xff]
  %v1687 = vld [vmem:[%s1647 + $0x138] sm:$0xff]
  %v1688 = vld [vmem:[%s1647 + $0x140] sm:$0xff]
  %v1689 = vld [vmem:[%s1647 + $0x148] sm:$0xff]
  %v1690 = vld [vmem:[%s1647 + $0x150] sm:$0xff]
  %v1691 = vld [vmem:[%s1647 + $0x158] sm:$0xff]
  %v1692 = vld [vmem:[%s1647 + $0x160] sm:$0xff]
  %v1693 = vld [vmem:[%s1647 + $0x168] sm:$0xff]
  %v1694 = vld [vmem:[%s1647 + $0x170] sm:$0xff]
  %v1695 = vld [vmem:[%s1647 + $0x178] sm:$0xff]
  %v1696 = vld [vmem:[%s1647 + $0x180] sm:$0xff]
  %v1698 = vsel %vm73, %v1648, 0
  %v1701 = vsel %vm73, %v1649, 0
  %v1704 = vsel %vm73, %v1650, 0
  %v1707 = vsel %vm73, %v1651, 0
  %v1710 = vsel %vm73, %v1652, 0
  %v1713 = vsel %vm73, %v1653, 0
  %v1716 = vsel %vm73, %v1654, 0
  %v1719 = vsel %vm73, %v1655, 0
  %v1722 = vsel %vm73, %v1656, 0
  %v1725 = vsel %vm73, %v1657, 0
  %v1728 = vsel %vm73, %v1658, 0
  %v1731 = vsel %vm73, %v1659, 0
  %v1734 = vsel %vm73, %v1660, 0
  %v1737 = vsel %vm73, %v1661, 0
  %v1740 = vsel %vm73, %v1662, 0
  %v1743 = vsel %vm73, %v1663, 0
  %v1746 = vsel %vm73, %v1664, 0
  %v1749 = vsel %vm73, %v1665, 0
  %v1752 = vsel %vm73, %v1666, 0
  %v1755 = vsel %vm73, %v1667, 0
  %v1758 = vsel %vm73, %v1668, 0
  %v1761 = vsel %vm73, %v1669, 0
  %v1764 = vsel %vm73, %v1670, 0
  %v1767 = vsel %vm73, %v1671, 0
  %v1770 = vsel %vm73, %v1672, 0
  %v1773 = vsel %vm73, %v1673, 0
  %v1776 = vsel %vm73, %v1674, 0
  %v1779 = vsel %vm73, %v1675, 0
  %v1782 = vsel %vm73, %v1676, 0
  %v1785 = vsel %vm73, %v1677, 0
  %v1788 = vsel %vm73, %v1678, 0
  %v1791 = vsel %vm73, %v1679, 0
  %v1794 = vsel %vm73, %v1680, 0
  %v1797 = vsel %vm73, %v1681, 0
  %v1800 = vsel %vm73, %v1682, 0
  %v1803 = vsel %vm73, %v1683, 0
  %v1806 = vsel %vm73, %v1684, 0
  %v1809 = vsel %vm73, %v1685, 0
  %v1812 = vsel %vm73, %v1686, 0
  %v1815 = vsel %vm73, %v1687, 0
  %v1818 = vsel %vm73, %v1688, 0
  %v1821 = vsel %vm73, %v1689, 0
  %v1824 = vsel %vm73, %v1690, 0
  %v1827 = vsel %vm73, %v1691, 0
  %v1830 = vsel %vm73, %v1692, 0
  %v1833 = vsel %vm73, %v1693, 0
  %v1836 = vsel %vm73, %v1694, 0
  %v1839 = vsel %vm73, %v1695, 0
  %v1842 = vsel %vm73, %v1696, 0
  %1844 = vmatprep.subr.mxu0 0.0
  %1845 = vmatpush1.msra.mxu0 %v14
  %1846 = vmatprep.subr.mxu0 0.0
  %1847 = vmatpush1.msra.mxu0 %v15
  %1848 = vmatprep.subr.mxu0 0.0
  %1849 = vmatpush1.msra.mxu0 %v16
  %1850 = vmatprep.subr.mxu0 0.0
  %1851 = vmatpush1.msra.mxu0 %v17
  %1852 = vmatprep.subr.mxu0 0.0
  %1853 = vmatpush1.msra.mxu0 %v18
  %1854 = vmatprep.subr.mxu0 0.0
  %1855 = vmatpush1.msra.mxu0 %v19
  %1856 = vmatprep.subr.mxu0 0.0
  %1857 = vmatpush1.msra.mxu0 %v20
  %1858 = vmatprep.subr.mxu0 0.0
  %1859 = vmatpush1.msra.mxu0 %v21
  %1860 = vmatprep.subr.mxu0 0.0
  %1861 = vmatpush1.msra.mxu0 %v22
  %1862 = vmatprep.subr.mxu0 0.0
  %1863 = vmatpush1.msra.mxu0 %v223
  %1864 = vmatprep.subr.mxu0 0.0
  %1865 = vmatpush1.msra.mxu0 0.0
  %1866 = vmatprep.subr.mxu0 0.0
  %1867 = vmatpush1.msra.mxu0 0.0
  %1868 = vmatprep.subr.mxu0 0.0
  %1869 = vmatpush1.msra.mxu0 0.0
  %1870 = vmatprep.subr.mxu0 0.0
  %1871 = vmatpush1.msra.mxu0 0.0
  %1872 = vmatprep.subr.mxu0 0.0
  %1873 = vmatpush1.msra.mxu0 0.0
  %1874 = vmatprep.subr.mxu0 0.0
  %1875 = vmatpush1.msra.mxu0 0.0
  %1876 = vmatprep.subr.mxu0 0.0
  %1877 = vmatpush1.msra.mxu0 0.0
  %1878 = vmatprep.subr.mxu0 0.0
  %1879 = vmatpush1.msra.mxu0 0.0
  %1880 = vmatprep.subr.mxu0 0.0
  %1881 = vmatpush1.msra.mxu0 0.0
  %1882 = vmatprep.subr.mxu0 0.0
  %1883 = vmatpush1.msra.mxu0 0.0
  %1884 = vmatprep.subr.mxu0 0.0
  %1885 = vmatpush1.msra.mxu0 0.0
  %1886 = vmatprep.subr.mxu0 0.0
  %1887 = vmatpush1.msra.mxu0 0.0
  %1888 = vmatprep.subr.mxu0 0.0
  %1889 = vmatpush1.msra.mxu0 0.0
  %1890 = vmatprep.subr.mxu0 0.0
  %1891 = vmatpush1.msra.mxu0 0.0
  %1892 = vmatprep.subr.mxu0 0.0
  %1893 = vmatpush1.msra.mxu0 0.0
  %1894 = vmatprep.subr.mxu0 0.0
  %1895 = vmatpush1.msra.mxu0 0.0
  %1896 = vmatprep.subr.mxu0 0.0
  %1897 = vmatpush1.msra.mxu0 0.0
  %1898 = vmatprep.subr.mxu0 0.0
  %1899 = vmatpush1.msra.mxu0 0.0
  %1900 = vmatprep.subr.mxu0 0.0
  %1901 = vmatpush1.msra.mxu0 0.0
  %1902 = vmatprep.subr.mxu0 0.0
  %1903 = vmatpush1.msra.mxu0 0.0
  %1904 = vmatprep.subr.mxu0 0.0
  %1905 = vmatpush1.msra.mxu0 0.0
  %1906 = vmatprep.subr.mxu0 0.0
  %1907 = vmatpush1.msra.mxu0 0.0
  %1908 = vmatprep.mubr.f32.mxu0 0.0
  %1909 = vmatmul.mubr.f32.gmra.mrb[0].mxu0 %v1698
  %v1910 = vpop.f32.mrb[0].mxu0
  %v1911 = vadd.f32 0.0, %v1910
  %v1912 = vpop.f32.mrb[0].mxu0
  %1913 = vmatprep.mubr.f32.mxu0 0.0
  %1914 = vmatmul.mubr.f32.gmra.mrb[0].mxu0 %v1701
  %v1915 = vpop.f32.mrb[0].mxu0
  %v1916 = vadd.f32 0.0, %v1915
  %v1917 = vpop.f32.mrb[0].mxu0
  %1918 = vmatprep.mubr.f32.mxu0 0.0
  %1919 = vmatmul.mubr.f32.gmra.mrb[0].mxu0 %v1704
  %v1920 = vpop.f32.mrb[0].mxu0
  %v1921 = vadd.f32 0.0, %v1920
  %v1922 = vpop.f32.mrb[0].mxu0
  %1923 = vmatprep.mubr.f32.mxu0 0.0
  %1924 = vmatmul.mubr.f32.gmra.mrb[0].mxu0 %v1707
  %v1925 = vpop.f32.mrb[0].mxu0
  %v1926 = vadd.f32 0.0, %v1925
  %v1927 = vpop.f32.mrb[0].mxu0
  %1928 = vmatprep.mubr.f32.mxu0 0.0
  %1929 = vmatmul.mubr.f32.gmra.mrb[0].mxu0 %v1710
  %v1930 = vpop.f32.mrb[0].mxu0
  %v1931 = vadd.f32 0.0, %v1930
  %v1932 = vpop.f32.mrb[0].mxu0
  %1933 = vmatprep.mubr.f32.mxu0 0.0
  %1934 = vmatmul.mubr.f32.gmra.mrb[0].mxu0 %v1713
  %v1935 = vpop.f32.mrb[0].mxu0
  %v1936 = vadd.f32 0.0, %v1935
  %v1937 = vpop.f32.mrb[0].mxu0
  %1938 = vmatprep.mubr.f32.mxu0 0.0
  %1939 = vmatmul.mubr.f32.gmra.mrb[0].mxu0 %v1716
  %v1940 = vpop.f32.mrb[0].mxu0
  %v1941 = vadd.f32 0.0, %v1940
  %v1942 = vpop.f32.mrb[0].mxu0
  %1943 = vmatprep.mubr.f32.mxu0 0.0
  %1944 = vmatmul.mubr.f32.gmra.mrb[0].mxu0 %v1719
  %v1945 = vpop.f32.mrb[0].mxu0
  %v1946 = vadd.f32 0.0, %v1945
  %v1947 = vpop.f32.mrb[0].mxu0
  %1948 = vmatprep.mubr.f32.mxu0 0.0
  %1949 = vmatmul.mubr.f32.gmra.mrb[0].mxu0 %v1722
  %v1950 = vpop.f32.mrb[0].mxu0
  %v1951 = vadd.f32 0.0, %v1950
  %v1952 = vpop.f32.mrb[0].mxu0
  %1953 = vmatprep.mubr.f32.mxu0 0.0
  %1954 = vmatmul.mubr.f32.gmra.mrb[0].mxu0 %v1725
  %v1955 = vpop.f32.mrb[0].mxu0
  %v1956 = vadd.f32 0.0, %v1955
  %v1957 = vpop.f32.mrb[0].mxu0
  %1958 = vmatprep.mubr.f32.mxu0 0.0
  %1959 = vmatmul.mubr.f32.gmra.mrb[0].mxu0 %v1728
  %v1960 = vpop.f32.mrb[0].mxu0
  %v1961 = vadd.f32 0.0, %v1960
  %v1962 = vpop.f32.mrb[0].mxu0
  %1963 = vmatprep.mubr.f32.mxu0 0.0
  %1964 = vmatmul.mubr.f32.gmra.mrb[0].mxu0 %v1731
  %v1965 = vpop.f32.mrb[0].mxu0
  %v1966 = vadd.f32 0.0, %v1965
  %v1967 = vpop.f32.mrb[0].mxu0
  %1968 = vmatprep.mubr.f32.mxu0 0.0
  %1969 = vmatmul.mubr.f32.gmra.mrb[0].mxu0 %v1734
  %v1970 = vpop.f32.mrb[0].mxu0
  %v1971 = vadd.f32 0.0, %v1970
  %v1972 = vpop.f32.mrb[0].mxu0
  %1973 = vmatprep.mubr.f32.mxu0 0.0
  %1974 = vmatmul.mubr.f32.gmra.mrb[0].mxu0 %v1737
  %v1975 = vpop.f32.mrb[0].mxu0
  %v1976 = vadd.f32 0.0, %v1975
  %v1977 = vpop.f32.mrb[0].mxu0
  %1978 = vmatprep.mubr.f32.mxu0 0.0
  %1979 = vmatmul.mubr.f32.gmra.mrb[0].mxu0 %v1740
  %v1980 = vpop.f32.mrb[0].mxu0
  %v1981 = vadd.f32 0.0, %v1980
  %v1982 = vpop.f32.mrb[0].mxu0
  %1983 = vmatprep.mubr.f32.mxu0 0.0
  %1984 = vmatmul.mubr.f32.gmra.mrb[0].mxu0 %v1743
  %v1985 = vpop.f32.mrb[0].mxu0
  %v1986 = vadd.f32 0.0, %v1985
  %v1987 = vpop.f32.mrb[0].mxu0
  %1988 = vmatprep.mubr.f32.mxu0 0.0
  %1989 = vmatmul.mubr.f32.gmra.mrb[0].mxu0 %v1746
  %v1990 = vpop.f32.mrb[0].mxu0
  %v1991 = vadd.f32 0.0, %v1990
  %v1992 = vpop.f32.mrb[0].mxu0
  %1993 = vmatprep.mubr.f32.mxu0 0.0
  %1994 = vmatmul.mubr.f32.gmra.mrb[0].mxu0 %v1749
  %v1995 = vpop.f32.mrb[0].mxu0
  %v1996 = vadd.f32 0.0, %v1995
  %v1997 = vpop.f32.mrb[0].mxu0
  %1998 = vmatprep.mubr.f32.mxu0 0.0
  %1999 = vmatmul.mubr.f32.gmra.mrb[0].mxu0 %v1752
  %v2000 = vpop.f32.mrb[0].mxu0
  %v2001 = vadd.f32 0.0, %v2000
  %v2002 = vpop.f32.mrb[0].mxu0
  %2003 = vmatprep.mubr.f32.mxu0 0.0
  %2004 = vmatmul.mubr.f32.gmra.mrb[0].mxu0 %v1755
  %v2005 = vpop.f32.mrb[0].mxu0
  %v2006 = vadd.f32 0.0, %v2005
  %v2007 = vpop.f32.mrb[0].mxu0
  %2008 = vmatprep.mubr.f32.mxu0 0.0
  %2009 = vmatmul.mubr.f32.gmra.mrb[0].mxu0 %v1758
  %v2010 = vpop.f32.mrb[0].mxu0
  %v2011 = vadd.f32 0.0, %v2010
  %v2012 = vpop.f32.mrb[0].mxu0
  %2013 = vmatprep.mubr.f32.mxu0 0.0
  %2014 = vmatmul.mubr.f32.gmra.mrb[0].mxu0 %v1761
  %v2015 = vpop.f32.mrb[0].mxu0
  %v2016 = vadd.f32 0.0, %v2015
  %v2017 = vpop.f32.mrb[0].mxu0
  %2018 = vmatprep.mubr.f32.mxu0 0.0
  %2019 = vmatmul.mubr.f32.gmra.mrb[0].mxu0 %v1764
  %v2020 = vpop.f32.mrb[0].mxu0
  %v2021 = vadd.f32 0.0, %v2020
  %v2022 = vpop.f32.mrb[0].mxu0
  %2023 = vmatprep.mubr.f32.mxu0 0.0
  %2024 = vmatmul.mubr.f32.gmra.mrb[0].mxu0 %v1767
  %v2025 = vpop.f32.mrb[0].mxu0
  %v2026 = vadd.f32 0.0, %v2025
  %v2027 = vpop.f32.mrb[0].mxu0
  %2028 = vmatprep.mubr.f32.mxu0 0.0
  %2029 = vmatmul.mubr.f32.gmra.mrb[0].mxu0 %v1770
  %v2030 = vpop.f32.mrb[0].mxu0
  %v2031 = vadd.f32 0.0, %v2030
  %v2032 = vpop.f32.mrb[0].mxu0
  %2033 = vmatprep.mubr.f32.mxu0 0.0
  %2034 = vmatmul.mubr.f32.gmra.mrb[0].mxu0 %v1773
  %v2035 = vpop.f32.mrb[0].mxu0
  %v2036 = vadd.f32 0.0, %v2035
  %v2037 = vpop.f32.mrb[0].mxu0
  %2038 = vmatprep.mubr.f32.mxu0 0.0
  %2039 = vmatmul.mubr.f32.gmra.mrb[0].mxu0 %v1776
  %v2040 = vpop.f32.mrb[0].mxu0
  %v2041 = vadd.f32 0.0, %v2040
  %v2042 = vpop.f32.mrb[0].mxu0
  %2043 = vmatprep.mubr.f32.mxu0 0.0
  %2044 = vmatmul.mubr.f32.gmra.mrb[0].mxu0 %v1779
  %v2045 = vpop.f32.mrb[0].mxu0
  %v2046 = vadd.f32 0.0, %v2045
  %v2047 = vpop.f32.mrb[0].mxu0
  %2048 = vmatprep.mubr.f32.mxu0 0.0
  %2049 = vmatmul.mubr.f32.gmra.mrb[0].mxu0 %v1782
  %v2050 = vpop.f32.mrb[0].mxu0
  %v2051 = vadd.f32 0.0, %v2050
  %v2052 = vpop.f32.mrb[0].mxu0
  %2053 = vmatprep.mubr.f32.mxu0 0.0
  %2054 = vmatmul.mubr.f32.gmra.mrb[0].mxu0 %v1785
  %v2055 = vpop.f32.mrb[0].mxu0
  %v2056 = vadd.f32 0.0, %v2055
  %v2057 = vpop.f32.mrb[0].mxu0
  %2058 = vmatprep.mubr.f32.mxu0 0.0
  %2059 = vmatmul.mubr.f32.gmra.mrb[0].mxu0 %v1788
  %v2060 = vpop.f32.mrb[0].mxu0
  %v2061 = vadd.f32 0.0, %v2060
  %v2062 = vpop.f32.mrb[0].mxu0
  %2063 = vmatprep.mubr.f32.mxu0 0.0
  %2064 = vmatmul.mubr.f32.gmra.mrb[0].mxu0 %v1791
  %v2065 = vpop.f32.mrb[0].mxu0
  %v2066 = vadd.f32 0.0, %v2065
  %v2067 = vpop.f32.mrb[0].mxu0
  %2068 = vmatprep.mubr.f32.mxu0 0.0
  %2069 = vmatmul.mubr.f32.gmra.mrb[0].mxu0 %v1794
  %v2070 = vpop.f32.mrb[0].mxu0
  %v2071 = vadd.f32 0.0, %v2070
  %v2072 = vpop.f32.mrb[0].mxu0
  %2073 = vmatprep.mubr.f32.mxu0 0.0
  %2074 = vmatmul.mubr.f32.gmra.mrb[0].mxu0 %v1797
  %v2075 = vpop.f32.mrb[0].mxu0
  %v2076 = vadd.f32 0.0, %v2075
  %v2077 = vpop.f32.mrb[0].mxu0
  %2078 = vmatprep.mubr.f32.mxu0 0.0
  %2079 = vmatmul.mubr.f32.gmra.mrb[0].mxu0 %v1800
  %v2080 = vpop.f32.mrb[0].mxu0
  %v2081 = vadd.f32 0.0, %v2080
  %v2082 = vpop.f32.mrb[0].mxu0
  %2083 = vmatprep.mubr.f32.mxu0 0.0
  %2084 = vmatmul.mubr.f32.gmra.mrb[0].mxu0 %v1803
  %v2085 = vpop.f32.mrb[0].mxu0
  %v2086 = vadd.f32 0.0, %v2085
  %v2087 = vpop.f32.mrb[0].mxu0
  %2088 = vmatprep.mubr.f32.mxu0 0.0
  %2089 = vmatmul.mubr.f32.gmra.mrb[0].mxu0 %v1806
  %v2090 = vpop.f32.mrb[0].mxu0
  %v2091 = vadd.f32 0.0, %v2090
  %v2092 = vpop.f32.mrb[0].mxu0
  %2093 = vmatprep.mubr.f32.mxu0 0.0
  %2094 = vmatmul.mubr.f32.gmra.mrb[0].mxu0 %v1809
  %v2095 = vpop.f32.mrb[0].mxu0
  %v2096 = vadd.f32 0.0, %v2095
  %v2097 = vpop.f32.mrb[0].mxu0
  %2098 = vmatprep.mubr.f32.mxu0 0.0
  %2099 = vmatmul.mubr.f32.gmra.mrb[0].mxu0 %v1812
  %v2100 = vpop.f32.mrb[0].mxu0
  %v2101 = vadd.f32 0.0, %v2100
  %v2102 = vpop.f32.mrb[0].mxu0
  %2103 = vmatprep.mubr.f32.mxu0 0.0
  %2104 = vmatmul.mubr.f32.gmra.mrb[0].mxu0 %v1815
  %v2105 = vpop.f32.mrb[0].mxu0
  %v2106 = vadd.f32 0.0, %v2105
  %v2107 = vpop.f32.mrb[0].mxu0
  %2108 = vmatprep.mubr.f32.mxu0 0.0
  %2109 = vmatmul.mubr.f32.gmra.mrb[0].mxu0 %v1818
  %v2110 = vpop.f32.mrb[0].mxu0
  %v2111 = vadd.f32 0.0, %v2110
  %v2112 = vpop.f32.mrb[0].mxu0
  %2113 = vmatprep.mubr.f32.mxu0 0.0
  %2114 = vmatmul.mubr.f32.gmra.mrb[0].mxu0 %v1821
  %v2115 = vpop.f32.mrb[0].mxu0
  %v2116 = vadd.f32 0.0, %v2115
  %v2117 = vpop.f32.mrb[0].mxu0
  %2118 = vmatprep.mubr.f32.mxu0 0.0
  %2119 = vmatmul.mubr.f32.gmra.mrb[0].mxu0 %v1824
  %v2120 = vpop.f32.mrb[0].mxu0
  %v2121 = vadd.f32 0.0, %v2120
  %v2122 = vpop.f32.mrb[0].mxu0
  %2123 = vmatprep.mubr.f32.mxu0 0.0
  %2124 = vmatmul.mubr.f32.gmra.mrb[0].mxu0 %v1827
  %v2125 = vpop.f32.mrb[0].mxu0
  %v2126 = vadd.f32 0.0, %v2125
  %v2127 = vpop.f32.mrb[0].mxu0
  %2128 = vmatprep.mubr.f32.mxu0 0.0
  %2129 = vmatmul.mubr.f32.gmra.mrb[0].mxu0 %v1830
  %v2130 = vpop.f32.mrb[0].mxu0
  %v2131 = vadd.f32 0.0, %v2130
  %v2132 = vpop.f32.mrb[0].mxu0
  %2133 = vmatprep.mubr.f32.mxu0 0.0
  %2134 = vmatmul.mubr.f32.gmra.mrb[0].mxu0 %v1833
  %v2135 = vpop.f32.mrb[0].mxu0
  %v2136 = vadd.f32 0.0, %v2135
  %v2137 = vpop.f32.mrb[0].mxu0
  %2138 = vmatprep.mubr.f32.mxu0 0.0
  %2139 = vmatmul.mubr.f32.gmra.mrb[0].mxu0 %v1836
  %v2140 = vpop.f32.mrb[0].mxu0
  %v2141 = vadd.f32 0.0, %v2140
  %v2142 = vpop.f32.mrb[0].mxu0
  %2143 = vmatprep.mubr.f32.mxu0 0.0
  %2144 = vmatmul.mubr.f32.gmra.mrb[0].mxu0 %v1839
  %v2145 = vpop.f32.mrb[0].mxu0
  %v2146 = vadd.f32 0.0, %v2145
  %v2147 = vpop.f32.mrb[0].mxu0
  %2148 = vmatprep.mubr.f32.mxu0 0.0
  %2149 = vmatmul.mubr.f32.gmra.mrb[0].mxu0 %v1842
  %v2150 = vpop.f32.mrb[0].mxu0
  %v2151 = vadd.f32 0.0, %v2150
  %v2152 = vpop.f32.mrb[0].mxu0
  %2153 = vdwg.mxu0
  %v2154 = vmax.f32 %v1598, %v1911
  %v2155 = vmax.f32 %v1599, %v1916
  %v2156 = vmax.f32 %v1600, %v1921
  %v2157 = vmax.f32 %v1601, %v1926
  %v2158 = vmax.f32 %v1602, %v1931
  %v2159 = vmax.f32 %v1603, %v1936
  %v2160 = vmax.f32 %v1604, %v1941
  %v2161 = vmax.f32 %v1605, %v1946
  %v2162 = vmax.f32 %v1606, %v1951
  %v2163 = vmax.f32 %v1607, %v1956
  %v2164 = vmax.f32 %v1608, %v1961
  %v2165 = vmax.f32 %v1609, %v1966
  %v2166 = vmax.f32 %v1610, %v1971
  %v2167 = vmax.f32 %v1611, %v1976
  %v2168 = vmax.f32 %v1612, %v1981
  %v2169 = vmax.f32 %v1613, %v1986
  %v2170 = vmax.f32 %v1614, %v1991
  %v2171 = vmax.f32 %v1615, %v1996
  %v2172 = vmax.f32 %v1616, %v2001
  %v2173 = vmax.f32 %v1617, %v2006
  %v2174 = vmax.f32 %v1618, %v2011
  %v2175 = vmax.f32 %v1619, %v2016
  %v2176 = vmax.f32 %v1620, %v2021
  %v2177 = vmax.f32 %v1621, %v2026
  %v2178 = vmax.f32 %v1622, %v2031
  %v2179 = vmax.f32 %v1623, %v2036
  %v2180 = vmax.f32 %v1624, %v2041
  %v2181 = vmax.f32 %v1625, %v2046
  %v2182 = vmax.f32 %v1626, %v2051
  %v2183 = vmax.f32 %v1627, %v2056
  %v2184 = vmax.f32 %v1628, %v2061
  %v2185 = vmax.f32 %v1629, %v2066
  %v2186 = vmax.f32 %v1630, %v2071
  %v2187 = vmax.f32 %v1631, %v2076
  %v2188 = vmax.f32 %v1632, %v2081
  %v2189 = vmax.f32 %v1633, %v2086
  %v2190 = vmax.f32 %v1634, %v2091
  %v2191 = vmax.f32 %v1635, %v2096
  %v2192 = vmax.f32 %v1636, %v2101
  %v2193 = vmax.f32 %v1637, %v2106
  %v2194 = vmax.f32 %v1638, %v2111
  %v2195 = vmax.f32 %v1639, %v2116
  %v2196 = vmax.f32 %v1640, %v2121
  %v2197 = vmax.f32 %v1641, %v2126
  %v2198 = vmax.f32 %v1642, %v2131
  %v2199 = vmax.f32 %v1643, %v2136
  %v2200 = vmax.f32 %v1644, %v2141
  %v2201 = vmax.f32 %v1645, %v2146
  %v2202 = vmax.f32 %v1646, %v2151
  %v2203 = vld [vmem:[%s2] sm:$0x1]
  %v2205 = vlaneseq
  %v2206 = vshrl.u32 %v2205, 7
  %v2207 = vsub.s32 0, %v2206
  %v2208 = vrot.slane %v2203, %v2207
  %v2210 = vadd.f32 %v2154, %v2208
  %v2211 = vadd.f32 %v2155, %v2208
  %v2212 = vadd.f32 %v2156, %v2208
  %v2213 = vadd.f32 %v2157, %v2208
  %v2214 = vadd.f32 %v2158, %v2208
  %v2215 = vadd.f32 %v2159, %v2208
  %v2216 = vadd.f32 %v2160, %v2208
  %v2217 = vadd.f32 %v2161, %v2208
  %v2218 = vadd.f32 %v2162, %v2208
  %v2219 = vadd.f32 %v2163, %v2208
  %v2220 = vadd.f32 %v2164, %v2208
  %v2221 = vadd.f32 %v2165, %v2208
  %v2222 = vadd.f32 %v2166, %v2208
  %v2223 = vadd.f32 %v2167, %v2208
  %v2224 = vadd.f32 %v2168, %v2208
  %v2225 = vadd.f32 %v2169, %v2208
  %v2226 = vadd.f32 %v2170, %v2208
  %v2227 = vadd.f32 %v2171, %v2208
  %v2228 = vadd.f32 %v2172, %v2208
  %v2229 = vadd.f32 %v2173, %v2208
  %v2230 = vadd.f32 %v2174, %v2208
  %v2231 = vadd.f32 %v2175, %v2208
  %v2232 = vadd.f32 %v2176, %v2208
  %v2233 = vadd.f32 %v2177, %v2208
  %v2234 = vadd.f32 %v2178, %v2208
  %v2235 = vadd.f32 %v2179, %v2208
  %v2236 = vadd.f32 %v2180, %v2208
  %v2237 = vadd.f32 %v2181, %v2208
  %v2238 = vadd.f32 %v2182, %v2208
  %v2239 = vadd.f32 %v2183, %v2208
  %v2240 = vadd.f32 %v2184, %v2208
  %v2241 = vadd.f32 %v2185, %v2208
  %v2242 = vadd.f32 %v2186, %v2208
  %v2243 = vadd.f32 %v2187, %v2208
  %v2244 = vadd.f32 %v2188, %v2208
  %v2245 = vadd.f32 %v2189, %v2208
  %v2246 = vadd.f32 %v2190, %v2208
  %v2247 = vadd.f32 %v2191, %v2208
  %v2248 = vadd.f32 %v2192, %v2208
  %v2249 = vadd.f32 %v2193, %v2208
  %v2250 = vadd.f32 %v2194, %v2208
  %v2251 = vadd.f32 %v2195, %v2208
  %v2252 = vadd.f32 %v2196, %v2208
  %v2253 = vadd.f32 %v2197, %v2208
  %v2254 = vadd.f32 %v2198, %v2208
  %v2255 = vadd.f32 %v2199, %v2208
  %v2256 = vadd.f32 %v2200, %v2208
  %v2257 = vadd.f32 %v2201, %v2208
  %v2258 = vadd.f32 %v2202, %v2208
  %v2259 = vmax.f32 %v2210, 0.0
  %v2260 = vmax.f32 %v2211, 0.0
  %v2261 = vmax.f32 %v2212, 0.0
  %v2262 = vmax.f32 %v2213, 0.0
  %v2263 = vmax.f32 %v2214, 0.0
  %v2264 = vmax.f32 %v2215, 0.0
  %v2265 = vmax.f32 %v2216, 0.0
  %v2266 = vmax.f32 %v2217, 0.0
  %v2267 = vmax.f32 %v2218, 0.0
  %v2268 = vmax.f32 %v2219, 0.0
  %v2269 = vmax.f32 %v2220, 0.0
  %v2270 = vmax.f32 %v2221, 0.0
  %v2271 = vmax.f32 %v2222, 0.0
  %v2272 = vmax.f32 %v2223, 0.0
  %v2273 = vmax.f32 %v2224, 0.0
  %v2274 = vmax.f32 %v2225, 0.0
  %v2275 = vmax.f32 %v2226, 0.0
  %v2276 = vmax.f32 %v2227, 0.0
  %v2277 = vmax.f32 %v2228, 0.0
  %v2278 = vmax.f32 %v2229, 0.0
  %v2279 = vmax.f32 %v2230, 0.0
  %v2280 = vmax.f32 %v2231, 0.0
  %v2281 = vmax.f32 %v2232, 0.0
  %v2282 = vmax.f32 %v2233, 0.0
  %v2283 = vmax.f32 %v2234, 0.0
  %v2284 = vmax.f32 %v2235, 0.0
  %v2285 = vmax.f32 %v2236, 0.0
  %v2286 = vmax.f32 %v2237, 0.0
  %v2287 = vmax.f32 %v2238, 0.0
  %v2288 = vmax.f32 %v2239, 0.0
  %v2289 = vmax.f32 %v2240, 0.0
  %v2290 = vmax.f32 %v2241, 0.0
  %v2291 = vmax.f32 %v2242, 0.0
  %v2292 = vmax.f32 %v2243, 0.0
  %v2293 = vmax.f32 %v2244, 0.0
  %v2294 = vmax.f32 %v2245, 0.0
  %v2295 = vmax.f32 %v2246, 0.0
  %v2296 = vmax.f32 %v2247, 0.0
  %v2297 = vmax.f32 %v2248, 0.0
  %v2298 = vmax.f32 %v2249, 0.0
  %v2299 = vmax.f32 %v2250, 0.0
  %v2300 = vmax.f32 %v2251, 0.0
  %v2301 = vmax.f32 %v2252, 0.0
  %v2302 = vmax.f32 %v2253, 0.0
  %v2303 = vmax.f32 %v2254, 0.0
  %v2304 = vmax.f32 %v2255, 0.0
  %v2305 = vmax.f32 %v2256, 0.0
  %v2306 = vmax.f32 %v2257, 0.0
  %v2307 = vmax.f32 %v2258, 0.0
  %vm2308 = vcmask 48128
  %2309 = vst.msk [vmem:[%s3] sm:$0xff] %vm2308, %v2259
  %2310 = vst.msk [vmem:[%s3 + $0x8] sm:$0xff] %vm2308, %v2260
  %2311 = vst.msk [vmem:[%s3 + $0x10] sm:$0xff] %vm2308, %v2261
  %2312 = vst.msk [vmem:[%s3 + $0x18] sm:$0xff] %vm2308, %v2262
  %2313 = vst.msk [vmem:[%s3 + $0x20] sm:$0xff] %vm2308, %v2263
  %2314 = vst.msk [vmem:[%s3 + $0x28] sm:$0xff] %vm2308, %v2264
  %2315 = vst.msk [vmem:[%s3 + $0x30] sm:$0xff] %vm2308, %v2265
  %2316 = vst.msk [vmem:[%s3 + $0x38] sm:$0xff] %vm2308, %v2266
  %2317 = vst.msk [vmem:[%s3 + $0x40] sm:$0xff] %vm2308, %v2267
  %2318 = vst.msk [vmem:[%s3 + $0x48] sm:$0xff] %vm2308, %v2268
  %2319 = vst.msk [vmem:[%s3 + $0x50] sm:$0xff] %vm2308, %v2269
  %2320 = vst.msk [vmem:[%s3 + $0x58] sm:$0xff] %vm2308, %v2270
  %2321 = vst.msk [vmem:[%s3 + $0x60] sm:$0xff] %vm2308, %v2271
  %2322 = vst.msk [vmem:[%s3 + $0x68] sm:$0xff] %vm2308, %v2272
  %2323 = vst.msk [vmem:[%s3 + $0x70] sm:$0xff] %vm2308, %v2273
  %2324 = vst.msk [vmem:[%s3 + $0x78] sm:$0xff] %vm2308, %v2274
  %2325 = vst.msk [vmem:[%s3 + $0x80] sm:$0xff] %vm2308, %v2275
  %2326 = vst.msk [vmem:[%s3 + $0x88] sm:$0xff] %vm2308, %v2276
  %2327 = vst.msk [vmem:[%s3 + $0x90] sm:$0xff] %vm2308, %v2277
  %2328 = vst.msk [vmem:[%s3 + $0x98] sm:$0xff] %vm2308, %v2278
  %2329 = vst.msk [vmem:[%s3 + $0xa0] sm:$0xff] %vm2308, %v2279
  %2330 = vst.msk [vmem:[%s3 + $0xa8] sm:$0xff] %vm2308, %v2280
  %2331 = vst.msk [vmem:[%s3 + $0xb0] sm:$0xff] %vm2308, %v2281
  %2332 = vst.msk [vmem:[%s3 + $0xb8] sm:$0xff] %vm2308, %v2282
  %2333 = vst.msk [vmem:[%s3 + $0xc0] sm:$0xff] %vm2308, %v2283
  %2334 = vst.msk [vmem:[%s3 + $0xc8] sm:$0xff] %vm2308, %v2284
  %2335 = vst.msk [vmem:[%s3 + $0xd0] sm:$0xff] %vm2308, %v2285
  %2336 = vst.msk [vmem:[%s3 + $0xd8] sm:$0xff] %vm2308, %v2286
  %2337 = vst.msk [vmem:[%s3 + $0xe0] sm:$0xff] %vm2308, %v2287
  %2338 = vst.msk [vmem:[%s3 + $0xe8] sm:$0xff] %vm2308, %v2288
  %2339 = vst.msk [vmem:[%s3 + $0xf0] sm:$0xff] %vm2308, %v2289
  %2340 = vst.msk [vmem:[%s3 + $0xf8] sm:$0xff] %vm2308, %v2290
  %2341 = vst.msk [vmem:[%s3 + $0x100] sm:$0xff] %vm2308, %v2291
  %2342 = vst.msk [vmem:[%s3 + $0x108] sm:$0xff] %vm2308, %v2292
  %2343 = vst.msk [vmem:[%s3 + $0x110] sm:$0xff] %vm2308, %v2293
  %2344 = vst.msk [vmem:[%s3 + $0x118] sm:$0xff] %vm2308, %v2294
  %2345 = vst.msk [vmem:[%s3 + $0x120] sm:$0xff] %vm2308, %v2295
  %2346 = vst.msk [vmem:[%s3 + $0x128] sm:$0xff] %vm2308, %v2296
  %2347 = vst.msk [vmem:[%s3 + $0x130] sm:$0xff] %vm2308, %v2297
  %2348 = vst.msk [vmem:[%s3 + $0x138] sm:$0xff] %vm2308, %v2298
  %2349 = vst.msk [vmem:[%s3 + $0x140] sm:$0xff] %vm2308, %v2299
  %2350 = vst.msk [vmem:[%s3 + $0x148] sm:$0xff] %vm2308, %v2300
  %2351 = vst.msk [vmem:[%s3 + $0x150] sm:$0xff] %vm2308, %v2301
  %2352 = vst.msk [vmem:[%s3 + $0x158] sm:$0xff] %vm2308, %v2302
  %2353 = vst.msk [vmem:[%s3 + $0x160] sm:$0xff] %vm2308, %v2303
  %2354 = vst.msk [vmem:[%s3 + $0x168] sm:$0xff] %vm2308, %v2304
  %2355 = vst.msk [vmem:[%s3 + $0x170] sm:$0xff] %vm2308, %v2305
  %2356 = vst.msk [vmem:[%s3 + $0x178] sm:$0xff] %vm2308, %v2306
  %2357 = vst.msk [vmem:[%s3 + $0x180] sm:$0xff] %vm2308, %v2307
  // Predicated region
  $region14: #{lenet_forward.3} parent=0 // pred_check
    _
  $region15: #{lenet_forward.3} parent=0 // pred_check_branch
    %2359 = sbr.rel (0) target = $region17
  $region16: #{lenet_forward.3} parent=0 // pred_region
    _
  $region17: #{lenet_forward.3} parent=0 // pred_fallthru
    _
  // Predicated region
  $region18: #{lenet_forward.3} parent=0 // pred_check
    _
  $region19: #{lenet_forward.3} parent=0 // pred_check_branch
    %2361 = sbr.rel (0) target = $region21
  $region20: #{lenet_forward.3} parent=0 // pred_region
    _
  $region21: #{lenet_forward.3} parent=0 // pred_fallthru
    _

// kernel: lenet_forward.4
$region0: #{lenet_forward.4}
  #allocation0 [shape = 'u32[]', space=smem, size = 0x4, offset = 0x4, fixed_abs, tag = 'smem constant byte address 0x4 - core index']
  #allocation1 [shape = 'u32[144,128]{1,0:T(1,128)}', space=vmem, size = 0x12000, scoped, tag = 'internal scratch']
  %s0 = inlined_call_operand.vmem [shape: f32[4,50,150], index: 0, kind: input, shape index: {}]
  %s1 = inlined_call_operand.vmem [shape: f32[150,16], index: 1, kind: input, shape index: {}]
  %s2 = inlined_call_operand.vmem [shape: f32[1,16], index: 2, kind: input, shape index: {}]
  %s3 = inlined_call_operand.vmem [shape: f32[50,16], index: 3, kind: output, shape index: {}]
  %s4 = sld [smem:[#allocation0]]
  $region22: #{lenet_forward.4} parent=0
    _
  %s6 = ssub.s32 1, %s4
  %s7 = scalar_select 0, %s6, %s4
  // Predicated region
  $region2: #{lenet_forward.4} parent=0 // pred_check
    _
  $region3: #{lenet_forward.4} parent=0 // pred_check_branch
    %9 = sbr.rel (0) target = $region5
  $region4: #{lenet_forward.4} parent=0 // pred_region
    _
  $region5: #{lenet_forward.4} parent=0 // pred_fallthru
    _
  // Predicated region
  $region6: #{lenet_forward.4} parent=0 // pred_check
    _
  $region7: #{lenet_forward.4} parent=0 // pred_check_branch
    %11 = sbr.rel (0) target = $region9
  $region8: #{lenet_forward.4} parent=0 // pred_region
    _
  $region9: #{lenet_forward.4} parent=0 // pred_fallthru
    _
  // Predicated region
  $region10: #{lenet_forward.4} parent=0 // pred_check
    _
  $region11: #{lenet_forward.4} parent=0 // pred_check_branch
    %13 = sbr.rel (0) target = $region13
  $region12: #{lenet_forward.4} parent=0 // pred_region
    _
  $region13: #{lenet_forward.4} parent=0 // pred_fallthru
    _
  %v14 = vld [vmem:[%s1] sm:$0xff]
  %v15 = vld [vmem:[%s1 + $0x8] sm:$0xff]
  %v16 = vld [vmem:[%s1 + $0x10] sm:$0xff]
  %v17 = vld [vmem:[%s1 + $0x18] sm:$0xff]
  %v18 = vld [vmem:[%s1 + $0x20] sm:$0xff]
  %v19 = vld [vmem:[%s1 + $0x28] sm:$0xff]
  %v20 = vld [vmem:[%s1 + $0x30] sm:$0xff]
  %v21 = vld [vmem:[%s1 + $0x38] sm:$0xff]
  %v22 = vld [vmem:[%s1 + $0x40] sm:$0xff]
  %v23 = vld [vmem:[%s1 + $0x48] sm:$0xff]
  %v24 = vld [vmem:[%s1 + $0x50] sm:$0xff]
  %v25 = vld [vmem:[%s1 + $0x58] sm:$0xff]
  %v26 = vld [vmem:[%s1 + $0x60] sm:$0xff]
  %v27 = vld [vmem:[%s1 + $0x68] sm:$0xff]
  %v28 = vld [vmem:[%s1 + $0x70] sm:$0xff]
  %v29 = vld [vmem:[%s1 + $0x78] sm:$0xff]
  %v30 = vld [vmem:[%s1 + $0x80] sm:$0xff]
  %v31 = vld [vmem:[%s1 + $0x88] sm:$0xff]
  %v32 = vld [vmem:[%s1 + $0x90] sm:$0x3f]
  %v33 = vld [vmem:[%s0] sm:$0xff]
  %v34 = vld [vmem:[%s0 + $0x8] sm:$0xff]
  %v35 = vld [vmem:[%s0 + $0x10] sm:$0xff]
  %v36 = vld [vmem:[%s0 + $0x18] sm:$0xff]
  %v37 = vld [vmem:[%s0 + $0x20] sm:$0xff]
  %v38 = vld [vmem:[%s0 + $0x28] sm:$0xff]
  %v39 = vld [vmem:[%s0 + $0x30] sm:$0xff]
  %v40 = vld [vmem:[%s0 + $0x38] sm:$0xff]
  %v41 = vld [vmem:[%s0 + $0x40] sm:$0xff]
  %v42 = vld [vmem:[%s0 + $0x48] sm:$0xff]
  %v43 = vld [vmem:[%s0 + $0x50] sm:$0xff]
  %v44 = vld [vmem:[%s0 + $0x58] sm:$0xff]
  %v45 = vld [vmem:[%s0 + $0x60] sm:$0x3]
  %v46 = vld [vmem:[%s0 + $0x68] sm:$0x3]
  %vm47 = vcmask 179200
  %v49 = vsel %vm47, %v34, 0
  %v52 = vsel %vm47, %v36, 0
  %v55 = vsel %vm47, %v38, 0
  %v58 = vsel %vm47, %v40, 0
  %v61 = vsel %vm47, %v42, 0
  %v64 = vsel %vm47, %v44, 0
  %v67 = vsel %vm47, %v46, 0
  %vm69 = vcmask 1045504
  %v71 = vsel %vm69, %v32, 0
  %73 = vmatprep.subr.mxu0 0.0
  %74 = vmatpush1.msra.mxu0 %v14
  %75 = vmatprep.subr.mxu0 0.0
  %76 = vmatpush1.msra.mxu0 %v15
  %77 = vmatprep.subr.mxu0 0.0
  %78 = vmatpush1.msra.mxu0 %v16
  %79 = vmatprep.subr.mxu0 0.0
  %80 = vmatpush1.msra.mxu0 %v17
  %81 = vmatprep.subr.mxu0 0.0
  %82 = vmatpush1.msra.mxu0 %v18
  %83 = vmatprep.subr.mxu0 0.0
  %84 = vmatpush1.msra.mxu0 %v19
  %85 = vmatprep.subr.mxu0 0.0
  %86 = vmatpush1.msra.mxu0 %v20
  %87 = vmatprep.subr.mxu0 0.0
  %88 = vmatpush1.msra.mxu0 %v21
  %89 = vmatprep.subr.mxu0 0.0
  %90 = vmatpush1.msra.mxu0 %v22
  %91 = vmatprep.subr.mxu0 0.0
  %92 = vmatpush1.msra.mxu0 %v23
  %93 = vmatprep.subr.mxu0 0.0
  %94 = vmatpush1.msra.mxu0 %v24
  %95 = vmatprep.subr.mxu0 0.0
  %96 = vmatpush1.msra.mxu0 %v25
  %97 = vmatprep.subr.mxu0 0.0
  %98 = vmatpush1.msra.mxu0 %v26
  %99 = vmatprep.subr.mxu0 0.0
  %100 = vmatpush1.msra.mxu0 %v27
  %101 = vmatprep.subr.mxu0 0.0
  %102 = vmatpush1.msra.mxu0 %v28
  %103 = vmatprep.subr.mxu0 0.0
  %104 = vmatpush1.msra.mxu0 %v29
  %105 = vmatprep.subr.mxu0 0.0
  %106 = vmatpush1.msra.mxu0 %v30
  %107 = vmatprep.subr.mxu0 0.0
  %108 = vmatpush1.msra.mxu0 %v31
  %109 = vmatprep.subr.mxu0 0.0
  %110 = vmatpush1.msra.mxu0 %v71
  %111 = vmatprep.subr.mxu0 0.0
  %112 = vmatpush1.msra.mxu0 0.0
  %113 = vmatprep.subr.mxu0 0.0
  %114 = vmatpush1.msra.mxu0 0.0
  %115 = vmatprep.subr.mxu0 0.0
  %116 = vmatpush1.msra.mxu0 0.0
  %117 = vmatprep.subr.mxu0 0.0
  %118 = vmatpush1.msra.mxu0 0.0
  %119 = vmatprep.subr.mxu0 0.0
  %120 = vmatpush1.msra.mxu0 0.0
  %121 = vmatprep.subr.mxu0 0.0
  %122 = vmatpush1.msra.mxu0 0.0
  %123 = vmatprep.subr.mxu0 0.0
  %124 = vmatpush1.msra.mxu0 0.0
  %125 = vmatprep.subr.mxu0 0.0
  %126 = vmatpush1.msra.mxu0 0.0
  %127 = vmatprep.subr.mxu0 0.0
  %128 = vmatpush1.msra.mxu0 0.0
  %129 = vmatprep.subr.mxu0 0.0
  %130 = vmatpush1.msra.mxu0 0.0
  %131 = vmatprep.subr.mxu0 0.0
  %132 = vmatpush1.msra.mxu0 0.0
  %133 = vmatprep.subr.mxu0 0.0
  %134 = vmatpush1.msra.mxu0 0.0
  %135 = vmatprep.subr.mxu0 0.0
  %136 = vmatpush1.msra.mxu0 0.0
  %137 = vmatprep.mubr.f32.mxu0 %v49
  %138 = vmatmul.mubr.f32.gmra.mrb[0].mxu0 %v33
  %v139 = vpop.f32.mrb[0].mxu0
  %v140 = vadd.f32 0.0, %v139
  %v141 = vpop.f32.mrb[0].mxu0
  %142 = vmatprep.mubr.f32.mxu0 %v52
  %143 = vmatmul.mubr.f32.gmra.mrb[0].mxu0 %v35
  %v144 = vpop.f32.mrb[0].mxu0
  %v145 = vadd.f32 0.0, %v144
  %v146 = vpop.f32.mrb[0].mxu0
  %147 = vmatprep.mubr.f32.mxu0 %v55
  %148 = vmatmul.mubr.f32.gmra.mrb[0].mxu0 %v37
  %v149 = vpop.f32.mrb[0].mxu0
  %v150 = vadd.f32 0.0, %v149
  %v151 = vpop.f32.mrb[0].mxu0
  %152 = vmatprep.mubr.f32.mxu0 %v58
  %153 = vmatmul.mubr.f32.gmra.mrb[0].mxu0 %v39
  %v154 = vpop.f32.mrb[0].mxu0
  %v155 = vadd.f32 0.0, %v154
  %v156 = vpop.f32.mrb[0].mxu0
  %157 = vmatprep.mubr.f32.mxu0 %v61
  %158 = vmatmul.mubr.f32.gmra.mrb[0].mxu0 %v41
  %v159 = vpop.f32.mrb[0].mxu0
  %v160 = vadd.f32 0.0, %v159
  %v161 = vpop.f32.mrb[0].mxu0
  %162 = vmatprep.mubr.f32.mxu0 %v64
  %163 = vmatmul.mubr.f32.gmra.mrb[0].mxu0 %v43
  %v164 = vpop.f32.mrb[0].mxu0
  %v165 = vadd.f32 0.0, %v164
  %v166 = vpop.f32.mrb[0].mxu0
  %167 = vmatprep.mubr.f32.mxu0 %v67
  %168 = vmatmul.mubr.f32.gmra.mrb[0].mxu0 %v45
  %v169 = vpop.f32.mrb[0].mxu0
  %v170 = vadd.f32 0.0, %v169
  %v171 = vpop.f32.mrb[0].mxu0
  %172 = vdwg.mxu0
  %s173 = scalar_lea.vmem %s0, 112
  %v174 = vld [vmem:[%s173] sm:$0xff]
  %v175 = vld [vmem:[%s173 + $0x8] sm:$0xff]
  %v176 = vld [vmem:[%s173 + $0x10] sm:$0xff]
  %v177 = vld [vmem:[%s173 + $0x18] sm:$0xff]
  %v178 = vld [vmem:[%s173 + $0x20] sm:$0xff]
  %v179 = vld [vmem:[%s173 + $0x28] sm:$0xff]
  %v180 = vld [vmem:[%s173 + $0x30] sm:$0xff]
  %v181 = vld [vmem:[%s173 + $0x38] sm:$0xff]
  %v182 = vld [vmem:[%s173 + $0x40] sm:$0xff]
  %v183 = vld [vmem:[%s173 + $0x48] sm:$0xff]
  %v184 = vld [vmem:[%s173 + $0x50] sm:$0xff]
  %v185 = vld [vmem:[%s173 + $0x58] sm:$0xff]
  %v186 = vld [vmem:[%s173 + $0x60] sm:$0x3]
  %v187 = vld [vmem:[%s173 + $0x68] sm:$0x3]
  %v189 = vsel %vm47, %v175, 0
  %v192 = vsel %vm47, %v177, 0
  %v195 = vsel %vm47, %v179, 0
  %v198 = vsel %vm47, %v181, 0
  %v201 = vsel %vm47, %v183, 0
  %v204 = vsel %vm47, %v185, 0
  %v207 = vsel %vm47, %v187, 0
  %209 = vmatprep.subr.mxu0 0.0
  %210 = vmatpush1.msra.mxu0 %v14
  %211 = vmatprep.subr.mxu0 0.0
  %212 = vmatpush1.msra.mxu0 %v15
  %213 = vmatprep.subr.mxu0 0.0
  %214 = vmatpush1.msra.mxu0 %v16
  %215 = vmatprep.subr.mxu0 0.0
  %216 = vmatpush1.msra.mxu0 %v17
  %217 = vmatprep.subr.mxu0 0.0
  %218 = vmatpush1.msra.mxu0 %v18
  %219 = vmatprep.subr.mxu0 0.0
  %220 = vmatpush1.msra.mxu0 %v19
  %221 = vmatprep.subr.mxu0 0.0
  %222 = vmatpush1.msra.mxu0 %v20
  %223 = vmatprep.subr.mxu0 0.0
  %224 = vmatpush1.msra.mxu0 %v21
  %225 = vmatprep.subr.mxu0 0.0
  %226 = vmatpush1.msra.mxu0 %v22
  %227 = vmatprep.subr.mxu0 0.0
  %228 = vmatpush1.msra.mxu0 %v23
  %229 = vmatprep.subr.mxu0 0.0
  %230 = vmatpush1.msra.mxu0 %v24
  %231 = vmatprep.subr.mxu0 0.0
  %232 = vmatpush1.msra.mxu0 %v25
  %233 = vmatprep.subr.mxu0 0.0
  %234 = vmatpush1.msra.mxu0 %v26
  %235 = vmatprep.subr.mxu0 0.0
  %236 = vmatpush1.msra.mxu0 %v27
  %237 = vmatprep.subr.mxu0 0.0
  %238 = vmatpush1.msra.mxu0 %v28
  %239 = vmatprep.subr.mxu0 0.0
  %240 = vmatpush1.msra.mxu0 %v29
  %241 = vmatprep.subr.mxu0 0.0
  %242 = vmatpush1.msra.mxu0 %v30
  %243 = vmatprep.subr.mxu0 0.0
  %244 = vmatpush1.msra.mxu0 %v31
  %245 = vmatprep.subr.mxu0 0.0
  %246 = vmatpush1.msra.mxu0 %v71
  %247 = vmatprep.subr.mxu0 0.0
  %248 = vmatpush1.msra.mxu0 0.0
  %249 = vmatprep.subr.mxu0 0.0
  %250 = vmatpush1.msra.mxu0 0.0
  %251 = vmatprep.subr.mxu0 0.0
  %252 = vmatpush1.msra.mxu0 0.0
  %253 = vmatprep.subr.mxu0 0.0
  %254 = vmatpush1.msra.mxu0 0.0
  %255 = vmatprep.subr.mxu0 0.0
  %256 = vmatpush1.msra.mxu0 0.0
  %257 = vmatprep.subr.mxu0 0.0
  %258 = vmatpush1.msra.mxu0 0.0
  %259 = vmatprep.subr.mxu0 0.0
  %260 = vmatpush1.msra.mxu0 0.0
  %261 = vmatprep.subr.mxu0 0.0
  %262 = vmatpush1.msra.mxu0 0.0
  %263 = vmatprep.subr.mxu0 0.0
  %264 = vmatpush1.msra.mxu0 0.0
  %265 = vmatprep.subr.mxu0 0.0
  %266 = vmatpush1.msra.mxu0 0.0
  %267 = vmatprep.subr.mxu0 0.0
  %268 = vmatpush1.msra.mxu0 0.0
  %269 = vmatprep.subr.mxu0 0.0
  %270 = vmatpush1.msra.mxu0 0.0
  %271 = vmatprep.subr.mxu0 0.0
  %272 = vmatpush1.msra.mxu0 0.0
  %273 = vmatprep.mubr.f32.mxu0 %v189
  %274 = vmatmul.mubr.f32.gmra.mrb[0].mxu0 %v174
  %v275 = vpop.f32.mrb[0].mxu0
  %v276 = vadd.f32 0.0, %v275
  %v277 = vpop.f32.mrb[0].mxu0
  %278 = vmatprep.mubr.f32.mxu0 %v192
  %279 = vmatmul.mubr.f32.gmra.mrb[0].mxu0 %v176
  %v280 = vpop.f32.mrb[0].mxu0
  %v281 = vadd.f32 0.0, %v280
  %v282 = vpop.f32.mrb[0].mxu0
  %283 = vmatprep.mubr.f32.mxu0 %v195
  %284 = vmatmul.mubr.f32.gmra.mrb[0].mxu0 %v178
  %v285 = vpop.f32.mrb[0].mxu0
  %v286 = vadd.f32 0.0, %v285
  %v287 = vpop.f32.mrb[0].mxu0
  %288 = vmatprep.mubr.f32.mxu0 %v198
  %289 = vmatmul.mubr.f32.gmra.mrb[0].mxu0 %v180
  %v290 = vpop.f32.mrb[0].mxu0
  %v291 = vadd.f32 0.0, %v290
  %v292 = vpop.f32.mrb[0].mxu0
  %293 = vmatprep.mubr.f32.mxu0 %v201
  %294 = vmatmul.mubr.f32.gmra.mrb[0].mxu0 %v182
  %v295 = vpop.f32.mrb[0].mxu0
  %v296 = vadd.f32 0.0, %v295
  %v297 = vpop.f32.mrb[0].mxu0
  %298 = vmatprep.mubr.f32.mxu0 %v204
  %299 = vmatmul.mubr.f32.gmra.mrb[0].mxu0 %v184
  %v300 = vpop.f32.mrb[0].mxu0
  %v301 = vadd.f32 0.0, %v300
  %v302 = vpop.f32.mrb[0].mxu0
  %303 = vmatprep.mubr.f32.mxu0 %v207
  %304 = vmatmul.mubr.f32.gmra.mrb[0].mxu0 %v186
  %v305 = vpop.f32.mrb[0].mxu0
  %v306 = vadd.f32 0.0, %v305
  %v307 = vpop.f32.mrb[0].mxu0
  %308 = vdwg.mxu0
  %v309 = vmax.f32 %v140, %v276
  %v310 = vmax.f32 %v145, %v281
  %v311 = vmax.f32 %v150, %v286
  %v312 = vmax.f32 %v155, %v291
  %v313 = vmax.f32 %v160, %v296
  %v314 = vmax.f32 %v165, %v301
  %v315 = vmax.f32 %v170, %v306
  %s316 = scalar_lea.vmem %s0, 224
  %v317 = vld [vmem:[%s316] sm:$0xff]
  %v318 = vld [vmem:[%s316 + $0x8] sm:$0xff]
  %v319 = vld [vmem:[%s316 + $0x10] sm:$0xff]
  %v320 = vld [vmem:[%s316 + $0x18] sm:$0xff]
  %v321 = vld [vmem:[%s316 + $0x20] sm:$0xff]
  %v322 = vld [vmem:[%s316 + $0x28] sm:$0xff]
  %v323 = vld [vmem:[%s316 + $0x30] sm:$0xff]
  %v324 = vld [vmem:[%s316 + $0x38] sm:$0xff]
  %v325 = vld [vmem:[%s316 + $0x40] sm:$0xff]
  %v326 = vld [vmem:[%s316 + $0x48] sm:$0xff]
  %v327 = vld [vmem:[%s316 + $0x50] sm:$0xff]
  %v328 = vld [vmem:[%s316 + $0x58] sm:$0xff]
  %v329 = vld [vmem:[%s316 + $0x60] sm:$0x3]
  %v330 = vld [vmem:[%s316 + $0x68] sm:$0x3]
  %v332 = vsel %vm47, %v318, 0
  %v335 = vsel %vm47, %v320, 0
  %v338 = vsel %vm47, %v322, 0
  %v341 = vsel %vm47, %v324, 0
  %v344 = vsel %vm47, %v326, 0
  %v347 = vsel %vm47, %v328, 0
  %v350 = vsel %vm47, %v330, 0
  %352 = vmatprep.subr.mxu0 0.0
  %353 = vmatpush1.msra.mxu0 %v14
  %354 = vmatprep.subr.mxu0 0.0
  %355 = vmatpush1.msra.mxu0 %v15
  %356 = vmatprep.subr.mxu0 0.0
  %357 = vmatpush1.msra.mxu0 %v16
  %358 = vmatprep.subr.mxu0 0.0
  %359 = vmatpush1.msra.mxu0 %v17
  %360 = vmatprep.subr.mxu0 0.0
  %361 = vmatpush1.msra.mxu0 %v18
  %362 = vmatprep.subr.mxu0 0.0
  %363 = vmatpush1.msra.mxu0 %v19
  %364 = vmatprep.subr.mxu0 0.0
  %365 = vmatpush1.msra.mxu0 %v20
  %366 = vmatprep.subr.mxu0 0.0
  %367 = vmatpush1.msra.mxu0 %v21
  %368 = vmatprep.subr.mxu0 0.0
  %369 = vmatpush1.msra.mxu0 %v22
  %370 = vmatprep.subr.mxu0 0.0
  %371 = vmatpush1.msra.mxu0 %v23
  %372 = vmatprep.subr.mxu0 0.0
  %373 = vmatpush1.msra.mxu0 %v24
  %374 = vmatprep.subr.mxu0 0.0
  %375 = vmatpush1.msra.mxu0 %v25
  %376 = vmatprep.subr.mxu0 0.0
  %377 = vmatpush1.msra.mxu0 %v26
  %378 = vmatprep.subr.mxu0 0.0
  %379 = vmatpush1.msra.mxu0 %v27
  %380 = vmatprep.subr.mxu0 0.0
  %381 = vmatpush1.msra.mxu0 %v28
  %382 = vmatprep.subr.mxu0 0.0
  %383 = vmatpush1.msra.mxu0 %v29
  %384 = vmatprep.subr.mxu0 0.0
  %385 = vmatpush1.msra.mxu0 %v30
  %386 = vmatprep.subr.mxu0 0.0
  %387 = vmatpush1.msra.mxu0 %v31
  %388 = vmatprep.subr.mxu0 0.0
  %389 = vmatpush1.msra.mxu0 %v71
  %390 = vmatprep.subr.mxu0 0.0
  %391 = vmatpush1.msra.mxu0 0.0
  %392 = vmatprep.subr.mxu0 0.0
  %393 = vmatpush1.msra.mxu0 0.0
  %394 = vmatprep.subr.mxu0 0.0
  %395 = vmatpush1.msra.mxu0 0.0
  %396 = vmatprep.subr.mxu0 0.0
  %397 = vmatpush1.msra.mxu0 0.0
  %398 = vmatprep.subr.mxu0 0.0
  %399 = vmatpush1.msra.mxu0 0.0
  %400 = vmatprep.subr.mxu0 0.0
  %401 = vmatpush1.msra.mxu0 0.0
  %402 = vmatprep.subr.mxu0 0.0
  %403 = vmatpush1.msra.mxu0 0.0
  %404 = vmatprep.subr.mxu0 0.0
  %405 = vmatpush1.msra.mxu0 0.0
  %406 = vmatprep.subr.mxu0 0.0
  %407 = vmatpush1.msra.mxu0 0.0
  %408 = vmatprep.subr.mxu0 0.0
  %409 = vmatpush1.msra.mxu0 0.0
  %410 = vmatprep.subr.mxu0 0.0
  %411 = vmatpush1.msra.mxu0 0.0
  %412 = vmatprep.subr.mxu0 0.0
  %413 = vmatpush1.msra.mxu0 0.0
  %414 = vmatprep.subr.mxu0 0.0
  %415 = vmatpush1.msra.mxu0 0.0
  %416 = vmatprep.mubr.f32.mxu0 %v332
  %417 = vmatmul.mubr.f32.gmra.mrb[0].mxu0 %v317
  %v418 = vpop.f32.mrb[0].mxu0
  %v419 = vadd.f32 0.0, %v418
  %v420 = vpop.f32.mrb[0].mxu0
  %421 = vmatprep.mubr.f32.mxu0 %v335
  %422 = vmatmul.mubr.f32.gmra.mrb[0].mxu0 %v319
  %v423 = vpop.f32.mrb[0].mxu0
  %v424 = vadd.f32 0.0, %v423
  %v425 = vpop.f32.mrb[0].mxu0
  %426 = vmatprep.mubr.f32.mxu0 %v338
  %427 = vmatmul.mubr.f32.gmra.mrb[0].mxu0 %v321
  %v428 = vpop.f32.mrb[0].mxu0
  %v429 = vadd.f32 0.0, %v428
  %v430 = vpop.f32.mrb[0].mxu0
  %431 = vmatprep.mubr.f32.mxu0 %v341
  %432 = vmatmul.mubr.f32.gmra.mrb[0].mxu0 %v323
  %v433 = vpop.f32.mrb[0].mxu0
  %v434 = vadd.f32 0.0, %v433
  %v435 = vpop.f32.mrb[0].mxu0
  %436 = vmatprep.mubr.f32.mxu0 %v344
  %437 = vmatmul.mubr.f32.gmra.mrb[0].mxu0 %v325
  %v438 = vpop.f32.mrb[0].mxu0
  %v439 = vadd.f32 0.0, %v438
  %v440 = vpop.f32.mrb[0].mxu0
  %441 = vmatprep.mubr.f32.mxu0 %v347
  %442 = vmatmul.mubr.f32.gmra.mrb[0].mxu0 %v327
  %v443 = vpop.f32.mrb[0].mxu0
  %v444 = vadd.f32 0.0, %v443
  %v445 = vpop.f32.mrb[0].mxu0
  %446 = vmatprep.mubr.f32.mxu0 %v350
  %447 = vmatmul.mubr.f32.gmra.mrb[0].mxu0 %v329
  %v448 = vpop.f32.mrb[0].mxu0
  %v449 = vadd.f32 0.0, %v448
  %v450 = vpop.f32.mrb[0].mxu0
  %451 = vdwg.mxu0
  %v452 = vmax.f32 %v309, %v419
  %v453 = vmax.f32 %v310, %v424
  %v454 = vmax.f32 %v311, %v429
  %v455 = vmax.f32 %v312, %v434
  %v456 = vmax.f32 %v313, %v439
  %v457 = vmax.f32 %v314, %v444
  %v458 = vmax.f32 %v315, %v449
  %s459 = scalar_lea.vmem %s0, 336
  %v460 = vld [vmem:[%s459] sm:$0xff]
  %v461 = vld [vmem:[%s459 + $0x8] sm:$0xff]
  %v462 = vld [vmem:[%s459 + $0x10] sm:$0xff]
  %v463 = vld [vmem:[%s459 + $0x18] sm:$0xff]
  %v464 = vld [vmem:[%s459 + $0x20] sm:$0xff]
  %v465 = vld [vmem:[%s459 + $0x28] sm:$0xff]
  %v466 = vld [vmem:[%s459 + $0x30] sm:$0xff]
  %v467 = vld [vmem:[%s459 + $0x38] sm:$0xff]
  %v468 = vld [vmem:[%s459 + $0x40] sm:$0xff]
  %v469 = vld [vmem:[%s459 + $0x48] sm:$0xff]
  %v470 = vld [vmem:[%s459 + $0x50] sm:$0xff]
  %v471 = vld [vmem:[%s459 + $0x58] sm:$0xff]
  %v472 = vld [vmem:[%s459 + $0x60] sm:$0x3]
  %v473 = vld [vmem:[%s459 + $0x68] sm:$0x3]
  %v475 = vsel %vm47, %v461, 0
  %v478 = vsel %vm47, %v463, 0
  %v481 = vsel %vm47, %v465, 0
  %v484 = vsel %vm47, %v467, 0
  %v487 = vsel %vm47, %v469, 0
  %v490 = vsel %vm47, %v471, 0
  %v493 = vsel %vm47, %v473, 0
  %495 = vmatprep.subr.mxu0 0.0
  %496 = vmatpush1.msra.mxu0 %v14
  %497 = vmatprep.subr.mxu0 0.0
  %498 = vmatpush1.msra.mxu0 %v15
  %499 = vmatprep.subr.mxu0 0.0
  %500 = vmatpush1.msra.mxu0 %v16
  %501 = vmatprep.subr.mxu0 0.0
  %502 = vmatpush1.msra.mxu0 %v17
  %503 = vmatprep.subr.mxu0 0.0
  %504 = vmatpush1.msra.mxu0 %v18
  %505 = vmatprep.subr.mxu0 0.0
  %506 = vmatpush1.msra.mxu0 %v19
  %507 = vmatprep.subr.mxu0 0.0
  %508 = vmatpush1.msra.mxu0 %v20
  %509 = vmatprep.subr.mxu0 0.0
  %510 = vmatpush1.msra.mxu0 %v21
  %511 = vmatprep.subr.mxu0 0.0
  %512 = vmatpush1.msra.mxu0 %v22
  %513 = vmatprep.subr.mxu0 0.0
  %514 = vmatpush1.msra.mxu0 %v23
  %515 = vmatprep.subr.mxu0 0.0
  %516 = vmatpush1.msra.mxu0 %v24
  %517 = vmatprep.subr.mxu0 0.0
  %518 = vmatpush1.msra.mxu0 %v25
  %519 = vmatprep.subr.mxu0 0.0
  %520 = vmatpush1.msra.mxu0 %v26
  %521 = vmatprep.subr.mxu0 0.0
  %522 = vmatpush1.msra.mxu0 %v27
  %523 = vmatprep.subr.mxu0 0.0
  %524 = vmatpush1.msra.mxu0 %v28
  %525 = vmatprep.subr.mxu0 0.0
  %526 = vmatpush1.msra.mxu0 %v29
  %527 = vmatprep.subr.mxu0 0.0
  %528 = vmatpush1.msra.mxu0 %v30
  %529 = vmatprep.subr.mxu0 0.0
  %530 = vmatpush1.msra.mxu0 %v31
  %531 = vmatprep.subr.mxu0 0.0
  %532 = vmatpush1.msra.mxu0 %v71
  %533 = vmatprep.subr.mxu0 0.0
  %534 = vmatpush1.msra.mxu0 0.0
  %535 = vmatprep.subr.mxu0 0.0
  %536 = vmatpush1.msra.mxu0 0.0
  %537 = vmatprep.subr.mxu0 0.0
  %538 = vmatpush1.msra.mxu0 0.0
  %539 = vmatprep.subr.mxu0 0.0
  %540 = vmatpush1.msra.mxu0 0.0
  %541 = vmatprep.subr.mxu0 0.0
  %542 = vmatpush1.msra.mxu0 0.0
  %543 = vmatprep.subr.mxu0 0.0
  %544 = vmatpush1.msra.mxu0 0.0
  %545 = vmatprep.subr.mxu0 0.0
  %546 = vmatpush1.msra.mxu0 0.0
  %547 = vmatprep.subr.mxu0 0.0
  %548 = vmatpush1.msra.mxu0 0.0
  %549 = vmatprep.subr.mxu0 0.0
  %550 = vmatpush1.msra.mxu0 0.0
  %551 = vmatprep.subr.mxu0 0.0
  %552 = vmatpush1.msra.mxu0 0.0
  %553 = vmatprep.subr.mxu0 0.0
  %554 = vmatpush1.msra.mxu0 0.0
  %555 = vmatprep.subr.mxu0 0.0
  %556 = vmatpush1.msra.mxu0 0.0
  %557 = vmatprep.subr.mxu0 0.0
  %558 = vmatpush1.msra.mxu0 0.0
  %559 = vmatprep.mubr.f32.mxu0 %v475
  %560 = vmatmul.mubr.f32.gmra.mrb[0].mxu0 %v460
  %v561 = vpop.f32.mrb[0].mxu0
  %v562 = vadd.f32 0.0, %v561
  %v563 = vpop.f32.mrb[0].mxu0
  %564 = vmatprep.mubr.f32.mxu0 %v478
  %565 = vmatmul.mubr.f32.gmra.mrb[0].mxu0 %v462
  %v566 = vpop.f32.mrb[0].mxu0
  %v567 = vadd.f32 0.0, %v566
  %v568 = vpop.f32.mrb[0].mxu0
  %569 = vmatprep.mubr.f32.mxu0 %v481
  %570 = vmatmul.mubr.f32.gmra.mrb[0].mxu0 %v464
  %v571 = vpop.f32.mrb[0].mxu0
  %v572 = vadd.f32 0.0, %v571
  %v573 = vpop.f32.mrb[0].mxu0
  %574 = vmatprep.mubr.f32.mxu0 %v484
  %575 = vmatmul.mubr.f32.gmra.mrb[0].mxu0 %v466
  %v576 = vpop.f32.mrb[0].mxu0
  %v577 = vadd.f32 0.0, %v576
  %v578 = vpop.f32.mrb[0].mxu0
  %579 = vmatprep.mubr.f32.mxu0 %v487
  %580 = vmatmul.mubr.f32.gmra.mrb[0].mxu0 %v468
  %v581 = vpop.f32.mrb[0].mxu0
  %v582 = vadd.f32 0.0, %v581
  %v583 = vpop.f32.mrb[0].mxu0
  %584 = vmatprep.mubr.f32.mxu0 %v490
  %585 = vmatmul.mubr.f32.gmra.mrb[0].mxu0 %v470
  %v586 = vpop.f32.mrb[0].mxu0
  %v587 = vadd.f32 0.0, %v586
  %v588 = vpop.f32.mrb[0].mxu0
  %589 = vmatprep.mubr.f32.mxu0 %v493
  %590 = vmatmul.mubr.f32.gmra.mrb[0].mxu0 %v472
  %v591 = vpop.f32.mrb[0].mxu0
  %v592 = vadd.f32 0.0, %v591
  %v593 = vpop.f32.mrb[0].mxu0
  %594 = vdwg.mxu0
  %v595 = vmax.f32 %v452, %v562
  %v596 = vmax.f32 %v453, %v567
  %v597 = vmax.f32 %v454, %v572
  %v598 = vmax.f32 %v455, %v577
  %v599 = vmax.f32 %v456, %v582
  %v600 = vmax.f32 %v457, %v587
  %v601 = vmax.f32 %v458, %v592
  %v602 = vld [vmem:[%s2] sm:$0x1]
  %v604 = vlaneseq
  %v605 = vshrl.u32 %v604, 7
  %v606 = vsub.s32 0, %v605
  %v607 = vrot.slane %v602, %v606
  %v609 = vadd.f32 %v595, %v607
  %v610 = vadd.f32 %v596, %v607
  %v611 = vadd.f32 %v597, %v607
  %v612 = vadd.f32 %v598, %v607
  %v613 = vadd.f32 %v599, %v607
  %v614 = vadd.f32 %v600, %v607
  %v615 = vadd.f32 %v601, %v607
  %v616 = vmax.f32 %v609, 0.0
  %v617 = vmax.f32 %v610, 0.0
  %v618 = vmax.f32 %v611, 0.0
  %v619 = vmax.f32 %v612, 0.0
  %v620 = vmax.f32 %v613, 0.0
  %v621 = vmax.f32 %v614, 0.0
  %v622 = vmax.f32 %v615, 0.0
  %vm623 = vcmask 130048
  %624 = vst.msk [vmem:[%s3] sm:$0xff] %vm623, %v616
  %625 = vst.msk [vmem:[%s3 + $0x8] sm:$0xff] %vm623, %v617
  %626 = vst.msk [vmem:[%s3 + $0x10] sm:$0xff] %vm623, %v618
  %627 = vst.msk [vmem:[%s3 + $0x18] sm:$0xff] %vm623, %v619
  %628 = vst.msk [vmem:[%s3 + $0x20] sm:$0xff] %vm623, %v620
  %629 = vst.msk [vmem:[%s3 + $0x28] sm:$0xff] %vm623, %v621
  %vm630 = vcmask 123904
  %631 = vst.msk [vmem:[%s3 + $0x30] sm:$0x3] %vm630, %v622
  // Predicated region
  $region14: #{lenet_forward.4} parent=0 // pred_check
    _
  $region15: #{lenet_forward.4} parent=0 // pred_check_branch
    %633 = sbr.rel (0) target = $region17
  $region16: #{lenet_forward.4} parent=0 // pred_region
    _
  $region17: #{lenet_forward.4} parent=0 // pred_fallthru
    _
  // Predicated region
  $region18: #{lenet_forward.4} parent=0 // pred_check
    _
  $region19: #{lenet_forward.4} parent=0 // pred_check_branch
    %635 = sbr.rel (0) target = $region21
  $region20: #{lenet_forward.4} parent=0 // pred_region
    _
  $region21: #{lenet_forward.4} parent=0 // pred_fallthru
    _

// kernel: lenet_forward.5
$region0: #{lenet_forward.5}
  #allocation0 [shape = 'u32[]', space=smem, size = 0x4, offset = 0x4, fixed_abs, tag = 'smem constant byte address 0x4 - core index']
  #allocation1 [shape = 'u32[144,128]{1,0:T(1,128)}', space=vmem, size = 0x12000, scoped, tag = 'internal scratch']
  %s0 = inlined_call_operand.vmem [shape: f32[2,400], index: 0, kind: input, shape index: {}]
  %s1 = inlined_call_operand.vmem [shape: f32[400,120], index: 1, kind: input, shape index: {}]
  %s2 = inlined_call_operand.vmem [shape: f32[1,120], index: 2, kind: input, shape index: {}]
  %s3 = inlined_call_operand.vmem [shape: f32[120,84], index: 3, kind: input, shape index: {}]
  %s4 = inlined_call_operand.vmem [shape: f32[1,84], index: 4, kind: input, shape index: {}]
  %s5 = inlined_call_operand.vmem [shape: f32[84,10], index: 5, kind: input, shape index: {}]
  %s6 = inlined_call_operand.vmem [shape: f32[1,10], index: 6, kind: input, shape index: {}]
  %s7 = inlined_call_operand.hbm [shape: f32[2,10], index: 7, kind: output, shape index: {}]
  %s8 = sld [smem:[#allocation0]]
  $region38: #{lenet_forward.5} parent=0
    _
  %s10 = ssub.s32 1, %s8
  %s11 = scalar_select 0, %s10, %s8
  $region1: #{lenet_forward.5} parent=0
    #allocation2 [shape = 'u8[1024]{0}', space=vmem, size = 0x400, scoped, tag = 'output window, operand 0, single buffered']
    #allocation3 [shape = 's32[1]{0}', space=sflag, size = 0x4, scoped, tag = 'scoped memory for lenet_forward.5']
    %12 = vsyncpa [#allocation3], 0
    // Predicated region
    $region2: #{lenet_forward.5} parent=1 // pred_check
      _
    $region3: #{lenet_forward.5} parent=1 // pred_check_branch
      %14 = sbr.rel (0) target = $region5
    $region4: #{lenet_forward.5} parent=1 // pred_region
      _
    $region5: #{lenet_forward.5} parent=1 // pred_fallthru
      _
    // Predicated region
    $region6: #{lenet_forward.5} parent=1 // pred_check
      _
    $region7: #{lenet_forward.5} parent=1 // pred_check_branch
      %16 = sbr.rel (0) target = $region9
    $region8: #{lenet_forward.5} parent=1 // pred_region
      _
    $region9: #{lenet_forward.5} parent=1 // pred_fallthru
      _
    // Predicated region
    $region10: #{lenet_forward.5} parent=1 // pred_check
      _
    $region11: #{lenet_forward.5} parent=1 // pred_check_branch
      %18 = sbr.rel (0) target = $region13
    $region12: #{lenet_forward.5} parent=1 // pred_region
      _
    $region13: #{lenet_forward.5} parent=1 // pred_fallthru
      _
    // Predicated region
    $region14: #{lenet_forward.5} parent=1 // pred_check
      _
    $region15: #{lenet_forward.5} parent=1 // pred_check_branch
      %20 = sbr.rel (0) target = $region17
    $region16: #{lenet_forward.5} parent=1 // pred_region
      _
    $region17: #{lenet_forward.5} parent=1 // pred_fallthru
      _
    // Predicated region
    $region18: #{lenet_forward.5} parent=1 // pred_check
      _
    $region19: #{lenet_forward.5} parent=1 // pred_check_branch
      %22 = sbr.rel (0) target = $region21
    $region20: #{lenet_forward.5} parent=1 // pred_region
      _
    $region21: #{lenet_forward.5} parent=1 // pred_fallthru
      _
    // Predicated region
    $region22: #{lenet_forward.5} parent=1 // pred_check
      _
    $region23: #{lenet_forward.5} parent=1 // pred_check_branch
      %24 = sbr.rel (0) target = $region25
    $region24: #{lenet_forward.5} parent=1 // pred_region
      _
    $region25: #{lenet_forward.5} parent=1 // pred_fallthru
      _
    // Predicated region
    $region26: #{lenet_forward.5} parent=1 // pred_check
      _
    $region27: #{lenet_forward.5} parent=1 // pred_check_branch
      %26 = sbr.rel (0) target = $region29
    $region28: #{lenet_forward.5} parent=1 // pred_region
      _
    $region29: #{lenet_forward.5} parent=1 // pred_fallthru
      _
    %v27 = vld [vmem:[%s0] sm:$0xff]
    %v28 = vld [vmem:[%s1] sm:$0xff]
    %v29 = vld [vmem:[%s1 + $0x8] sm:$0xff]
    %v30 = vld [vmem:[%s1 + $0x10] sm:$0xff]
    %v31 = vld [vmem:[%s1 + $0x18] sm:$0xff]
    %v32 = vld [vmem:[%s1 + $0x20] sm:$0xff]
    %v33 = vld [vmem:[%s1 + $0x28] sm:$0xff]
    %v34 = vld [vmem:[%s1 + $0x30] sm:$0xff]
    %v35 = vld [vmem:[%s1 + $0x38] sm:$0xff]
    %v36 = vld [vmem:[%s1 + $0x40] sm:$0xff]
    %v37 = vld [vmem:[%s1 + $0x48] sm:$0xff]
    %v38 = vld [vmem:[%s1 + $0x50] sm:$0xff]
    %v39 = vld [vmem:[%s1 + $0x58] sm:$0xff]
    %v40 = vld [vmem:[%s1 + $0x60] sm:$0xff]
    %v41 = vld [vmem:[%s1 + $0x68] sm:$0xff]
    %v42 = vld [vmem:[%s1 + $0x70] sm:$0xff]
    %v43 = vld [vmem:[%s1 + $0x78] sm:$0xff]
    %v44 = vld [vmem:[%s1 + $0x80] sm:$0xff]
    %v45 = vld [vmem:[%s1 + $0x88] sm:$0xff]
    %v46 = vld [vmem:[%s1 + $0x90] sm:$0xff]
    %v47 = vld [vmem:[%s1 + $0x98] sm:$0xff]
    %v48 = vld [vmem:[%s1 + $0xa0] sm:$0xff]
    %v49 = vld [vmem:[%s1 + $0xa8] sm:$0xff]
    %v50 = vld [vmem:[%s1 + $0xb0] sm:$0xff]
    %v51 = vld [vmem:[%s1 + $0xb8] sm:$0xff]
    %v52 = vld [vmem:[%s1 + $0xc0] sm:$0xff]
    %v53 = vld [vmem:[%s1 + $0xc8] sm:$0xff]
    %v54 = vld [vmem:[%s1 + $0xd0] sm:$0xff]
    %v55 = vld [vmem:[%s1 + $0xd8] sm:$0xff]
    %v56 = vld [vmem:[%s1 + $0xe0] sm:$0xff]
    %v57 = vld [vmem:[%s1 + $0xe8] sm:$0xff]
    %v58 = vld [vmem:[%s1 + $0xf0] sm:$0xff]
    %v59 = vld [vmem:[%s1 + $0xf8] sm:$0xff]
    %v60 = vld [vmem:[%s1 + $0x100] sm:$0xff]
    %v61 = vld [vmem:[%s1 + $0x108] sm:$0xff]
    %v62 = vld [vmem:[%s1 + $0x110] sm:$0xff]
    %v63 = vld [vmem:[%s1 + $0x118] sm:$0xff]
    %v64 = vld [vmem:[%s1 + $0x120] sm:$0xff]
    %v65 = vld [vmem:[%s1 + $0x128] sm:$0xff]
    %v66 = vld [vmem:[%s1 + $0x130] sm:$0xff]
    %v67 = vld [vmem:[%s1 + $0x138] sm:$0xff]
    %v68 = vld [vmem:[%s1 + $0x140] sm:$0xff]
    %v69 = vld [vmem:[%s1 + $0x148] sm:$0xff]
    %v70 = vld [vmem:[%s1 + $0x150] sm:$0xff]
    %v71 = vld [vmem:[%s1 + $0x158] sm:$0xff]
    %v72 = vld [vmem:[%s1 + $0x160] sm:$0xff]
    %v73 = vld [vmem:[%s1 + $0x168] sm:$0xff]
    %v74 = vld [vmem:[%s1 + $0x170] sm:$0xff]
    %v75 = vld [vmem:[%s1 + $0x178] sm:$0xff]
    %v76 = vld [vmem:[%s1 + $0x180] sm:$0xff]
    %v77 = vld [vmem:[%s1 + $0x188] sm:$0xff]
    %v78 = vld [vmem:[%s2] sm:$0x1]
    %v80 = vlaneseq
    %v81 = vshrl.u32 %v80, 7
    %v82 = vsub.s32 0, %v81
    %v83 = vrot.slane %v78, %v82
    %v86 = vcombine.high %v27, %v27
    %v88 = vunpack.c.l.s4 1983009808
    %v89 = vunpack.c.0.s8 %v88
    %v90 = vlaneseq
    %v91 = vshrl.u32 %v90, 7
    %v92 = vsub.s32 %v89, %v91
    %v93 = vrot.slane %v27, %v92
    %v95 = vunpack.c.l.s4 1983009808
    %v96 = vunpack.c.0.s8 %v95
    %v97 = vlaneseq
    %v98 = vshrl.u32 %v97, 7
    %v99 = vsub.s32 %v96, %v98
    %v100 = vrot.slane %v86, %v99
    %v101 = vcombine.high %v93, %v93
    %v102 = vcombine.high %v100, %v100
    %vm106 = vcmask 130048
    %v107 = vsel %vm106, %v102, 0
    %109 = vmatprep.subr.mxu0 0.0
    %110 = vmatpush1.msra.mxu0 %v28
    %111 = vmatprep.subr.mxu0 0.0
    %112 = vmatpush1.msra.mxu0 %v29
    %113 = vmatprep.subr.mxu0 0.0
    %114 = vmatpush1.msra.mxu0 %v30
    %115 = vmatprep.subr.mxu0 0.0
    %116 = vmatpush1.msra.mxu0 %v31
    %117 = vmatprep.subr.mxu0 0.0
    %118 = vmatpush1.msra.mxu0 %v32
    %119 = vmatprep.subr.mxu0 0.0
    %120 = vmatpush1.msra.mxu0 %v33
    %121 = vmatprep.subr.mxu0 0.0
    %122 = vmatpush1.msra.mxu0 %v34
    %123 = vmatprep.subr.mxu0 0.0
    %124 = vmatpush1.msra.mxu0 %v35
    %125 = vmatprep.subr.mxu0 0.0
    %126 = vmatpush1.msra.mxu0 %v36
    %127 = vmatprep.subr.mxu0 0.0
    %128 = vmatpush1.msra.mxu0 %v37
    %129 = vmatprep.subr.mxu0 0.0
    %130 = vmatpush1.msra.mxu0 %v38
    %131 = vmatprep.subr.mxu0 0.0
    %132 = vmatpush1.msra.mxu0 %v39
    %133 = vmatprep.subr.mxu0 0.0
    %134 = vmatpush1.msra.mxu0 %v40
    %135 = vmatprep.subr.mxu0 0.0
    %136 = vmatpush1.msra.mxu0 %v41
    %137 = vmatprep.subr.mxu0 0.0
    %138 = vmatpush1.msra.mxu0 %v42
    %139 = vmatprep.subr.mxu0 0.0
    %140 = vmatpush1.msra.mxu0 %v43
    %141 = vmatprep.subr.mxu0 0.0
    %142 = vmatpush1.msra.mxu0 %v44
    %143 = vmatprep.subr.mxu0 0.0
    %144 = vmatpush1.msra.mxu0 %v45
    %145 = vmatprep.subr.mxu0 0.0
    %146 = vmatpush1.msra.mxu0 %v46
    %147 = vmatprep.subr.mxu0 0.0
    %148 = vmatpush1.msra.mxu0 %v47
    %149 = vmatprep.subr.mxu0 0.0
    %150 = vmatpush1.msra.mxu0 %v48
    %151 = vmatprep.subr.mxu0 0.0
    %152 = vmatpush1.msra.mxu0 %v49
    %153 = vmatprep.subr.mxu0 0.0
    %154 = vmatpush1.msra.mxu0 %v50
    %155 = vmatprep.subr.mxu0 0.0
    %156 = vmatpush1.msra.mxu0 %v51
    %157 = vmatprep.subr.mxu0 0.0
    %158 = vmatpush1.msra.mxu0 %v52
    %159 = vmatprep.subr.mxu0 0.0
    %160 = vmatpush1.msra.mxu0 %v53
    %161 = vmatprep.subr.mxu0 0.0
    %162 = vmatpush1.msra.mxu0 %v54
    %163 = vmatprep.subr.mxu0 0.0
    %164 = vmatpush1.msra.mxu0 %v55
    %165 = vmatprep.subr.mxu0 0.0
    %166 = vmatpush1.msra.mxu0 %v56
    %167 = vmatprep.subr.mxu0 0.0
    %168 = vmatpush1.msra.mxu0 %v57
    %169 = vmatprep.subr.mxu0 0.0
    %170 = vmatpush1.msra.mxu0 %v58
    %171 = vmatprep.subr.mxu0 0.0
    %172 = vmatpush1.msra.mxu0 %v59
    %173 = vmatprep.mubr.f32.mxu0 %v101
    %174 = vmatmul.mubr.f32.gmra.mrb[0].mxu0 %v93
    %v175 = vpop.f32.mrb[0].mxu0
    %v176 = vadd.f32 %v83, %v175
    %v177 = vpop.f32.mrb[0].mxu0
    %178 = vdwg.mxu0
    %179 = vmatprep.subr.mxu0 0.0
    %180 = vmatpush1.msra.mxu0 %v60
    %181 = vmatprep.subr.mxu0 0.0
    %182 = vmatpush1.msra.mxu0 %v61
    %183 = vmatprep.subr.mxu0 0.0
    %184 = vmatpush1.msra.mxu0 %v62
    %185 = vmatprep.subr.mxu0 0.0
    %186 = vmatpush1.msra.mxu0 %v63
    %187 = vmatprep.subr.mxu0 0.0
    %188 = vmatpush1.msra.mxu0 %v64
    %189 = vmatprep.subr.mxu0 0.0
    %190 = vmatpush1.msra.mxu0 %v65
    %191 = vmatprep.subr.mxu0 0.0
    %192 = vmatpush1.msra.mxu0 %v66
    %193 = vmatprep.subr.mxu0 0.0
    %194 = vmatpush1.msra.mxu0 %v67
    %195 = vmatprep.subr.mxu0 0.0
    %196 = vmatpush1.msra.mxu0 %v68
    %197 = vmatprep.subr.mxu0 0.0
    %198 = vmatpush1.msra.mxu0 %v69
    %199 = vmatprep.subr.mxu0 0.0
    %200 = vmatpush1.msra.mxu0 %v70
    %201 = vmatprep.subr.mxu0 0.0
    %202 = vmatpush1.msra.mxu0 %v71
    %203 = vmatprep.subr.mxu0 0.0
    %204 = vmatpush1.msra.mxu0 %v72
    %205 = vmatprep.subr.mxu0 0.0
    %206 = vmatpush1.msra.mxu0 %v73
    %207 = vmatprep.subr.mxu0 0.0
    %208 = vmatpush1.msra.mxu0 %v74
    %209 = vmatprep.subr.mxu0 0.0
    %210 = vmatpush1.msra.mxu0 %v75
    %211 = vmatprep.subr.mxu0 0.0
    %212 = vmatpush1.msra.mxu0 %v76
    %213 = vmatprep.subr.mxu0 0.0
    %214 = vmatpush1.msra.mxu0 %v77
    %215 = vmatprep.subr.mxu0 0.0
    %216 = vmatpush1.msra.mxu0 0.0
    %217 = vmatprep.subr.mxu0 0.0
    %218 = vmatpush1.msra.mxu0 0.0
    %219 = vmatprep.subr.mxu0 0.0
    %220 = vmatpush1.msra.mxu0 0.0
    %221 = vmatprep.subr.mxu0 0.0
    %222 = vmatpush1.msra.mxu0 0.0
    %223 = vmatprep.subr.mxu0 0.0
    %224 = vmatpush1.msra.mxu0 0.0
    %225 = vmatprep.subr.mxu0 0.0
    %226 = vmatpush1.msra.mxu0 0.0
    %227 = vmatprep.subr.mxu0 0.0
    %228 = vmatpush1.msra.mxu0 0.0
    %229 = vmatprep.subr.mxu0 0.0
    %230 = vmatpush1.msra.mxu0 0.0
    %231 = vmatprep.subr.mxu0 0.0
    %232 = vmatpush1.msra.mxu0 0.0
    %233 = vmatprep.subr.mxu0 0.0
    %234 = vmatpush1.msra.mxu0 0.0
    %235 = vmatprep.subr.mxu0 0.0
    %236 = vmatpush1.msra.mxu0 0.0
    %237 = vmatprep.subr.mxu0 0.0
    %238 = vmatpush1.msra.mxu0 0.0
    %239 = vmatprep.subr.mxu0 0.0
    %240 = vmatpush1.msra.mxu0 0.0
    %241 = vmatprep.subr.mxu0 0.0
    %242 = vmatpush1.msra.mxu0 0.0
    %243 = vmatprep.mubr.f32.mxu0 %v107
    %244 = vmatmul.mubr.f32.gmra.mrb[0].mxu0 %v100
    %v245 = vpop.f32.mrb[0].mxu0
    %v246 = vadd.f32 %v176, %v245
    %v247 = vpop.f32.mrb[0].mxu0
    %248 = vdwg.mxu0
    %v249 = vmax.f32 %v246, 0.0
    %v250 = vld [vmem:[%s3] sm:$0xff]
    %v251 = vld [vmem:[%s3 + $0x8] sm:$0xff]
    %v252 = vld [vmem:[%s3 + $0x10] sm:$0xff]
    %v253 = vld [vmem:[%s3 + $0x18] sm:$0xff]
    %v254 = vld [vmem:[%s3 + $0x20] sm:$0xff]
    %v255 = vld [vmem:[%s3 + $0x28] sm:$0xff]
    %v256 = vld [vmem:[%s3 + $0x30] sm:$0xff]
    %v257 = vld [vmem:[%s3 + $0x38] sm:$0xff]
    %v258 = vld [vmem:[%s3 + $0x40] sm:$0xff]
    %v259 = vld [vmem:[%s3 + $0x48] sm:$0xff]
    %v260 = vld [vmem:[%s3 + $0x50] sm:$0xff]
    %v261 = vld [vmem:[%s3 + $0x58] sm:$0xff]
    %v262 = vld [vmem:[%s3 + $0x60] sm:$0xff]
    %v263 = vld [vmem:[%s3 + $0x68] sm:$0xff]
    %v264 = vld [vmem:[%s3 + $0x70] sm:$0xff]
    %v265 = vld [vmem:[%s4] sm:$0x1]
    %v267 = vlaneseq
    %v268 = vshrl.u32 %v267, 7
    %v269 = vsub.s32 0, %v268
    %v270 = vrot.slane %v265, %v269
    %vm272 = vcmask 982016
    %v274 = vsel %vm272, %v249, 0
    %276 = vmatprep.subr.mxu0 0.0
    %277 = vmatpush1.msra.mxu0 %v250
    %278 = vmatprep.subr.mxu0 0.0
    %279 = vmatpush1.msra.mxu0 %v251
    %280 = vmatprep.subr.mxu0 0.0
    %281 = vmatpush1.msra.mxu0 %v252
    %282 = vmatprep.subr.mxu0 0.0
    %283 = vmatpush1.msra.mxu0 %v253
    %284 = vmatprep.subr.mxu0 0.0
    %285 = vmatpush1.msra.mxu0 %v254
    %286 = vmatprep.subr.mxu0 0.0
    %287 = vmatpush1.msra.mxu0 %v255
    %288 = vmatprep.subr.mxu0 0.0
    %289 = vmatpush1.msra.mxu0 %v256
    %290 = vmatprep.subr.mxu0 0.0
    %291 = vmatpush1.msra.mxu0 %v257
    %292 = vmatprep.subr.mxu0 0.0
    %293 = vmatpush1.msra.mxu0 %v258
    %294 = vmatprep.subr.mxu0 0.0
    %295 = vmatpush1.msra.mxu0 %v259
    %296 = vmatprep.subr.mxu0 0.0
    %297 = vmatpush1.msra.mxu0 %v260
    %298 = vmatprep.subr.mxu0 0.0
    %299 = vmatpush1.msra.mxu0 %v261
    %300 = vmatprep.subr.mxu0 0.0
    %301 = vmatpush1.msra.mxu0 %v262
    %302 = vmatprep.subr.mxu0 0.0
    %303 = vmatpush1.msra.mxu0 %v263
    %304 = vmatprep.subr.mxu0 0.0
    %305 = vmatpush1.msra.mxu0 %v264
    %306 = vmatprep.subr.mxu0 0.0
    %307 = vmatpush1.msra.mxu0 0.0
    %308 = vmatprep.subr.mxu0 0.0
    %309 = vmatpush1.msra.mxu0 0.0
    %310 = vmatprep.subr.mxu0 0.0
    %311 = vmatpush1.msra.mxu0 0.0
    %312 = vmatprep.subr.mxu0 0.0
    %313 = vmatpush1.msra.mxu0 0.0
    %314 = vmatprep.subr.mxu0 0.0
    %315 = vmatpush1.msra.mxu0 0.0
    %316 = vmatprep.subr.mxu0 0.0
    %317 = vmatpush1.msra.mxu0 0.0
    %318 = vmatprep.subr.mxu0 0.0
    %319 = vmatpush1.msra.mxu0 0.0
    %320 = vmatprep.subr.mxu0 0.0
    %321 = vmatpush1.msra.mxu0 0.0
    %322 = vmatprep.subr.mxu0 0.0
    %323 = vmatpush1.msra.mxu0 0.0
    %324 = vmatprep.subr.mxu0 0.0
    %325 = vmatpush1.msra.mxu0 0.0
    %326 = vmatprep.subr.mxu0 0.0
    %327 = vmatpush1.msra.mxu0 0.0
    %328 = vmatprep.subr.mxu0 0.0
    %329 = vmatpush1.msra.mxu0 0.0
    %330 = vmatprep.subr.mxu0 0.0
    %331 = vmatpush1.msra.mxu0 0.0
    %332 = vmatprep.subr.mxu0 0.0
    %333 = vmatpush1.msra.mxu0 0.0
    %334 = vmatprep.subr.mxu0 0.0
    %335 = vmatpush1.msra.mxu0 0.0
    %336 = vmatprep.subr.mxu0 0.0
    %337 = vmatpush1.msra.mxu0 0.0
    %338 = vmatprep.subr.mxu0 0.0
    %339 = vmatpush1.msra.mxu0 0.0
    %340 = vmatprep.mubr.f32.mxu0 0.0
    %341 = vmatmul.mubr.f32.gmra.mrb[0].mxu0 %v274
    %v342 = vpop.f32.mrb[0].mxu0
    %v343 = vadd.f32 %v270, %v342
    %v344 = vpop.f32.mrb[0].mxu0
    %345 = vdwg.mxu0
    %v346 = vmax.f32 %v343, 0.0
    %v347 = vld [vmem:[%s5] sm:$0xff]
    %v348 = vld [vmem:[%s5 + $0x8] sm:$0xff]
    %v349 = vld [vmem:[%s5 + $0x10] sm:$0xff]
    %v350 = vld [vmem:[%s5 + $0x18] sm:$0xff]
    %v351 = vld [vmem:[%s5 + $0x20] sm:$0xff]
    %v352 = vld [vmem:[%s5 + $0x28] sm:$0xff]
    %v353 = vld [vmem:[%s5 + $0x30] sm:$0xff]
    %v354 = vld [vmem:[%s5 + $0x38] sm:$0xff]
    %v355 = vld [vmem:[%s5 + $0x40] sm:$0xff]
    %v356 = vld [vmem:[%s5 + $0x48] sm:$0xff]
    %v357 = vld [vmem:[%s5 + $0x50] sm:$0xf]
    %v358 = vld [vmem:[%s6] sm:$0x1]
    %v360 = vlaneseq
    %v361 = vshrl.u32 %v360, 7
    %v362 = vsub.s32 0, %v361
    %v363 = vrot.slane %v358, %v362
    %vm365 = vcmask 687104
    %v367 = vsel %vm365, %v346, 0
    %vm369 = vcmask 1043456
    %v371 = vsel %vm369, %v357, 0
    %373 = vmatprep.subr.mxu0 0.0
    %374 = vmatpush1.msra.mxu0 %v347
    %375 = vmatprep.subr.mxu0 0.0
    %376 = vmatpush1.msra.mxu0 %v348
    %377 = vmatprep.subr.mxu0 0.0
    %378 = vmatpush1.msra.mxu0 %v349
    %379 = vmatprep.subr.mxu0 0.0
    %380 = vmatpush1.msra.mxu0 %v350
    %381 = vmatprep.subr.mxu0 0.0
    %382 = vmatpush1.msra.mxu0 %v351
    %383 = vmatprep.subr.mxu0 0.0
    %384 = vmatpush1.msra.mxu0 %v352
    %385 = vmatprep.subr.mxu0 0.0
    %386 = vmatpush1.msra.mxu0 %v353
    %387 = vmatprep.subr.mxu0 0.0
    %388 = vmatpush1.msra.mxu0 %v354
    %389 = vmatprep.subr.mxu0 0.0
    %390 = vmatpush1.msra.mxu0 %v355
    %391 = vmatprep.subr.mxu0 0.0
    %392 = vmatpush1.msra.mxu0 %v356
    %393 = vmatprep.subr.mxu0 0.0
    %394 = vmatpush1.msra.mxu0 %v371
    %395 = vmatprep.subr.mxu0 0.0
    %396 = vmatpush1.msra.mxu0 0.0
    %397 = vmatprep.subr.mxu0 0.0
    %398 = vmatpush1.msra.mxu0 0.0
    %399 = vmatprep.subr.mxu0 0.0
    %400 = vmatpush1.msra.mxu0 0.0
    %401 = vmatprep.subr.mxu0 0.0
    %402 = vmatpush1.msra.mxu0 0.0
    %403 = vmatprep.subr.mxu0 0.0
    %404 = vmatpush1.msra.mxu0 0.0
    %405 = vmatprep.subr.mxu0 0.0
    %406 = vmatpush1.msra.mxu0 0.0
    %407 = vmatprep.subr.mxu0 0.0
    %408 = vmatpush1.msra.mxu0 0.0
    %409 = vmatprep.subr.mxu0 0.0
    %410 = vmatpush1.msra.mxu0 0.0
    %411 = vmatprep.subr.mxu0 0.0
    %412 = vmatpush1.msra.mxu0 0.0
    %413 = vmatprep.subr.mxu0 0.0
    %414 = vmatpush1.msra.mxu0 0.0
    %415 = vmatprep.subr.mxu0 0.0
    %416 = vmatpush1.msra.mxu0 0.0
    %417 = vmatprep.subr.mxu0 0.0
    %418 = vmatpush1.msra.mxu0 0.0
    %419 = vmatprep.subr.mxu0 0.0
    %420 = vmatpush1.msra.mxu0 0.0
    %421 = vmatprep.subr.mxu0 0.0
    %422 = vmatpush1.msra.mxu0 0.0
    %423 = vmatprep.subr.mxu0 0.0
    %424 = vmatpush1.msra.mxu0 0.0
    %425 = vmatprep.subr.mxu0 0.0
    %426 = vmatpush1.msra.mxu0 0.0
    %427 = vmatprep.subr.mxu0 0.0
    %428 = vmatpush1.msra.mxu0 0.0
    %429 = vmatprep.subr.mxu0 0.0
    %430 = vmatpush1.msra.mxu0 0.0
    %431 = vmatprep.subr.mxu0 0.0
    %432 = vmatpush1.msra.mxu0 0.0
    %433 = vmatprep.subr.mxu0 0.0
    %434 = vmatpush1.msra.mxu0 0.0
    %435 = vmatprep.subr.mxu0 0.0
    %436 = vmatpush1.msra.mxu0 0.0
    %437 = vmatprep.mubr.f32.mxu0 0.0
    %438 = vmatmul.mubr.f32.gmra.mrb[0].mxu0 %v367
    %v439 = vpop.f32.mrb[0].mxu0
    %v440 = vadd.f32 %v363, %v439
    %v441 = vpop.f32.mrb[0].mxu0
    %442 = vdwg.mxu0
    %vm443 = vcmask 74752
    %444 = vst.msk [vmem:[#allocation2] sm:$0x3] %vm443, %v440
    // Predicated region
    $region30: #{lenet_forward.5} parent=1 // pred_check
      _
    $region31: #{lenet_forward.5} parent=1 // pred_check_branch
      %446 = sbr.rel (0) target = $region33
    $region32: #{lenet_forward.5} parent=1 // pred_region
      %s448 = ssub.s32 32, 32
      %449 = vsyncadd [#allocation3], %s448
      %s451 = sshll.u32 [#allocation2], 4
      %s452 = int_to_ptr.vmem [resolvable:$true] %s451
      %454 = dma.vmem_to_hbm [thread:$0]  %s452, 32, %s7, [#allocation3]
    $region33: #{lenet_forward.5} parent=1 // pred_fallthru
      _
    // Predicated region
    $region34: #{lenet_forward.5} parent=1 // pred_check
      _
    $region35: #{lenet_forward.5} parent=1 // pred_check_branch
      %456 = sbr.rel (0) target = $region37
    $region36: #{lenet_forward.5} parent=1 // pred_region
      %457 = dma.done [#allocation3], 32
    $region37: #{lenet_forward.5} parent=1 // pred_fallthru
      _
    %458 = vsyncpa [#allocation3], 1

</llo_original>
